<compile_context>
chip_gen: v7x
topology: tpu7x:2x2x1
jax: 0.10.0
libtpu: 0.0.40
codegen_flags: <defaults>
</compile_context>

<pallas_src>
import jax
import jax.numpy as jnp
from jax import lax
from jax.experimental import pallas as pl
from jax.experimental.pallas import tpu as pltpu

EPS = 1e-5  # PyTorch BatchNorm2d default eps


# ----------------------------------------------------------------------------
# conv3x3 kernel, one (batch, row-tile) grid step.
#   inputs : body (1,TH,W,Cin), top halo row (1,1,W,Cin), bottom halo row
#            (1,1,W,Cin), folded weights (3, 3*Cin, Cout),
#            [optional] previous layer's BN scale/shift (2, Cin)
#   outputs: raw conv tile (1,TH,W,Cout) in act dtype,
#            per-batch BN partial stats (1,2,Cout) accumulated over t.
# ----------------------------------------------------------------------------
def _make_conv_kernel(TH, W, n_t, fuse_bn_relu, compute_dtype):
    def kernel(*refs):
        if fuse_bn_relu:
            xm_ref, xt_ref, xb_ref, w_ref, bn_ref, y_ref, stats_ref = refs
        else:
            xm_ref, xt_ref, xb_ref, w_ref, y_ref, stats_ref = refs

        t = pl.program_id(1)
        cin = xm_ref.shape[-1]
        cout = w_ref.shape[-1]

        def load(ref):
            v = ref[0].astype(jnp.float32)                    # (rows, W, Cin)
            if fuse_bn_relu:
                bn = bn_ref[...]                              # (2, Cin) f32
                scale = bn[0].reshape(1, 1, cin)
                shift = bn[1].reshape(1, 1, cin)
                v = jnp.maximum(v * scale + shift, 0.0)       # prev BN + ReLU
            return v

        body = load(xm_ref)                                   # (TH, W, Cin)
        # Halo rows: real neighbour data for interior tiles, zero padding at
        # the image border (gated; only the two 1-row slices are touched).
        top = jnp.where(t > 0, load(xt_ref), 0.0)             # (1, W, Cin)
        bot = jnp.where(t < n_t - 1, load(xb_ref), 0.0)       # (1, W, Cin)

        slab = jnp.concatenate([top, body, bot], axis=0).astype(compute_dtype)

        # Column shifts realise the kx = -1 / 0 / +1 taps (zero pad built in).
        zcol = jnp.zeros((TH + 2, 1, cin), compute_dtype)
        left = jnp.concatenate([zcol, slab[:, : W - 1, :]], axis=1)   # kx=0
        right = jnp.concatenate([slab[:, 1:, :], zcol], axis=1)       # kx=2
        wide = jnp.concatenate([left, slab, right], axis=-1)  # (TH+2, W, 3Cin)

        # 3 MXU matmuls of K = 3*Cin (one per ky), f32 accumulation.
        acc = jnp.zeros((TH * W, cout), jnp.float32)
        for ky in range(3):
            patch = wide[ky:ky + TH].reshape(TH * W, 3 * cin)
            acc += jnp.dot(patch, w_ref[ky],
                           preferred_element_type=jnp.float32)
        # NOTE: conv bias intentionally omitted -- cancelled exactly by the
        # following training-mode BatchNorm mean subtraction.

        y_ref[...] = acc.reshape(1, TH, W, cout).astype(y_ref.dtype)

        # BN partial stats: accumulate into the resident (constant block index
        # over t) output block; written back to HBM once per batch image.
        @pl.when(t == 0)
        def _():
            stats_ref[...] = jnp.zeros_like(stats_ref)

        s = jnp.sum(acc, axis=0)[None, :]                      # (1, Cout)
        ss = jnp.sum(acc * acc, axis=0)[None, :]               # (1, Cout)
        stats_ref[...] += jnp.concatenate([s, ss], axis=0)[None]

    return kernel


# ----------------------------------------------------------------------------
# VMEM-budget-aware tiling
# ----------------------------------------------------------------------------
def _conv_vmem_estimate(TH, W, cin, cout, abytes):
    """Rough per-grid-step VMEM footprint (bytes) of the conv kernel."""
    slab = (TH + 2) * W * cin
    pipeline = 2 * (TH * W * cin + 2 * W * cin + TH * W * cout) * abytes
    weights = 2 * 9 * cin * cout * abytes
    temps = slab * 4 + 5 * slab * abytes     # f32 slab + shifted/wide copies
    acc = TH * W * cout * 4
    return pipeline + weights + temps + acc + (1 << 20)


def _pick_row_tile(H, W, cmax, abytes, budget=24 << 20):
    cands = [c for c in (256, 128, 64, 32, 16, 8) if c <= H and H % c == 0]
    if not cands:
        cands = [H]
    for th in cands:
        if _conv_vmem_estimate(th, W, cmax, cmax, abytes) <= budget:
            return th
    return cands[-1]


# ----------------------------------------------------------------------------
# One conv3x3 pass (optionally fused with the previous layer's BN + ReLU)
# ----------------------------------------------------------------------------
def _conv_pass(x, w_fold, bn, B, H, W, cin, cout, TH, n_t, act_dtype):
    fuse = bn is not None
    compute_dtype = w_fold.dtype
    kernel = _make_conv_kernel(TH, W, n_t, fuse, compute_dtype)

    in_specs = [
        # body rows [t*TH, t*TH + TH)
        pl.BlockSpec((1, TH, W, cin), lambda b, t: (b, t, 0, 0)),
        # 1-row halo above / below, clamped at the image border (the kernel
        # zeroes them there).  Auto-pipelined -> fetch overlaps compute.
        pl.BlockSpec((1, 1, W, cin),
                     lambda b, t: (b, jnp.maximum(t * TH - 1, 0), 0, 0)),
        pl.BlockSpec((1, 1, W, cin),
                     lambda b, t: (b, jnp.minimum(t * TH + TH, H - 1), 0, 0)),
        # folded weights: constant block index -> fetched once per core.
        pl.BlockSpec((3, 3 * cin, cout), lambda b, t: (0, 0, 0)),
    ]
    args = [x, x, x, w_fold]
    if fuse:
        in_specs.append(pl.BlockSpec((2, cin), lambda b, t: (0, 0)))
        args.append(bn)

    abytes = jnp.dtype(act_dtype).itemsize
    est = _conv_vmem_estimate(TH, W, cin, cout, abytes)
    vmem_limit = int(min(max(2 * est, 32 << 20), 64 << 20))
    flops = 2 * B * H * W * 9 * cin * cout
    bytes_accessed = int(B * H * W * (cin + cout) * abytes
                         + 9 * cin * cout * jnp.dtype(compute_dtype).itemsize
                         + B * 2 * cout * 4)

    return pl.pallas_call(
        kernel,
        out_shape=(jax.ShapeDtypeStruct((B, H, W, cout), act_dtype),
                   jax.ShapeDtypeStruct((B, 2, cout), jnp.float32)),
        grid=(B, n_t),
        in_specs=in_specs,
        out_specs=[pl.BlockSpec((1, TH, W, cout), lambda b, t: (b, t, 0, 0)),
                   pl.BlockSpec((1, 2, cout), lambda b, t: (b, 0, 0))],
        compiler_params=pltpu.CompilerParams(
            # batch axis shards across megacore TCs; the row-tile axis must be
            # sequential so the per-batch BN stats block can accumulate.
            dimension_semantics=("parallel", "arbitrary"),
            vmem_limit_bytes=vmem_limit),
        cost_estimate=pl.CostEstimate(flops=flops, transcendentals=0,
                                      bytes_accessed=bytes_accessed),
    )(*args)


# ----------------------------------------------------------------------------
# Final BatchNorm + ReLU (elementwise, tiled)
# ----------------------------------------------------------------------------
def _bn_relu_kernel(y_ref, bn_ref, o_ref):
    bn = bn_ref[...]
    c = bn.shape[-1]
    scale = bn[0].reshape(1, 1, 1, c)
    shift = bn[1].reshape(1, 1, 1, c)
    o_ref[...] = jnp.maximum(y_ref[...].astype(jnp.float32) * scale + shift, 0.0)


def _bn_relu_pass(y, bn, B, H, W, C, TH, n_t):
    abytes = jnp.dtype(y.dtype).itemsize
    vmem_limit = int(min(max(8 * TH * W * C * 4, 32 << 20), 64 << 20))
    return pl.pallas_call(
        _bn_relu_kernel,
        out_shape=jax.ShapeDtypeStruct((B, H, W, C), jnp.float32),
        grid=(B, n_t),
        in_specs=[pl.BlockSpec((1, TH, W, C), lambda b, t: (b, t, 0, 0)),
                  pl.BlockSpec((2, C), lambda b, t: (0, 0))],
        out_specs=pl.BlockSpec((1, TH, W, C), lambda b, t: (b, t, 0, 0)),
        compiler_params=pltpu.CompilerParams(
            dimension_semantics=("parallel", "parallel"),
            vmem_limit_bytes=vmem_limit),
        cost_estimate=pl.CostEstimate(flops=2 * B * H * W * C, transcendentals=0,
                                      bytes_accessed=int(B * H * W * C * (abytes + 4))),
    )(y, bn)


# ----------------------------------------------------------------------------
# Two-phase BatchNorm finalize (tiny per-channel math, done in JAX)
# ----------------------------------------------------------------------------
def _finalize_stats(stats, n_elems):
    # stats: (B, 2, C) per-image [sum, sum-of-squares] partials (f32).
    s = jnp.sum(stats[:, 0, :], axis=0)
    ss = jnp.sum(stats[:, 1, :], axis=0)
    mean = s / n_elems
    # NOTE: E[y^2]-E[y]^2 (clamped) in f32 -- fine here; a compensated /
    # two-pass-from-mean form would be safer for very large B*H*W.
    var = jnp.maximum(ss / n_elems - mean * mean, 0.0)
    istd = lax.rsqrt(var + EPS)
    # rows: scale = 1/sqrt(var+eps), shift = -mean/sqrt(var+eps)
    return jnp.stack([istd, -mean * istd], axis=0)            # (2, C) f32


# ----------------------------------------------------------------------------
# Parameter init (mirrors DoubleConv.__init__ / post_init, kernel_size=3)
# ----------------------------------------------------------------------------
def init_params(key, in_channels, out_channels, mid_channels=None):
    if not mid_channels:
        mid_channels = out_channels
    k1, k2 = jax.random.split(key)

    def kaiming_uniform(k, shape):
        fan_in = shape[1] * shape[2] * shape[3]
        bound = (6.0 / fan_in) ** 0.5
        return jax.random.uniform(k, shape, jnp.float32, -bound, bound)

    # PyTorch Conv2d.weight layout (Cout, Cin, kH, kW); biases 0; BN gamma=1, beta=0.
    return dict(
        w1=kaiming_uniform(k1, (mid_channels, in_channels, 3, 3)),
        b1=jnp.zeros((mid_channels,), jnp.float32),
        w2=kaiming_uniform(k2, (out_channels, mid_channels, 3, 3)),
        b2=jnp.zeros((out_channels,), jnp.float32),
    )


# ----------------------------------------------------------------------------
# DoubleConv.forward
# ----------------------------------------------------------------------------
def double_conv_forward(x_nchw, params, row_tile=None,
                        compute_dtype=jnp.bfloat16):
    B, cin, H, W = x_nchw.shape
    cmid = params["w1"].shape[0]
    cout = params["w2"].shape[0]
    act_dtype = compute_dtype
    abytes = jnp.dtype(act_dtype).itemsize

    TH = row_tile or _pick_row_tile(H, W, max(cin, cmid, cout), abytes)
    assert H % TH == 0, (H, TH)
    n_t = H // TH
    n_elems = B * H * W

    # NCHW -> NHWC (+ cast); channels-last puts C on the lane dim.
    x = jnp.transpose(x_nchw, (0, 2, 3, 1)).astype(act_dtype)

    # Fold PyTorch (Cout,Cin,3,3) weights to (3, 3*Cin, Cout): per-ky blocks
    # whose rows are ordered (kx, cin), matching the in-kernel im2col order.
    w1f = jnp.transpose(params["w1"], (2, 3, 1, 0)).reshape(3, 3 * cin, cmid)
    w2f = jnp.transpose(params["w2"], (2, 3, 1, 0)).reshape(3, 3 * cmid, cout)
    w1f = w1f.astype(compute_dtype)
    w2f = w2f.astype(compute_dtype)

    # pass 1: conv1 (raw) + BN1 partial stats
    y1, st1 = _conv_pass(x, w1f, None, B, H, W, cin, cmid, TH, n_t, act_dtype)
    bn1 = _finalize_stats(st1, n_elems)

    # pass 2: BN1 + ReLU (fused in-kernel) -> conv2 (raw) + BN2 partial stats
    y2, st2 = _conv_pass(y1, w2f, bn1, B, H, W, cmid, cout, TH, n_t, act_dtype)
    bn2 = _finalize_stats(st2, n_elems)

    # pass 3: BN2 + ReLU
    out_nhwc = _bn_relu_pass(y2, bn2, B, H, W, cout, TH, n_t)
    return jnp.transpose(out_nhwc, (0, 3, 1, 2))              # back to NCHW


# ----------------------------------------------------------------------------
# Pure-JAX reference (conv + bias + train-mode BN + ReLU, twice)
# ----------------------------------------------------------------------------
def reference(x_nchw, params):
    x = jnp.transpose(x_nchw, (0, 2, 3, 1)).astype(jnp.float32)

    def conv_bn_relu(x, w_pt, b):
        w = jnp.transpose(w_pt, (2, 3, 1, 0))                 # HWIO
        y = lax.conv_general_dilated(
            x, w, (1, 1), ((1, 1), (1, 1)),
            dimension_numbers=("NHWC", "HWIO", "NHWC")) + b
        m = jnp.mean(y, axis=(0, 1, 2), keepdims=True)
        v = jnp.mean((y - m) ** 2, axis=(0, 1, 2), keepdims=True)
        return jnp.maximum((y - m) * lax.rsqrt(v + EPS), 0.0)

    h = conv_bn_relu(x, params["w1"], params["b1"])
    h = conv_bn_relu(h, params["w2"], params["b2"])
    return jnp.transpose(h, (0, 3, 1, 2))


if __name__ == "__main__":
    key = jax.random.PRNGKey(0)
    k_p, k_x = jax.random.split(key)

    B, in_channels, H, W = 2, 4, 16, 16
    out_channels = 8                      # mid_channels defaults to out_channels
    params = init_params(k_p, in_channels, out_channels)
    img_in = jax.random.normal(k_x, (B, in_channels, H, W), jnp.float32)

    ref = reference(img_in, params)

    # row_tile=8 -> 2 row tiles per image: exercises the halo / border path.
    # bf16 MXU path (production default per the perf review).
    fwd_bf16 = jax.jit(lambda v: double_conv_forward(
        v, params, row_tile=8, compute_dtype=jnp.bfloat16))
    out_bf16 = jax.block_until_ready(fwd_bf16(img_in))
    assert out_bf16.shape == (B, out_channels, H, W), out_bf16.shape
    assert bool(jnp.allclose(out_bf16, ref, atol=5e-2, rtol=5e-2)), (
        "bf16 mismatch vs reference: "
        f"max_abs_err={float(jnp.max(jnp.abs(out_bf16 - ref)))}")

    # f32 path: strict numerical check against the f32 reference.
    fwd_f32 = jax.jit(lambda v: double_conv_forward(
        v, params, row_tile=8, compute_dtype=jnp.float32))
    out_f32 = jax.block_until_ready(fwd_f32(img_in))
    max_err = float(jnp.max(jnp.abs(out_f32 - ref)))
    assert max_err < 1e-2, f"f32 mismatch vs reference: {max_err}"

    print("KERNEL_OK")
</pallas_src>

<mosaic_0001>
module attributes {stable_mosaic.version = 11 : i64} {
  func.func @kernel(%arg0: i32, %arg1: i32, %arg2: memref<1x8x16x4xbf16, #tpu.memory_space<vmem>>, %arg3: memref<1x1x16x4xbf16, #tpu.memory_space<vmem>>, %arg4: memref<1x1x16x4xbf16, #tpu.memory_space<vmem>>, %arg5: memref<3x12x8xbf16, #tpu.memory_space<vmem>>, %arg6: memref<1x8x16x8xbf16, #tpu.memory_space<vmem>>, %arg7: memref<1x2x8xf32, #tpu.memory_space<vmem>>) attributes {dimension_semantics = [#tpu.dimension_semantics<parallel>, #tpu.dimension_semantics<arbitrary>], iteration_bounds = array<i64: 2, 2>, scalar_prefetch = 0 : i64, scratch_operands = 0 : i64, tpu.core_type = #tpu.core_type<tc>, window_params = [{transform_indices = @transform_0, window_bounds = array<i64: 1, 8, 16, 4>}, {transform_indices = @transform_1, window_bounds = array<i64: 1, 1, 16, 4>}, {transform_indices = @transform_2, window_bounds = array<i64: 1, 1, 16, 4>}, {pipeline_mode = #tpu.pipeline_mode<synchronous>, transform_indices = @transform_3, window_bounds = array<i64: 3, 12, 8>}, {transform_indices = @transform_4, window_bounds = array<i64: 1, 8, 16, 8>}, {transform_indices = @transform_5, window_bounds = array<i64: 1, 2, 8>}]} {
    %c0 = arith.constant 0 : index
    %c0_0 = arith.constant 0 : index
    %c0_1 = arith.constant 0 : index
    %c0_2 = arith.constant 0 : index
    %0 = vector.load %arg2[%c0, %c0_0, %c0_1, %c0_2] : memref<1x8x16x4xbf16, #tpu.memory_space<vmem>>, vector<1x8x16x4xbf16>
    %1 = vector.shape_cast %0 : vector<1x8x16x4xbf16> to vector<8x16x4xbf16>
    %2 = arith.extf %1 : vector<8x16x4xbf16> to vector<8x16x4xf32>
    %c0_i32 = arith.constant 0 : i32
    %3 = arith.cmpi sgt, %arg1, %c0_i32 : i32
    %c0_3 = arith.constant 0 : index
    %c0_4 = arith.constant 0 : index
    %c0_5 = arith.constant 0 : index
    %c0_6 = arith.constant 0 : index
    %4 = vector.load %arg3[%c0_3, %c0_4, %c0_5, %c0_6] : memref<1x1x16x4xbf16, #tpu.memory_space<vmem>>, vector<1x1x16x4xbf16>
    %5 = vector.shape_cast %4 : vector<1x1x16x4xbf16> to vector<1x16x4xbf16>
    %6 = arith.extf %5 : vector<1x16x4xbf16> to vector<1x16x4xf32>
    %cst = arith.constant 0.000000e+00 : f32
    %7 = vector.broadcast %cst : f32 to vector<1x16x4xf32>
    %8 = arith.select %3, %6, %7 : vector<1x16x4xf32>
    %c1_i32 = arith.constant 1 : i32
    %9 = arith.cmpi slt, %arg1, %c1_i32 : i32
    %c0_7 = arith.constant 0 : index
    %c0_8 = arith.constant 0 : index
    %c0_9 = arith.constant 0 : index
    %c0_10 = arith.constant 0 : index
    %10 = vector.load %arg4[%c0_7, %c0_8, %c0_9, %c0_10] : memref<1x1x16x4xbf16, #tpu.memory_space<vmem>>, vector<1x1x16x4xbf16>
    %11 = vector.shape_cast %10 : vector<1x1x16x4xbf16> to vector<1x16x4xbf16>
    %12 = arith.extf %11 : vector<1x16x4xbf16> to vector<1x16x4xf32>
    %cst_11 = arith.constant 0.000000e+00 : f32
    %13 = vector.broadcast %cst_11 : f32 to vector<1x16x4xf32>
    %14 = arith.select %9, %12, %13 : vector<1x16x4xf32>
    %15 = tpu.concatenate %8, %2, %14 in 0 : vector<1x16x4xf32>, vector<8x16x4xf32>, vector<1x16x4xf32> -> vector<10x16x4xf32>
    %16 = arith.truncf %15 : vector<10x16x4xf32> to vector<10x16x4xbf16>
    %cst_12 = arith.constant 0.000000e+00 : bf16
    %17 = vector.broadcast %cst_12 : bf16 to vector<10x1x4xbf16>
    %18 = vector.extract_strided_slice %16 {offsets = [0, 0, 0], sizes = [10, 15, 4], strides = [1, 1, 1]} : vector<10x16x4xbf16> to vector<10x15x4xbf16>
    %19 = tpu.concatenate %17, %18 in 1 : vector<10x1x4xbf16>, vector<10x15x4xbf16> -> vector<10x16x4xbf16>
    %20 = vector.extract_strided_slice %16 {offsets = [0, 1, 0], sizes = [10, 15, 4], strides = [1, 1, 1]} : vector<10x16x4xbf16> to vector<10x15x4xbf16>
    %21 = tpu.concatenate %20, %17 in 1 : vector<10x15x4xbf16>, vector<10x1x4xbf16> -> vector<10x16x4xbf16>
    %22 = tpu.concatenate %19, %16, %21 in 2 : vector<10x16x4xbf16>, vector<10x16x4xbf16>, vector<10x16x4xbf16> -> vector<10x16x12xbf16>
    %cst_13 = arith.constant 0.000000e+00 : f32
    %23 = vector.broadcast %cst_13 : f32 to vector<128x8xf32>
    %24 = vector.extract_strided_slice %22 {offsets = [0, 0, 0], sizes = [8, 16, 12], strides = [1, 1, 1]} : vector<10x16x12xbf16> to vector<8x16x12xbf16>
    %25 = vector.shape_cast %24 : vector<8x16x12xbf16> to vector<128x12xbf16>
    %c0_14 = arith.constant 0 : index
    %c0_15 = arith.constant 0 : index
    %c0_16 = arith.constant 0 : index
    %26 = vector.load %arg5[%c0_14, %c0_15, %c0_16] : memref<3x12x8xbf16, #tpu.memory_space<vmem>>, vector<1x12x8xbf16>
    %27 = vector.shape_cast %26 : vector<1x12x8xbf16> to vector<12x8xbf16>
    %cst_17 = arith.constant dense<0.000000e+00> : vector<128x8xf32>
    %28 = tpu.matmul %25, %27, %cst_17 {dimension_numbers = #tpu.dot_dimension_numbers<[1], [0], [0], [1], [0, 0, 1, 1], [], []>} : vector<128x12xbf16>, vector<12x8xbf16>, vector<128x8xf32> -> vector<128x8xf32>
    %29 = arith.addf %23, %28 : vector<128x8xf32>
    %30 = vector.extract_strided_slice %22 {offsets = [1, 0, 0], sizes = [8, 16, 12], strides = [1, 1, 1]} : vector<10x16x12xbf16> to vector<8x16x12xbf16>
    %31 = vector.shape_cast %30 : vector<8x16x12xbf16> to vector<128x12xbf16>
    %c1 = arith.constant 1 : index
    %c0_18 = arith.constant 0 : index
    %c0_19 = arith.constant 0 : index
    %32 = vector.load %arg5[%c1, %c0_18, %c0_19] : memref<3x12x8xbf16, #tpu.memory_space<vmem>>, vector<1x12x8xbf16>
    %33 = vector.shape_cast %32 : vector<1x12x8xbf16> to vector<12x8xbf16>
    %cst_20 = arith.constant dense<0.000000e+00> : vector<128x8xf32>
    %34 = tpu.matmul %31, %33, %cst_20 {dimension_numbers = #tpu.dot_dimension_numbers<[1], [0], [0], [1], [0, 0, 1, 1], [], []>} : vector<128x12xbf16>, vector<12x8xbf16>, vector<128x8xf32> -> vector<128x8xf32>
    %35 = arith.addf %29, %34 : vector<128x8xf32>
    %36 = vector.extract_strided_slice %22 {offsets = [2, 0, 0], sizes = [8, 16, 12], strides = [1, 1, 1]} : vector<10x16x12xbf16> to vector<8x16x12xbf16>
    %37 = vector.shape_cast %36 : vector<8x16x12xbf16> to vector<128x12xbf16>
    %c2 = arith.constant 2 : index
    %c0_21 = arith.constant 0 : index
    %c0_22 = arith.constant 0 : index
    %38 = vector.load %arg5[%c2, %c0_21, %c0_22] : memref<3x12x8xbf16, #tpu.memory_space<vmem>>, vector<1x12x8xbf16>
    %39 = vector.shape_cast %38 : vector<1x12x8xbf16> to vector<12x8xbf16>
    %cst_23 = arith.constant dense<0.000000e+00> : vector<128x8xf32>
    %40 = tpu.matmul %37, %39, %cst_23 {dimension_numbers = #tpu.dot_dimension_numbers<[1], [0], [0], [1], [0, 0, 1, 1], [], []>} : vector<128x12xbf16>, vector<12x8xbf16>, vector<128x8xf32> -> vector<128x8xf32>
    %41 = arith.addf %35, %40 : vector<128x8xf32>
    %42 = vector.shape_cast %41 : vector<128x8xf32> to vector<1x8x16x8xf32>
    %43 = arith.truncf %42 : vector<1x8x16x8xf32> to vector<1x8x16x8xbf16>
    %c0_24 = arith.constant 0 : index
    %c0_25 = arith.constant 0 : index
    %c0_26 = arith.constant 0 : index
    %c0_27 = arith.constant 0 : index
    %44 = vector.load %arg6[%c0_24, %c0_25, %c0_26, %c0_27] : memref<1x8x16x8xbf16, #tpu.memory_space<vmem>>, vector<1x8x16x8xbf16>
    tpu.vector_store %arg6[%c0_24, %c0_25, %c0_26, %c0_27], %43 {strides = array<i32>} : memref<1x8x16x8xbf16, #tpu.memory_space<vmem>>, vector<1x8x16x8xbf16>,
    %c0_i32_28 = arith.constant 0 : i32
    %45 = arith.cmpi eq, %arg1, %c0_i32_28 : i32
    %46 = arith.extui %45 : i1 to i32
    %c0_i32_29 = arith.constant 0 : i32
    %47 = arith.cmpi ne, %46, %c0_i32_29 : i32
    scf.if %47 {
      %cst_38 = arith.constant 0.000000e+00 : f32
      %58 = vector.broadcast %cst_38 : f32 to vector<1x2x8xf32>
      %c0_39 = arith.constant 0 : index
      %c0_40 = arith.constant 0 : index
      %c0_41 = arith.constant 0 : index
      %59 = vector.load %arg7[%c0_39, %c0_40, %c0_41] : memref<1x2x8xf32, #tpu.memory_space<vmem>>, vector<1x2x8xf32>
      tpu.vector_store %arg7[%c0_39, %c0_40, %c0_41], %58 {strides = array<i32>} : memref<1x2x8xf32, #tpu.memory_space<vmem>>, vector<1x2x8xf32>,
    } else {
    }
    %cst_30 = arith.constant dense<0.000000e+00> : vector<8xf32>
    %48 = vector.multi_reduction <add>, %41, %cst_30 [0] : vector<128x8xf32> to vector<8xf32>
    %49 = vector.shape_cast %48 : vector<8xf32> to vector<1x8xf32>
    %50 = arith.mulf %41, %41 : vector<128x8xf32>
    %cst_31 = arith.constant dense<0.000000e+00> : vector<8xf32>
    %51 = vector.multi_reduction <add>, %50, %cst_31 [0] : vector<128x8xf32> to vector<8xf32>
    %52 = vector.shape_cast %51 : vector<8xf32> to vector<1x8xf32>
    %c0_32 = arith.constant 0 : index
    %c0_33 = arith.constant 0 : index
    %c0_34 = arith.constant 0 : index
    %53 = vector.load %arg7[%c0_32, %c0_33, %c0_34] : memref<1x2x8xf32, #tpu.memory_space<vmem>>, vector<1x2x8xf32>
    %54 = tpu.concatenate %49, %52 in 0 : vector<1x8xf32>, vector<1x8xf32> -> vector<2x8xf32>
    %55 = vector.shape_cast %54 : vector<2x8xf32> to vector<1x2x8xf32>
    %56 = arith.addf %53, %55 : vector<1x2x8xf32>
    %c0_35 = arith.constant 0 : index
    %c0_36 = arith.constant 0 : index
    %c0_37 = arith.constant 0 : index
    %57 = vector.load %arg7[%c0_35, %c0_36, %c0_37] : memref<1x2x8xf32, #tpu.memory_space<vmem>>, vector<1x2x8xf32>
    tpu.vector_store %arg7[%c0_35, %c0_36, %c0_37], %56 {strides = array<i32>} : memref<1x2x8xf32, #tpu.memory_space<vmem>>, vector<1x2x8xf32>,
    return
  }
  func.func @transform_0(%arg0: i32, %arg1: i32) -> (i32, i32, i32, i32) {
    %c0_i32 = arith.constant 0 : i32
    %c0_i32_0 = arith.constant 0 : i32
    %c0_i32_1 = arith.constant 0 : i32
    return %arg0, %arg1, %c0_i32, %c0_i32_0 : i32, i32, i32, i32
  }
  func.func @transform_1(%arg0: i32, %arg1: i32) -> (i32, i32, i32, i32) {
    %c8_i32 = arith.constant 8 : i32
    %0 = arith.muli %arg1, %c8_i32 : i32
    %c1_i32 = arith.constant 1 : i32
    %1 = arith.subi %0, %c1_i32 : i32
    %c0_i32 = arith.constant 0 : i32
    %2 = arith.maxsi %1, %c0_i32 : i32
    %c0_i32_0 = arith.constant 0 : i32
    %c0_i32_1 = arith.constant 0 : i32
    %c0_i32_2 = arith.constant 0 : i32
    return %arg0, %2, %c0_i32_0, %c0_i32_1 : i32, i32, i32, i32
  }
  func.func @transform_2(%arg0: i32, %arg1: i32) -> (i32, i32, i32, i32) {
    %c8_i32 = arith.constant 8 : i32
    %0 = arith.muli %arg1, %c8_i32 : i32
    %c8_i32_0 = arith.constant 8 : i32
    %1 = arith.addi %0, %c8_i32_0 : i32
    %c15_i32 = arith.constant 15 : i32
    %2 = arith.minsi %1, %c15_i32 : i32
    %c0_i32 = arith.constant 0 : i32
    %c0_i32_1 = arith.constant 0 : i32
    %c0_i32_2 = arith.constant 0 : i32
    return %arg0, %2, %c0_i32, %c0_i32_1 : i32, i32, i32, i32
  }
  func.func @transform_3(%arg0: i32, %arg1: i32) -> (i32, i32, i32) {
    %c0_i32 = arith.constant 0 : i32
    %c0_i32_0 = arith.constant 0 : i32
    %c0_i32_1 = arith.constant 0 : i32
    %c0_i32_2 = arith.constant 0 : i32
    return %c0_i32, %c0_i32_0, %c0_i32_1 : i32, i32, i32
  }
  func.func @transform_4(%arg0: i32, %arg1: i32) -> (i32, i32, i32, i32) {
    %c0_i32 = arith.constant 0 : i32
    %c0_i32_0 = arith.constant 0 : i32
    %c0_i32_1 = arith.constant 0 : i32
    return %arg0, %arg1, %c0_i32, %c0_i32_0 : i32, i32, i32, i32
  }
  func.func @transform_5(%arg0: i32, %arg1: i32) -> (i32, i32, i32) {
    %c0_i32 = arith.constant 0 : i32
    %c0_i32_0 = arith.constant 0 : i32
    %c0_i32_1 = arith.constant 0 : i32
    return %arg0, %c0_i32, %c0_i32_0 : i32, i32, i32
  }
}

module attributes {stable_mosaic.version = 11 : i64} {
  func.func @_bn_relu_kernel(%arg0: i32, %arg1: i32, %arg2: memref<1x8x16x8xbf16, #tpu.memory_space<vmem>>, %arg3: memref<2x8xf32, #tpu.memory_space<vmem>>, %arg4: memref<1x8x16x8xf32, #tpu.memory_space<vmem>>) attributes {dimension_semantics = [#tpu.dimension_semantics<parallel>, #tpu.dimension_semantics<parallel>], iteration_bounds = array<i64: 2, 2>, scalar_prefetch = 0 : i64, scratch_operands = 0 : i64, tpu.core_type = #tpu.core_type<tc>, window_params = [{transform_indices = @transform_0, window_bounds = array<i64: 1, 8, 16, 8>}, {pipeline_mode = #tpu.pipeline_mode<synchronous>, transform_indices = @transform_1, window_bounds = array<i64: 2, 8>}, {transform_indices = @transform_2, window_bounds = array<i64: 1, 8, 16, 8>}]} {
    %c0 = arith.constant 0 : index
    %c0_0 = arith.constant 0 : index
    %0 = vector.load %arg3[%c0, %c0_0] : memref<2x8xf32, #tpu.memory_space<vmem>>, vector<2x8xf32>
    %1 = vector.extract_strided_slice %0 {offsets = [0, 0], sizes = [1, 8], strides = [1, 1]} : vector<2x8xf32> to vector<1x8xf32>
    %2 = vector.shape_cast %1 : vector<1x8xf32> to vector<8xf32>
    %3 = vector.shape_cast %2 : vector<8xf32> to vector<1x1x1x8xf32>
    %4 = vector.extract_strided_slice %0 {offsets = [1, 0], sizes = [1, 8], strides = [1, 1]} : vector<2x8xf32> to vector<1x8xf32>
    %5 = vector.shape_cast %4 : vector<1x8xf32> to vector<8xf32>
    %6 = vector.shape_cast %5 : vector<8xf32> to vector<1x1x1x8xf32>
    %c0_1 = arith.constant 0 : index
    %c0_2 = arith.constant 0 : index
    %c0_3 = arith.constant 0 : index
    %c0_4 = arith.constant 0 : index
    %7 = vector.load %arg2[%c0_1, %c0_2, %c0_3, %c0_4] : memref<1x8x16x8xbf16, #tpu.memory_space<vmem>>, vector<1x8x16x8xbf16>
    %8 = arith.extf %7 : vector<1x8x16x8xbf16> to vector<1x8x16x8xf32>
    %9 = vector.broadcast %3 : vector<1x1x1x8xf32> to vector<1x8x16x8xf32>
    %10 = arith.mulf %8, %9 : vector<1x8x16x8xf32>
    %11 = vector.broadcast %6 : vector<1x1x1x8xf32> to vector<1x8x16x8xf32>
    %12 = arith.addf %10, %11 : vector<1x8x16x8xf32>
    %cst = arith.constant 0.000000e+00 : f32
    %13 = vector.broadcast %cst : f32 to vector<1x8x16x8xf32>
    %14 = arith.maximumf %12, %13 : vector<1x8x16x8xf32>
    %c0_5 = arith.constant 0 : index
    %c0_6 = arith.constant 0 : index
    %c0_7 = arith.constant 0 : index
    %c0_8 = arith.constant 0 : index
    %15 = vector.load %arg4[%c0_5, %c0_6, %c0_7, %c0_8] : memref<1x8x16x8xf32, #tpu.memory_space<vmem>>, vector<1x8x16x8xf32>
    tpu.vector_store %arg4[%c0_5, %c0_6, %c0_7, %c0_8], %14 {strides = array<i32>} : memref<1x8x16x8xf32, #tpu.memory_space<vmem>>, vector<1x8x16x8xf32>,
    return
  }
  func.func @transform_0(%arg0: i32, %arg1: i32) -> (i32, i32, i32, i32) {
    %c0_i32 = arith.constant 0 : i32
    %c0_i32_0 = arith.constant 0 : i32
    %c0_i32_1 = arith.constant 0 : i32
    return %arg0, %arg1, %c0_i32, %c0_i32_0 : i32, i32, i32, i32
  }
  func.func @transform_1(%arg0: i32, %arg1: i32) -> (i32, i32) {
    %c0_i32 = arith.constant 0 : i32
    %c0_i32_0 = arith.constant 0 : i32
    %c0_i32_1 = arith.constant 0 : i32
    return %c0_i32, %c0_i32_0 : i32, i32
  }
  func.func @transform_2(%arg0: i32, %arg1: i32) -> (i32, i32, i32, i32) {
    %c0_i32 = arith.constant 0 : i32
    %c0_i32_0 = arith.constant 0 : i32
    %c0_i32_1 = arith.constant 0 : i32
    return %arg0, %arg1, %c0_i32, %c0_i32_0 : i32, i32, i32, i32
  }
}

module attributes {stable_mosaic.version = 11 : i64} {
  func.func @kernel(%arg0: i32, %arg1: i32, %arg2: memref<1x8x16x8xbf16, #tpu.memory_space<vmem>>, %arg3: memref<1x1x16x8xbf16, #tpu.memory_space<vmem>>, %arg4: memref<1x1x16x8xbf16, #tpu.memory_space<vmem>>, %arg5: memref<3x24x8xbf16, #tpu.memory_space<vmem>>, %arg6: memref<2x8xf32, #tpu.memory_space<vmem>>, %arg7: memref<1x8x16x8xbf16, #tpu.memory_space<vmem>>, %arg8: memref<1x2x8xf32, #tpu.memory_space<vmem>>) attributes {dimension_semantics = [#tpu.dimension_semantics<parallel>, #tpu.dimension_semantics<arbitrary>], iteration_bounds = array<i64: 2, 2>, scalar_prefetch = 0 : i64, scratch_operands = 0 : i64, tpu.core_type = #tpu.core_type<tc>, window_params = [{transform_indices = @transform_0, window_bounds = array<i64: 1, 8, 16, 8>}, {transform_indices = @transform_1, window_bounds = array<i64: 1, 1, 16, 8>}, {transform_indices = @transform_2, window_bounds = array<i64: 1, 1, 16, 8>}, {pipeline_mode = #tpu.pipeline_mode<synchronous>, transform_indices = @transform_3, window_bounds = array<i64: 3, 24, 8>}, {pipeline_mode = #tpu.pipeline_mode<synchronous>, transform_indices = @transform_4, window_bounds = array<i64: 2, 8>}, {transform_indices = @transform_5, window_bounds = array<i64: 1, 8, 16, 8>}, {transform_indices = @transform_6, window_bounds = array<i64: 1, 2, 8>}]} {
    %c0 = arith.constant 0 : index
    %c0_0 = arith.constant 0 : index
    %c0_1 = arith.constant 0 : index
    %c0_2 = arith.constant 0 : index
    %0 = vector.load %arg2[%c0, %c0_0, %c0_1, %c0_2] : memref<1x8x16x8xbf16, #tpu.memory_space<vmem>>, vector<1x8x16x8xbf16>
    %1 = vector.shape_cast %0 : vector<1x8x16x8xbf16> to vector<8x16x8xbf16>
    %2 = arith.extf %1 : vector<8x16x8xbf16> to vector<8x16x8xf32>
    %c0_3 = arith.constant 0 : index
    %c0_4 = arith.constant 0 : index
    %3 = vector.load %arg6[%c0_3, %c0_4] : memref<2x8xf32, #tpu.memory_space<vmem>>, vector<2x8xf32>
    %4 = vector.extract_strided_slice %3 {offsets = [0, 0], sizes = [1, 8], strides = [1, 1]} : vector<2x8xf32> to vector<1x8xf32>
    %5 = vector.shape_cast %4 : vector<1x8xf32> to vector<8xf32>
    %6 = vector.shape_cast %5 : vector<8xf32> to vector<1x1x8xf32>
    %7 = vector.extract_strided_slice %3 {offsets = [1, 0], sizes = [1, 8], strides = [1, 1]} : vector<2x8xf32> to vector<1x8xf32>
    %8 = vector.shape_cast %7 : vector<1x8xf32> to vector<8xf32>
    %9 = vector.shape_cast %8 : vector<8xf32> to vector<1x1x8xf32>
    %10 = vector.broadcast %6 : vector<1x1x8xf32> to vector<8x16x8xf32>
    %11 = arith.mulf %2, %10 : vector<8x16x8xf32>
    %12 = vector.broadcast %9 : vector<1x1x8xf32> to vector<8x16x8xf32>
    %13 = arith.addf %11, %12 : vector<8x16x8xf32>
    %cst = arith.constant 0.000000e+00 : f32
    %14 = vector.broadcast %cst : f32 to vector<8x16x8xf32>
    %15 = arith.maximumf %13, %14 : vector<8x16x8xf32>
    %c0_i32 = arith.constant 0 : i32
    %16 = arith.cmpi sgt, %arg1, %c0_i32 : i32
    %c0_5 = arith.constant 0 : index
    %c0_6 = arith.constant 0 : index
    %c0_7 = arith.constant 0 : index
    %c0_8 = arith.constant 0 : index
    %17 = vector.load %arg3[%c0_5, %c0_6, %c0_7, %c0_8] : memref<1x1x16x8xbf16, #tpu.memory_space<vmem>>, vector<1x1x16x8xbf16>
    %18 = vector.shape_cast %17 : vector<1x1x16x8xbf16> to vector<1x16x8xbf16>
    %19 = arith.extf %18 : vector<1x16x8xbf16> to vector<1x16x8xf32>
    %c0_9 = arith.constant 0 : index
    %c0_10 = arith.constant 0 : index
    %20 = vector.load %arg6[%c0_9, %c0_10] : memref<2x8xf32, #tpu.memory_space<vmem>>, vector<2x8xf32>
    %21 = vector.extract_strided_slice %20 {offsets = [0, 0], sizes = [1, 8], strides = [1, 1]} : vector<2x8xf32> to vector<1x8xf32>
    %22 = vector.shape_cast %21 : vector<1x8xf32> to vector<8xf32>
    %23 = vector.shape_cast %22 : vector<8xf32> to vector<1x1x8xf32>
    %24 = vector.extract_strided_slice %20 {offsets = [1, 0], sizes = [1, 8], strides = [1, 1]} : vector<2x8xf32> to vector<1x8xf32>
    %25 = vector.shape_cast %24 : vector<1x8xf32> to vector<8xf32>
    %26 = vector.shape_cast %25 : vector<8xf32> to vector<1x1x8xf32>
    %27 = vector.broadcast %23 : vector<1x1x8xf32> to vector<1x16x8xf32>
    %28 = arith.mulf %19, %27 : vector<1x16x8xf32>
    %29 = vector.broadcast %26 : vector<1x1x8xf32> to vector<1x16x8xf32>
    %30 = arith.addf %28, %29 : vector<1x16x8xf32>
    %cst_11 = arith.constant 0.000000e+00 : f32
    %31 = vector.broadcast %cst_11 : f32 to vector<1x16x8xf32>
    %32 = arith.maximumf %30, %31 : vector<1x16x8xf32>
    %cst_12 = arith.constant 0.000000e+00 : f32
    %33 = vector.broadcast %cst_12 : f32 to vector<1x16x8xf32>
    %34 = arith.select %16, %32, %33 : vector<1x16x8xf32>
    %c1_i32 = arith.constant 1 : i32
    %35 = arith.cmpi slt, %arg1, %c1_i32 : i32
    %c0_13 = arith.constant 0 : index
    %c0_14 = arith.constant 0 : index
    %c0_15 = arith.constant 0 : index
    %c0_16 = arith.constant 0 : index
    %36 = vector.load %arg4[%c0_13, %c0_14, %c0_15, %c0_16] : memref<1x1x16x8xbf16, #tpu.memory_space<vmem>>, vector<1x1x16x8xbf16>
    %37 = vector.shape_cast %36 : vector<1x1x16x8xbf16> to vector<1x16x8xbf16>
    %38 = arith.extf %37 : vector<1x16x8xbf16> to vector<1x16x8xf32>
    %c0_17 = arith.constant 0 : index
    %c0_18 = arith.constant 0 : index
    %39 = vector.load %arg6[%c0_17, %c0_18] : memref<2x8xf32, #tpu.memory_space<vmem>>, vector<2x8xf32>
    %40 = vector.extract_strided_slice %39 {offsets = [0, 0], sizes = [1, 8], strides = [1, 1]} : vector<2x8xf32> to vector<1x8xf32>
    %41 = vector.shape_cast %40 : vector<1x8xf32> to vector<8xf32>
    %42 = vector.shape_cast %41 : vector<8xf32> to vector<1x1x8xf32>
    %43 = vector.extract_strided_slice %39 {offsets = [1, 0], sizes = [1, 8], strides = [1, 1]} : vector<2x8xf32> to vector<1x8xf32>
    %44 = vector.shape_cast %43 : vector<1x8xf32> to vector<8xf32>
    %45 = vector.shape_cast %44 : vector<8xf32> to vector<1x1x8xf32>
    %46 = vector.broadcast %42 : vector<1x1x8xf32> to vector<1x16x8xf32>
    %47 = arith.mulf %38, %46 : vector<1x16x8xf32>
    %48 = vector.broadcast %45 : vector<1x1x8xf32> to vector<1x16x8xf32>
    %49 = arith.addf %47, %48 : vector<1x16x8xf32>
    %cst_19 = arith.constant 0.000000e+00 : f32
    %50 = vector.broadcast %cst_19 : f32 to vector<1x16x8xf32>
    %51 = arith.maximumf %49, %50 : vector<1x16x8xf32>
    %cst_20 = arith.constant 0.000000e+00 : f32
    %52 = vector.broadcast %cst_20 : f32 to vector<1x16x8xf32>
    %53 = arith.select %35, %51, %52 : vector<1x16x8xf32>
    %54 = tpu.concatenate %34, %15, %53 in 0 : vector<1x16x8xf32>, vector<8x16x8xf32>, vector<1x16x8xf32> -> vector<10x16x8xf32>
    %55 = arith.truncf %54 : vector<10x16x8xf32> to vector<10x16x8xbf16>
    %cst_21 = arith.constant 0.000000e+00 : bf16
    %56 = vector.broadcast %cst_21 : bf16 to vector<10x1x8xbf16>
    %57 = vector.extract_strided_slice %55 {offsets = [0, 0, 0], sizes = [10, 15, 8], strides = [1, 1, 1]} : vector<10x16x8xbf16> to vector<10x15x8xbf16>
    %58 = tpu.concatenate %56, %57 in 1 : vector<10x1x8xbf16>, vector<10x15x8xbf16> -> vector<10x16x8xbf16>
    %59 = vector.extract_strided_slice %55 {offsets = [0, 1, 0], sizes = [10, 15, 8], strides = [1, 1, 1]} : vector<10x16x8xbf16> to vector<10x15x8xbf16>
    %60 = tpu.concatenate %59, %56 in 1 : vector<10x15x8xbf16>, vector<10x1x8xbf16> -> vector<10x16x8xbf16>
    %61 = tpu.concatenate %58, %55, %60 in 2 : vector<10x16x8xbf16>, vector<10x16x8xbf16>, vector<10x16x8xbf16> -> vector<10x16x24xbf16>
    %cst_22 = arith.constant 0.000000e+00 : f32
    %62 = vector.broadcast %cst_22 : f32 to vector<128x8xf32>
    %63 = vector.extract_strided_slice %61 {offsets = [0, 0, 0], sizes = [8, 16, 24], strides = [1, 1, 1]} : vector<10x16x24xbf16> to vector<8x16x24xbf16>
    %64 = vector.shape_cast %63 : vector<8x16x24xbf16> to vector<128x24xbf16>
    %c0_23 = arith.constant 0 : index
    %c0_24 = arith.constant 0 : index
    %c0_25 = arith.constant 0 : index
    %65 = vector.load %arg5[%c0_23, %c0_24, %c0_25] : memref<3x24x8xbf16, #tpu.memory_space<vmem>>, vector<1x24x8xbf16>
    %66 = vector.shape_cast %65 : vector<1x24x8xbf16> to vector<24x8xbf16>
    %cst_26 = arith.constant dense<0.000000e+00> : vector<128x8xf32>
    %67 = tpu.matmul %64, %66, %cst_26 {dimension_numbers = #tpu.dot_dimension_numbers<[1], [0], [0], [1], [0, 0, 1, 1], [], []>} : vector<128x24xbf16>, vector<24x8xbf16>, vector<128x8xf32> -> vector<128x8xf32>
    %68 = arith.addf %62, %67 : vector<128x8xf32>
    %69 = vector.extract_strided_slice %61 {offsets = [1, 0, 0], sizes = [8, 16, 24], strides = [1, 1, 1]} : vector<10x16x24xbf16> to vector<8x16x24xbf16>
    %70 = vector.shape_cast %69 : vector<8x16x24xbf16> to vector<128x24xbf16>
    %c1 = arith.constant 1 : index
    %c0_27 = arith.constant 0 : index
    %c0_28 = arith.constant 0 : index
    %71 = vector.load %arg5[%c1, %c0_27, %c0_28] : memref<3x24x8xbf16, #tpu.memory_space<vmem>>, vector<1x24x8xbf16>
    %72 = vector.shape_cast %71 : vector<1x24x8xbf16> to vector<24x8xbf16>
    %cst_29 = arith.constant dense<0.000000e+00> : vector<128x8xf32>
    %73 = tpu.matmul %70, %72, %cst_29 {dimension_numbers = #tpu.dot_dimension_numbers<[1], [0], [0], [1], [0, 0, 1, 1], [], []>} : vector<128x24xbf16>, vector<24x8xbf16>, vector<128x8xf32> -> vector<128x8xf32>
    %74 = arith.addf %68, %73 : vector<128x8xf32>
    %75 = vector.extract_strided_slice %61 {offsets = [2, 0, 0], sizes = [8, 16, 24], strides = [1, 1, 1]} : vector<10x16x24xbf16> to vector<8x16x24xbf16>
    %76 = vector.shape_cast %75 : vector<8x16x24xbf16> to vector<128x24xbf16>
    %c2 = arith.constant 2 : index
    %c0_30 = arith.constant 0 : index
    %c0_31 = arith.constant 0 : index
    %77 = vector.load %arg5[%c2, %c0_30, %c0_31] : memref<3x24x8xbf16, #tpu.memory_space<vmem>>, vector<1x24x8xbf16>
    %78 = vector.shape_cast %77 : vector<1x24x8xbf16> to vector<24x8xbf16>
    %cst_32 = arith.constant dense<0.000000e+00> : vector<128x8xf32>
    %79 = tpu.matmul %76, %78, %cst_32 {dimension_numbers = #tpu.dot_dimension_numbers<[1], [0], [0], [1], [0, 0, 1, 1], [], []>} : vector<128x24xbf16>, vector<24x8xbf16>, vector<128x8xf32> -> vector<128x8xf32>
    %80 = arith.addf %74, %79 : vector<128x8xf32>
    %81 = vector.shape_cast %80 : vector<128x8xf32> to vector<1x8x16x8xf32>
    %82 = arith.truncf %81 : vector<1x8x16x8xf32> to vector<1x8x16x8xbf16>
    %c0_33 = arith.constant 0 : index
    %c0_34 = arith.constant 0 : index
    %c0_35 = arith.constant 0 : index
    %c0_36 = arith.constant 0 : index
    %83 = vector.load %arg7[%c0_33, %c0_34, %c0_35, %c0_36] : memref<1x8x16x8xbf16, #tpu.memory_space<vmem>>, vector<1x8x16x8xbf16>
    tpu.vector_store %arg7[%c0_33, %c0_34, %c0_35, %c0_36], %82 {strides = array<i32>} : memref<1x8x16x8xbf16, #tpu.memory_space<vmem>>, vector<1x8x16x8xbf16>,
    %c0_i32_37 = arith.constant 0 : i32
    %84 = arith.cmpi eq, %arg1, %c0_i32_37 : i32
    %85 = arith.extui %84 : i1 to i32
    %c0_i32_38 = arith.constant 0 : i32
    %86 = arith.cmpi ne, %85, %c0_i32_38 : i32
    scf.if %86 {
      %cst_47 = arith.constant 0.000000e+00 : f32
      %97 = vector.broadcast %cst_47 : f32 to vector<1x2x8xf32>
      %c0_48 = arith.constant 0 : index
      %c0_49 = arith.constant 0 : index
      %c0_50 = arith.constant 0 : index
      %98 = vector.load %arg8[%c0_48, %c0_49, %c0_50] : memref<1x2x8xf32, #tpu.memory_space<vmem>>, vector<1x2x8xf32>
      tpu.vector_store %arg8[%c0_48, %c0_49, %c0_50], %97 {strides = array<i32>} : memref<1x2x8xf32, #tpu.memory_space<vmem>>, vector<1x2x8xf32>,
    } else {
    }
    %cst_39 = arith.constant dense<0.000000e+00> : vector<8xf32>
    %87 = vector.multi_reduction <add>, %80, %cst_39 [0] : vector<128x8xf32> to vector<8xf32>
    %88 = vector.shape_cast %87 : vector<8xf32> to vector<1x8xf32>
    %89 = arith.mulf %80, %80 : vector<128x8xf32>
    %cst_40 = arith.constant dense<0.000000e+00> : vector<8xf32>
    %90 = vector.multi_reduction <add>, %89, %cst_40 [0] : vector<128x8xf32> to vector<8xf32>
    %91 = vector.shape_cast %90 : vector<8xf32> to vector<1x8xf32>
    %c0_41 = arith.constant 0 : index
    %c0_42 = arith.constant 0 : index
    %c0_43 = arith.constant 0 : index
    %92 = vector.load %arg8[%c0_41, %c0_42, %c0_43] : memref<1x2x8xf32, #tpu.memory_space<vmem>>, vector<1x2x8xf32>
    %93 = tpu.concatenate %88, %91 in 0 : vector<1x8xf32>, vector<1x8xf32> -> vector<2x8xf32>
    %94 = vector.shape_cast %93 : vector<2x8xf32> to vector<1x2x8xf32>
    %95 = arith.addf %92, %94 : vector<1x2x8xf32>
    %c0_44 = arith.constant 0 : index
    %c0_45 = arith.constant 0 : index
    %c0_46 = arith.constant 0 : index
    %96 = vector.load %arg8[%c0_44, %c0_45, %c0_46] : memref<1x2x8xf32, #tpu.memory_space<vmem>>, vector<1x2x8xf32>
    tpu.vector_store %arg8[%c0_44, %c0_45, %c0_46], %95 {strides = array<i32>} : memref<1x2x8xf32, #tpu.memory_space<vmem>>, vector<1x2x8xf32>,
    return
  }
  func.func @transform_0(%arg0: i32, %arg1: i32) -> (i32, i32, i32, i32) {
    %c0_i32 = arith.constant 0 : i32
    %c0_i32_0 = arith.constant 0 : i32
    %c0_i32_1 = arith.constant 0 : i32
    return %arg0, %arg1, %c0_i32, %c0_i32_0 : i32, i32, i32, i32
  }
  func.func @transform_1(%arg0: i32, %arg1: i32) -> (i32, i32, i32, i32) {
    %c8_i32 = arith.constant 8 : i32
    %0 = arith.muli %arg1, %c8_i32 : i32
    %c1_i32 = arith.constant 1 : i32
    %1 = arith.subi %0, %c1_i32 : i32
    %c0_i32 = arith.constant 0 : i32
    %2 = arith.maxsi %1, %c0_i32 : i32
    %c0_i32_0 = arith.constant 0 : i32
    %c0_i32_1 = arith.constant 0 : i32
    %c0_i32_2 = arith.constant 0 : i32
    return %arg0, %2, %c0_i32_0, %c0_i32_1 : i32, i32, i32, i32
  }
  func.func @transform_2(%arg0: i32, %arg1: i32) -> (i32, i32, i32, i32) {
    %c8_i32 = arith.constant 8 : i32
    %0 = arith.muli %arg1, %c8_i32 : i32
    %c8_i32_0 = arith.constant 8 : i32
    %1 = arith.addi %0, %c8_i32_0 : i32
    %c15_i32 = arith.constant 15 : i32
    %2 = arith.minsi %1, %c15_i32 : i32
    %c0_i32 = arith.constant 0 : i32
    %c0_i32_1 = arith.constant 0 : i32
    %c0_i32_2 = arith.constant 0 : i32
    return %arg0, %2, %c0_i32, %c0_i32_1 : i32, i32, i32, i32
  }
  func.func @transform_3(%arg0: i32, %arg1: i32) -> (i32, i32, i32) {
    %c0_i32 = arith.constant 0 : i32
    %c0_i32_0 = arith.constant 0 : i32
    %c0_i32_1 = arith.constant 0 : i32
    %c0_i32_2 = arith.constant 0 : i32
    return %c0_i32, %c0_i32_0, %c0_i32_1 : i32, i32, i32
  }
  func.func @transform_4(%arg0: i32, %arg1: i32) -> (i32, i32) {
    %c0_i32 = arith.constant 0 : i32
    %c0_i32_0 = arith.constant 0 : i32
    %c0_i32_1 = arith.constant 0 : i32
    return %c0_i32, %c0_i32_0 : i32, i32
  }
  func.func @transform_5(%arg0: i32, %arg1: i32) -> (i32, i32, i32, i32) {
    %c0_i32 = arith.constant 0 : i32
    %c0_i32_0 = arith.constant 0 : i32
    %c0_i32_1 = arith.constant 0 : i32
    return %arg0, %arg1, %c0_i32, %c0_i32_0 : i32, i32, i32, i32
  }
  func.func @transform_6(%arg0: i32, %arg1: i32) -> (i32, i32, i32) {
    %c0_i32 = arith.constant 0 : i32
    %c0_i32_0 = arith.constant 0 : i32
    %c0_i32_1 = arith.constant 0 : i32
    return %arg0, %c0_i32, %c0_i32_0 : i32, i32, i32
  }
}

</mosaic_0001>

<llo_original>
// kernel: _lambda_.5
$region0: #{_lambda_.5}
  #allocation0 [shape = 'u32[]', space=smem, size = 0x4, offset = 0x4, fixed_abs, tag = 'smem constant byte address 0x4 - core index']
  #allocation1 [shape = 'u32[144,128]{1,0:T(1,128)}', space=vmem, size = 0x12000, scoped, tag = 'internal scratch']
  %s0 = inlined_call_operand.vmem [shape: bf16[2,16,16,8], index: 0, kind: input, shape index: {}]
  %s1 = inlined_call_operand.vmem [shape: f32[2,8], index: 1, kind: input, shape index: {}]
  %s2 = inlined_call_operand.vmem [shape: f32[2,16,16,8], index: 2, kind: output, shape index: {}]
  %s3 = sld [smem:[#allocation0]]
  $region41: #{_lambda_.5} parent=0
    _
  %s5 = ssub.s32 1, %s3
  %s6 = scalar_select 0, %s5, %s3
  loop: start=0, step=1, limit=6
  $region2: #{_lambda_.5} parent=0 // loop_pre_header
    _
  $region3: #{_lambda_.5} parent=0 // loop_header
    %s8 = sphi 0, %s12
    %p9 = scmp.ge.s32.totalorder %s8, 6
    %s15 = sphi 0, %s27
    %s16 = sphi 0, %s23
    %s17 = sphi 0, %s15
    %s18 = sphi 0, %s16
    %s19 = sphi 0, %s17
    %s20 = sphi 0, %s18
    %s32 = sphi 0, %s34
    %s35 = sphi 0, %s32
    %s36 = sphi 0, %s35
    %s52 = sphi 0, %s36
    %s56 = sphi 0, %s56
    %s58 = sphi 0, %s56
    %s59 = sphi 0, %s58
    %s73 = sphi 0, %s59
    %s81 = sphi 0, %s83
    %s84 = sphi 0, %s81
    %s85 = sphi 0, %s84
    %s101 = sphi 0, %s85
  $region4: #{_lambda_.5} parent=0 // loop_header_branch
    %11 = sbr.rel (%p9) target = $region8
  $region5: #{_lambda_.5} parent=0 // loop_body
    %s13 = ssub.s32 %s8, 1
    %s14 = ssub.s32 %s8, 2
    %s21 = sadd.s32 1, %s16
    %p22 = scmp.ge.s32.totalorder %s21, 2
    %s23 = scalar_select %p22, 0, %s21
    %s24 = sadd.s32 1, %s15
    %s25 = scalar_select %p22, %s24, %s15
    %p26 = scmp.ge.s32.totalorder %s25, 2
    %s27 = scalar_select %p26, 0, %s25
    %s28 = ssub.s32 %s15, %s27
    %s29 = ssub.s32 %s16, %s23
    %s30 = sor.u32 %s28, %s29
    %p31 = scmp.eq.s32.totalorder %s30, 0
    %s33 = sadd.s32 %s32, 1
    %s34 = scalar_select %p31, %s32, %s33
    %p37 = pneg %p31
    %p38 = scmp.eq.s32.totalorder %s8, 3
    %p39 = por %p37, %p38
    %p40 = scmp.ne.s32.totalorder %s32, %s35
    %p41 = scmp.eq.s32.totalorder %s8, 0
    %p42 = por %p40, %p41
    %p43 = scmp.ne.s32.totalorder %s32, %s35
    %p44 = scmp.eq.s32.totalorder %s13, 3
    %p45 = por %p43, %p44
    %p46 = scmp.ne.s32.totalorder %s35, %s36
    %p47 = scmp.eq.s32.totalorder %s13, 0
    %p48 = por %p46, %p47
    %p49 = scmp.ne.s32.totalorder %s35, %s36
    %p50 = scmp.eq.s32.totalorder %s14, 3
    %p51 = por %p49, %p50
    %p53 = scmp.ne.s32.totalorder %s36, %s52
    %p54 = scmp.eq.s32.totalorder %s14, 0
    %p55 = por %p53, %p54
    %s57 = sadd.s32 %s56, 1
    %p60 = scmp.eq.s32.totalorder %s8, 3
    %p61 = scmp.ne.s32.totalorder %s56, %s58
    %p62 = scmp.eq.s32.totalorder %s8, 0
    %p63 = por %p61, %p62
    %p64 = scmp.ne.s32.totalorder %s56, %s58
    %p65 = scmp.eq.s32.totalorder %s13, 3
    %p66 = por %p64, %p65
    %p67 = scmp.ne.s32.totalorder %s58, %s59
    %p68 = scmp.eq.s32.totalorder %s13, 0
    %p69 = por %p67, %p68
    %p70 = scmp.ne.s32.totalorder %s58, %s59
    %p71 = scmp.eq.s32.totalorder %s14, 3
    %p72 = por %p70, %p71
    %p74 = scmp.ne.s32.totalorder %s59, %s73
    %p75 = scmp.eq.s32.totalorder %s14, 0
    %p76 = por %p74, %p75
    %s77 = ssub.s32 %s15, %s27
    %s78 = ssub.s32 %s16, %s23
    %s79 = sor.u32 %s77, %s78
    %p80 = scmp.eq.s32.totalorder %s79, 0
    %s82 = sadd.s32 %s81, 1
    %s83 = scalar_select %p80, %s81, %s82
    %p86 = pneg %p80
    %p87 = scmp.eq.s32.totalorder %s8, 3
    %p88 = por %p86, %p87
    %p89 = scmp.ne.s32.totalorder %s81, %s84
    %p90 = scmp.eq.s32.totalorder %s8, 0
    %p91 = por %p89, %p90
    %p92 = scmp.ne.s32.totalorder %s81, %s84
    %p93 = scmp.eq.s32.totalorder %s13, 3
    %p94 = por %p92, %p93
    %p95 = scmp.ne.s32.totalorder %s84, %s85
    %p96 = scmp.eq.s32.totalorder %s13, 0
    %p97 = por %p95, %p96
    %p98 = scmp.ne.s32.totalorder %s84, %s85
    %p99 = scmp.eq.s32.totalorder %s14, 3
    %p100 = por %p98, %p99
    %p102 = scmp.ne.s32.totalorder %s85, %s101
    %p103 = scmp.eq.s32.totalorder %s14, 0
    %p104 = por %p102, %p103
    %p105 = scmp.le.s32.totalorder 1, %s8
    %p106 = scmp.lt.s32.totalorder %s8, 5
    %p107 = pnand %p105, %p106
    %p108 = pneg %p107
    // Predicated region
    $region9: #{_lambda_.5} parent=5 // pred_check
      _
    $region10: #{_lambda_.5} parent=5 // pred_check_branch
      %110 = sbr.rel (%p107) target = $region12
    $region11: #{_lambda_.5} parent=5 // pred_region
      %s111 = ssub.s32 %s8, 1
      // Predicated region
      $region13: #{_lambda_.5} parent=11 // pred_check
        %p112 = pneg %p69
      $region14: #{_lambda_.5} parent=11 // pred_check_branch
        %114 = sbr.rel (%p112) target = $region16
      $region15: #{_lambda_.5} parent=11 // pred_region
        _
      $region16: #{_lambda_.5} parent=11 // pred_fallthru
        _
    $region12: #{_lambda_.5} parent=5 // pred_fallthru
      _
    %p115 = scmp.lt.s32.totalorder %s8, 4
    // Predicated region
    $region17: #{_lambda_.5} parent=5 // pred_check
      %p116 = pneg %p115
    $region18: #{_lambda_.5} parent=5 // pred_check_branch
      %118 = sbr.rel (%p116) target = $region20
    $region19: #{_lambda_.5} parent=5 // pred_region
      // Predicated region
      $region21: #{_lambda_.5} parent=19 // pred_check
        %p119 = pneg %p42
      $region22: #{_lambda_.5} parent=19 // pred_check_branch
        %121 = sbr.rel (%p119) target = $region24
      $region23: #{_lambda_.5} parent=19 // pred_region
        %s122 = smul.u32 8, %s16
        %p123 = scmp.lt.s32.totalorder %s15, 1
        %s124 = scalar_select %p123, %s15, 1
        %p125 = scmp.lt.s32.totalorder %s122, 15
        %s126 = scalar_select %p125, %s122, 15
        %s127 = smul.addr %s126, 2
        %s128 = smul.addr %s124, 32
        %s129 = sadd.s32 %s127, %s128
        %s130 = smul.addr %s129, 4
        %s131 = scalar_lea.vmem %s0, %s130
        %s132 = smul.u32 8, %s16
      $region24: #{_lambda_.5} parent=19 // pred_fallthru
        _
    $region20: #{_lambda_.5} parent=5 // pred_fallthru
      _
    %p133 = scmp.le.s32.totalorder 1, %s8
    %p134 = scmp.lt.s32.totalorder %s8, 5
    %p135 = pnand %p133, %p134
    %p136 = pneg %p135
    // Predicated region
    $region25: #{_lambda_.5} parent=5 // pred_check
      _
    $region26: #{_lambda_.5} parent=5 // pred_check_branch
      %138 = sbr.rel (%p135) target = $region28
    $region27: #{_lambda_.5} parent=5 // pred_region
      %s139 = ssub.s32 %s8, 1
      %s140 = smul.u32 8, %s18
      %p141 = scmp.lt.s32.totalorder %s17, 1
      %s142 = scalar_select %p141, %s17, 1
      %p143 = scmp.lt.s32.totalorder %s140, 15
      %s144 = scalar_select %p143, %s140, 15
      %s145 = smul.addr %s144, 2
      %s146 = smul.addr %s142, 32
      %s147 = sadd.s32 %s145, %s146
      %s148 = smul.addr %s147, 4
      %s149 = scalar_lea.vmem %s0, %s148
      %p150 = pneg %p48
      %p151 = pneg %p45
      %p152 = pneg %p69
      %p153 = pneg %p66
      %p154 = pneg %p97
      %p155 = pneg %p94
      %s156 = smul.u32 8, %s18
      %p157 = scmp.lt.s32.totalorder %s17, 1
      %s158 = scalar_select %p157, %s17, 1
      %p159 = scmp.lt.s32.totalorder %s156, 15
      %s160 = scalar_select %p159, %s156, 15
      %s161 = smul.addr %s160, 2
      %s162 = smul.addr %s158, 32
      %s163 = sadd.s32 %s161, %s162
      %s164 = smul.addr %s163, 8
      %s165 = scalar_lea.vmem %s2, %s164
      %s166 = smul.u32 8, %s18
      %p167 = scmp.lt.s32.totalorder %s17, 1
      %s168 = scalar_select %p167, %s17, 1
      %p169 = scmp.lt.s32.totalorder %s166, 15
      %s170 = scalar_select %p169, %s166, 15
      %s171 = smul.addr %s170, 2
      %s172 = smul.addr %s168, 32
      %s173 = sadd.s32 %s171, %s172
      %s174 = smul.addr %s173, 4
      %s175 = scalar_lea.vmem %s0, %s174
      %s176 = smul.u32 8, %s18
      %s177 = smul.u32 8, %s18
      %p178 = scmp.lt.s32.totalorder %s17, 1
      %s179 = scalar_select %p178, %s17, 1
      %p180 = scmp.lt.s32.totalorder %s177, 15
      %s181 = scalar_select %p180, %s177, 15
      %s182 = smul.addr %s181, 2
      %s183 = smul.addr %s179, 32
      %s184 = sadd.s32 %s182, %s183
      %s185 = smul.addr %s184, 8
      %s186 = scalar_lea.vmem %s2, %s185
      %s187 = smul.u32 8, %s18
      %v188 = vld [vmem:[%s1] sm:$0x3]
      %v189 = vld [vmem:[%s175] sm:$0xf]
      %v190 = vld [vmem:[%s175 + $0x4] sm:$0xf]
      %v191 = vld [vmem:[%s175 + $0x8] sm:$0xf]
      %v192 = vld [vmem:[%s175 + $0xc] sm:$0xf]
      %v193 = vld [vmem:[%s175 + $0x10] sm:$0xf]
      %v194 = vld [vmem:[%s175 + $0x14] sm:$0xf]
      %v195 = vld [vmem:[%s175 + $0x18] sm:$0xf]
      %v196 = vld [vmem:[%s175 + $0x1c] sm:$0xf]
      %v197 = vld [vmem:[%s175 + $0x20] sm:$0xf]
      %v198 = vld [vmem:[%s175 + $0x24] sm:$0xf]
      %v199 = vld [vmem:[%s175 + $0x28] sm:$0xf]
      %v200 = vld [vmem:[%s175 + $0x2c] sm:$0xf]
      %v201 = vld [vmem:[%s175 + $0x30] sm:$0xf]
      %v202 = vld [vmem:[%s175 + $0x34] sm:$0xf]
      %v203 = vld [vmem:[%s175 + $0x38] sm:$0xf]
      %v204 = vld [vmem:[%s175 + $0x3c] sm:$0xf]
      %v205 = vunpack.c.l.bf16 %v189
      %v206 = vunpack.c.l.bf16 %v190
      %v207 = vunpack.c.l.bf16 %v191
      %v208 = vunpack.c.l.bf16 %v192
      %v209 = vunpack.c.l.bf16 %v193
      %v210 = vunpack.c.l.bf16 %v194
      %v211 = vunpack.c.l.bf16 %v195
      %v212 = vunpack.c.l.bf16 %v196
      %v213 = vunpack.c.l.bf16 %v197
      %v214 = vunpack.c.l.bf16 %v198
      %v215 = vunpack.c.l.bf16 %v199
      %v216 = vunpack.c.l.bf16 %v200
      %v217 = vunpack.c.l.bf16 %v201
      %v218 = vunpack.c.l.bf16 %v202
      %v219 = vunpack.c.l.bf16 %v203
      %v220 = vunpack.c.l.bf16 %v204
      %v221 = vlaneseq
      %v222 = vshrl.u32 %v221, 7
      %v223 = vsub.s32 0, %v222
      %v224 = vrot.slane %v188, %v223
      %v225 = vmul.f32 %v205, %v224
      %v226 = vmul.f32 %v206, %v224
      %v227 = vmul.f32 %v207, %v224
      %v228 = vmul.f32 %v208, %v224
      %v229 = vmul.f32 %v209, %v224
      %v230 = vmul.f32 %v210, %v224
      %v231 = vmul.f32 %v211, %v224
      %v232 = vmul.f32 %v212, %v224
      %v233 = vmul.f32 %v213, %v224
      %v234 = vmul.f32 %v214, %v224
      %v235 = vmul.f32 %v215, %v224
      %v236 = vmul.f32 %v216, %v224
      %v237 = vmul.f32 %v217, %v224
      %v238 = vmul.f32 %v218, %v224
      %v239 = vmul.f32 %v219, %v224
      %v240 = vmul.f32 %v220, %v224
      %v241 = vlaneseq
      %v242 = vshrl.u32 %v241, 7
      %v243 = vsub.s32 1, %v242
      %v244 = vrot.slane %v188, %v243
      %v245 = vadd.f32 %v225, %v244
      %v246 = vadd.f32 %v226, %v244
      %v247 = vadd.f32 %v227, %v244
      %v248 = vadd.f32 %v228, %v244
      %v249 = vadd.f32 %v229, %v244
      %v250 = vadd.f32 %v230, %v244
      %v251 = vadd.f32 %v231, %v244
      %v252 = vadd.f32 %v232, %v244
      %v253 = vadd.f32 %v233, %v244
      %v254 = vadd.f32 %v234, %v244
      %v255 = vadd.f32 %v235, %v244
      %v256 = vadd.f32 %v236, %v244
      %v257 = vadd.f32 %v237, %v244
      %v258 = vadd.f32 %v238, %v244
      %v259 = vadd.f32 %v239, %v244
      %v260 = vadd.f32 %v240, %v244
      %v261 = vmax.f32 %v245, 0.0
      %v262 = vmax.f32 %v246, 0.0
      %v263 = vmax.f32 %v247, 0.0
      %v264 = vmax.f32 %v248, 0.0
      %v265 = vmax.f32 %v249, 0.0
      %v266 = vmax.f32 %v250, 0.0
      %v267 = vmax.f32 %v251, 0.0
      %v268 = vmax.f32 %v252, 0.0
      %v269 = vmax.f32 %v253, 0.0
      %v270 = vmax.f32 %v254, 0.0
      %v271 = vmax.f32 %v255, 0.0
      %v272 = vmax.f32 %v256, 0.0
      %v273 = vmax.f32 %v257, 0.0
      %v274 = vmax.f32 %v258, 0.0
      %v275 = vmax.f32 %v259, 0.0
      %v276 = vmax.f32 %v260, 0.0
      %vm277 = vcmask 64512
      %278 = vst.msk [vmem:[%s186] sm:$0xff] %vm277, %v261
      %279 = vst.msk [vmem:[%s186 + $0x8] sm:$0xff] %vm277, %v262
      %280 = vst.msk [vmem:[%s186 + $0x10] sm:$0xff] %vm277, %v263
      %281 = vst.msk [vmem:[%s186 + $0x18] sm:$0xff] %vm277, %v264
      %282 = vst.msk [vmem:[%s186 + $0x20] sm:$0xff] %vm277, %v265
      %283 = vst.msk [vmem:[%s186 + $0x28] sm:$0xff] %vm277, %v266
      %284 = vst.msk [vmem:[%s186 + $0x30] sm:$0xff] %vm277, %v267
      %285 = vst.msk [vmem:[%s186 + $0x38] sm:$0xff] %vm277, %v268
      %286 = vst.msk [vmem:[%s186 + $0x40] sm:$0xff] %vm277, %v269
      %287 = vst.msk [vmem:[%s186 + $0x48] sm:$0xff] %vm277, %v270
      %288 = vst.msk [vmem:[%s186 + $0x50] sm:$0xff] %vm277, %v271
      %289 = vst.msk [vmem:[%s186 + $0x58] sm:$0xff] %vm277, %v272
      %290 = vst.msk [vmem:[%s186 + $0x60] sm:$0xff] %vm277, %v273
      %291 = vst.msk [vmem:[%s186 + $0x68] sm:$0xff] %vm277, %v274
      %292 = vst.msk [vmem:[%s186 + $0x70] sm:$0xff] %vm277, %v275
      %293 = vst.msk [vmem:[%s186 + $0x78] sm:$0xff] %vm277, %v276
      %s294 = smul.u32 8, %s18
      %p295 = scmp.lt.s32.totalorder %s17, 1
      %s296 = scalar_select %p295, %s17, 1
      %p297 = scmp.lt.s32.totalorder %s294, 15
      %s298 = scalar_select %p297, %s294, 15
      %s299 = smul.addr %s298, 2
      %s300 = smul.addr %s296, 32
      %s301 = sadd.s32 %s299, %s300
      %s302 = smul.addr %s301, 8
      %s303 = scalar_lea.vmem %s2, %s302
      // Predicated region
      $region29: #{_lambda_.5} parent=27 // pred_check
        %p304 = pneg %p94
      $region30: #{_lambda_.5} parent=27 // pred_check_branch
        %306 = sbr.rel (%p304) target = $region32
      $region31: #{_lambda_.5} parent=27 // pred_region
        %s307 = smul.u32 8, %s18
      $region32: #{_lambda_.5} parent=27 // pred_fallthru
        _
    $region28: #{_lambda_.5} parent=5 // pred_fallthru
      _
    %p308 = scmp.le.s32.totalorder 2, %s8
    // Predicated region
    $region33: #{_lambda_.5} parent=5 // pred_check
      %p309 = pneg %p308
    $region34: #{_lambda_.5} parent=5 // pred_check_branch
      %311 = sbr.rel (%p309) target = $region36
    $region35: #{_lambda_.5} parent=5 // pred_region
      %s312 = ssub.s32 %s8, 2
      // Predicated region
      $region37: #{_lambda_.5} parent=35 // pred_check
        %p313 = pneg %p100
      $region38: #{_lambda_.5} parent=35 // pred_check_branch
        %315 = sbr.rel (%p313) target = $region40
      $region39: #{_lambda_.5} parent=35 // pred_region
        %s316 = smul.u32 8, %s20
        %p317 = scmp.lt.s32.totalorder %s19, 1
        %s318 = scalar_select %p317, %s19, 1
        %p319 = scmp.lt.s32.totalorder %s316, 15
        %s320 = scalar_select %p319, %s316, 15
        %s321 = smul.addr %s320, 2
        %s322 = smul.addr %s318, 32
        %s323 = sadd.s32 %s321, %s322
        %s324 = smul.addr %s323, 8
        %s325 = scalar_lea.vmem %s2, %s324
      $region40: #{_lambda_.5} parent=35 // pred_fallthru
        _
    $region36: #{_lambda_.5} parent=5 // pred_fallthru
      _
  $region6: #{_lambda_.5} parent=0 // loop_footer
    %s12 = sadd.s32 1, %s8
  $region7: #{_lambda_.5} parent=0 // loop_footer_branch
    %7 = sbr.rel target = $region3
  $region8: #{_lambda_.5} parent=0 // loop_exit
    _

// kernel: _lambda_.3
$region0: #{_lambda_.3}
  #allocation0 [shape = 'u32[]', space=smem, size = 0x4, offset = 0x4, fixed_abs, tag = 'smem constant byte address 0x4 - core index']
  #allocation1 [shape = 'u32[144,128]{1,0:T(1,128)}', space=vmem, size = 0x12000, scoped, tag = 'internal scratch']
  %s0 = inlined_call_operand.vmem [shape: bf16[2,16,16,4], index: 0, kind: input, shape index: {}, may-alias: {0,1,2}]
  %s1 = inlined_call_operand.vmem [shape: bf16[2,16,16,4], index: 1, kind: input, shape index: {}, may-alias: {0,1,2}]
  %s2 = inlined_call_operand.vmem [shape: bf16[2,16,16,4], index: 2, kind: input, shape index: {}, may-alias: {0,1,2}]
  %s3 = inlined_call_operand.vmem [shape: bf16[3,12,8], index: 3, kind: input, shape index: {}]
  %s4 = inlined_call_operand.vmem [shape: bf16[2,16,16,8], index: 4, kind: output, shape index: {0}]
  %s5 = inlined_call_operand.vmem [shape: f32[2,2,8], index: 5, kind: output, shape index: {1}]
  %6 = xla_tuple %s4, %s5
  %s7 = sld [smem:[#allocation0]]
  $region61: #{_lambda_.3} parent=0
    _
  %s9 = ssub.s32 1, %s7
  %s10 = scalar_select 0, %s9, %s7
  loop: start=0, step=1, limit=6
  $region2: #{_lambda_.3} parent=0 // loop_pre_header
    _
  $region3: #{_lambda_.3} parent=0 // loop_header
    %s12 = sphi 0, %s16
    %p13 = scmp.ge.s32.totalorder %s12, 6
    %s19 = sphi 0, %s31
    %s20 = sphi 0, %s27
    %s21 = sphi 0, %s19
    %s22 = sphi 0, %s20
    %s23 = sphi 0, %s21
    %s24 = sphi 0, %s22
    %s36 = sphi 0, %s38
    %s39 = sphi 0, %s36
    %s40 = sphi 0, %s39
    %s56 = sphi 0, %s40
    %s72 = sphi 0, %s74
    %s75 = sphi 0, %s72
    %s76 = sphi 0, %s75
    %s92 = sphi 0, %s76
    %s108 = sphi 0, %s110
    %s111 = sphi 0, %s108
    %s112 = sphi 0, %s111
    %s128 = sphi 0, %s112
    %s132 = sphi 0, %s132
    %s134 = sphi 0, %s132
    %s135 = sphi 0, %s134
    %s149 = sphi 0, %s135
    %s157 = sphi 0, %s159
    %s160 = sphi 0, %s157
    %s161 = sphi 0, %s160
    %s177 = sphi 0, %s161
    %s183 = sphi 0, %s185
    %s186 = sphi 0, %s183
    %s187 = sphi 0, %s186
    %s203 = sphi 0, %s187
  $region4: #{_lambda_.3} parent=0 // loop_header_branch
    %15 = sbr.rel (%p13) target = $region8
  $region5: #{_lambda_.3} parent=0 // loop_body
    %s17 = ssub.s32 %s12, 1
    %s18 = ssub.s32 %s12, 2
    %s25 = sadd.s32 1, %s20
    %p26 = scmp.ge.s32.totalorder %s25, 2
    %s27 = scalar_select %p26, 0, %s25
    %s28 = sadd.s32 1, %s19
    %s29 = scalar_select %p26, %s28, %s19
    %p30 = scmp.ge.s32.totalorder %s29, 2
    %s31 = scalar_select %p30, 0, %s29
    %s32 = ssub.s32 %s19, %s31
    %s33 = ssub.s32 %s20, %s27
    %s34 = sor.u32 %s32, %s33
    %p35 = scmp.eq.s32.totalorder %s34, 0
    %s37 = sadd.s32 %s36, 1
    %s38 = scalar_select %p35, %s36, %s37
    %p41 = pneg %p35
    %p42 = scmp.eq.s32.totalorder %s12, 3
    %p43 = por %p41, %p42
    %p44 = scmp.ne.s32.totalorder %s36, %s39
    %p45 = scmp.eq.s32.totalorder %s12, 0
    %p46 = por %p44, %p45
    %p47 = scmp.ne.s32.totalorder %s36, %s39
    %p48 = scmp.eq.s32.totalorder %s17, 3
    %p49 = por %p47, %p48
    %p50 = scmp.ne.s32.totalorder %s39, %s40
    %p51 = scmp.eq.s32.totalorder %s17, 0
    %p52 = por %p50, %p51
    %p53 = scmp.ne.s32.totalorder %s39, %s40
    %p54 = scmp.eq.s32.totalorder %s18, 3
    %p55 = por %p53, %p54
    %p57 = scmp.ne.s32.totalorder %s40, %s56
    %p58 = scmp.eq.s32.totalorder %s18, 0
    %p59 = por %p57, %p58
    %s60 = smul.u32 %s20, 8
    %s61 = ssub.s32 %s60, 1
    %p62 = scmp.gt.s32.totalorder %s61, 0
    %s63 = scalar_select %p62, %s61, 0
    %s64 = smul.u32 %s27, 8
    %s65 = ssub.s32 %s64, 1
    %p66 = scmp.gt.s32.totalorder %s65, 0
    %s67 = scalar_select %p66, %s65, 0
    %s68 = ssub.s32 %s19, %s31
    %s69 = ssub.s32 %s63, %s67
    %s70 = sor.u32 %s68, %s69
    %p71 = scmp.eq.s32.totalorder %s70, 0
    %s73 = sadd.s32 %s72, 1
    %s74 = scalar_select %p71, %s72, %s73
    %p77 = pneg %p71
    %p78 = scmp.eq.s32.totalorder %s12, 3
    %p79 = por %p77, %p78
    %p80 = scmp.ne.s32.totalorder %s72, %s75
    %p81 = scmp.eq.s32.totalorder %s12, 0
    %p82 = por %p80, %p81
    %p83 = scmp.ne.s32.totalorder %s72, %s75
    %p84 = scmp.eq.s32.totalorder %s17, 3
    %p85 = por %p83, %p84
    %p86 = scmp.ne.s32.totalorder %s75, %s76
    %p87 = scmp.eq.s32.totalorder %s17, 0
    %p88 = por %p86, %p87
    %p89 = scmp.ne.s32.totalorder %s75, %s76
    %p90 = scmp.eq.s32.totalorder %s18, 3
    %p91 = por %p89, %p90
    %p93 = scmp.ne.s32.totalorder %s76, %s92
    %p94 = scmp.eq.s32.totalorder %s18, 0
    %p95 = por %p93, %p94
    %s96 = smul.u32 %s20, 8
    %s97 = sadd.s32 %s96, 8
    %p98 = scmp.lt.s32.totalorder %s97, 15
    %s99 = scalar_select %p98, %s97, 15
    %s100 = smul.u32 %s27, 8
    %s101 = sadd.s32 %s100, 8
    %p102 = scmp.lt.s32.totalorder %s101, 15
    %s103 = scalar_select %p102, %s101, 15
    %s104 = ssub.s32 %s19, %s31
    %s105 = ssub.s32 %s99, %s103
    %s106 = sor.u32 %s104, %s105
    %p107 = scmp.eq.s32.totalorder %s106, 0
    %s109 = sadd.s32 %s108, 1
    %s110 = scalar_select %p107, %s108, %s109
    %p113 = pneg %p107
    %p114 = scmp.eq.s32.totalorder %s12, 3
    %p115 = por %p113, %p114
    %p116 = scmp.ne.s32.totalorder %s108, %s111
    %p117 = scmp.eq.s32.totalorder %s12, 0
    %p118 = por %p116, %p117
    %p119 = scmp.ne.s32.totalorder %s108, %s111
    %p120 = scmp.eq.s32.totalorder %s17, 3
    %p121 = por %p119, %p120
    %p122 = scmp.ne.s32.totalorder %s111, %s112
    %p123 = scmp.eq.s32.totalorder %s17, 0
    %p124 = por %p122, %p123
    %p125 = scmp.ne.s32.totalorder %s111, %s112
    %p126 = scmp.eq.s32.totalorder %s18, 3
    %p127 = por %p125, %p126
    %p129 = scmp.ne.s32.totalorder %s112, %s128
    %p130 = scmp.eq.s32.totalorder %s18, 0
    %p131 = por %p129, %p130
    %s133 = sadd.s32 %s132, 1
    %p136 = scmp.eq.s32.totalorder %s12, 3
    %p137 = scmp.ne.s32.totalorder %s132, %s134
    %p138 = scmp.eq.s32.totalorder %s12, 0
    %p139 = por %p137, %p138
    %p140 = scmp.ne.s32.totalorder %s132, %s134
    %p141 = scmp.eq.s32.totalorder %s17, 3
    %p142 = por %p140, %p141
    %p143 = scmp.ne.s32.totalorder %s134, %s135
    %p144 = scmp.eq.s32.totalorder %s17, 0
    %p145 = por %p143, %p144
    %p146 = scmp.ne.s32.totalorder %s134, %s135
    %p147 = scmp.eq.s32.totalorder %s18, 3
    %p148 = por %p146, %p147
    %p150 = scmp.ne.s32.totalorder %s135, %s149
    %p151 = scmp.eq.s32.totalorder %s18, 0
    %p152 = por %p150, %p151
    %s153 = ssub.s32 %s19, %s31
    %s154 = ssub.s32 %s20, %s27
    %s155 = sor.u32 %s153, %s154
    %p156 = scmp.eq.s32.totalorder %s155, 0
    %s158 = sadd.s32 %s157, 1
    %s159 = scalar_select %p156, %s157, %s158
    %p162 = pneg %p156
    %p163 = scmp.eq.s32.totalorder %s12, 3
    %p164 = por %p162, %p163
    %p165 = scmp.ne.s32.totalorder %s157, %s160
    %p166 = scmp.eq.s32.totalorder %s12, 0
    %p167 = por %p165, %p166
    %p168 = scmp.ne.s32.totalorder %s157, %s160
    %p169 = scmp.eq.s32.totalorder %s17, 3
    %p170 = por %p168, %p169
    %p171 = scmp.ne.s32.totalorder %s160, %s161
    %p172 = scmp.eq.s32.totalorder %s17, 0
    %p173 = por %p171, %p172
    %p174 = scmp.ne.s32.totalorder %s160, %s161
    %p175 = scmp.eq.s32.totalorder %s18, 3
    %p176 = por %p174, %p175
    %p178 = scmp.ne.s32.totalorder %s161, %s177
    %p179 = scmp.eq.s32.totalorder %s18, 0
    %p180 = por %p178, %p179
    %s181 = ssub.s32 %s19, %s31
    %p182 = scmp.eq.s32.totalorder %s181, 0
    %s184 = sadd.s32 %s183, 1
    %s185 = scalar_select %p182, %s183, %s184
    %p188 = pneg %p182
    %p189 = scmp.eq.s32.totalorder %s12, 3
    %p190 = por %p188, %p189
    %p191 = scmp.ne.s32.totalorder %s183, %s186
    %p192 = scmp.eq.s32.totalorder %s12, 0
    %p193 = por %p191, %p192
    %p194 = scmp.ne.s32.totalorder %s183, %s186
    %p195 = scmp.eq.s32.totalorder %s17, 3
    %p196 = por %p194, %p195
    %p197 = scmp.ne.s32.totalorder %s186, %s187
    %p198 = scmp.eq.s32.totalorder %s17, 0
    %p199 = por %p197, %p198
    %p200 = scmp.ne.s32.totalorder %s186, %s187
    %p201 = scmp.eq.s32.totalorder %s18, 3
    %p202 = por %p200, %p201
    %p204 = scmp.ne.s32.totalorder %s187, %s203
    %p205 = scmp.eq.s32.totalorder %s18, 0
    %p206 = por %p204, %p205
    %p207 = scmp.le.s32.totalorder 1, %s12
    %p208 = scmp.lt.s32.totalorder %s12, 5
    %p209 = pnand %p207, %p208
    %p210 = pneg %p209
    // Predicated region
    $region9: #{_lambda_.3} parent=5 // pred_check
      _
    $region10: #{_lambda_.3} parent=5 // pred_check_branch
      %212 = sbr.rel (%p209) target = $region12
    $region11: #{_lambda_.3} parent=5 // pred_region
      %s213 = ssub.s32 %s12, 1
      // Predicated region
      $region13: #{_lambda_.3} parent=11 // pred_check
        %p214 = pneg %p145
      $region14: #{_lambda_.3} parent=11 // pred_check_branch
        %216 = sbr.rel (%p214) target = $region16
      $region15: #{_lambda_.3} parent=11 // pred_region
        _
      $region16: #{_lambda_.3} parent=11 // pred_fallthru
        _
    $region12: #{_lambda_.3} parent=5 // pred_fallthru
      _
    %p217 = scmp.lt.s32.totalorder %s12, 4
    // Predicated region
    $region17: #{_lambda_.3} parent=5 // pred_check
      %p218 = pneg %p217
    $region18: #{_lambda_.3} parent=5 // pred_check_branch
      %220 = sbr.rel (%p218) target = $region20
    $region19: #{_lambda_.3} parent=5 // pred_region
      // Predicated region
      $region21: #{_lambda_.3} parent=19 // pred_check
        %p221 = pneg %p46
      $region22: #{_lambda_.3} parent=19 // pred_check_branch
        %223 = sbr.rel (%p221) target = $region24
      $region23: #{_lambda_.3} parent=19 // pred_region
        %s224 = smul.u32 8, %s20
        %p225 = scmp.lt.s32.totalorder %s19, 1
        %s226 = scalar_select %p225, %s19, 1
        %p227 = scmp.lt.s32.totalorder %s224, 15
        %s228 = scalar_select %p227, %s224, 15
        %s229 = smul.addr %s228, 2
        %s230 = smul.addr %s226, 32
        %s231 = sadd.s32 %s229, %s230
        %s232 = smul.addr %s231, 4
        %s233 = scalar_lea.vmem %s0, %s232
        %s234 = smul.u32 8, %s20
      $region24: #{_lambda_.3} parent=19 // pred_fallthru
        _
      // Predicated region
      $region25: #{_lambda_.3} parent=19 // pred_check
        %p235 = pneg %p82
      $region26: #{_lambda_.3} parent=19 // pred_check_branch
        %237 = sbr.rel (%p235) target = $region28
      $region27: #{_lambda_.3} parent=19 // pred_region
        %s238 = smul.u32 %s20, 8
        %s239 = ssub.s32 %s238, 1
        %p240 = scmp.gt.s32.totalorder %s239, 0
        %s241 = scalar_select %p240, %s239, 0
        %p242 = scmp.lt.s32.totalorder %s19, 1
        %s243 = scalar_select %p242, %s19, 1
        %p244 = scmp.lt.s32.totalorder %s241, 15
        %s245 = scalar_select %p244, %s241, 15
        %s246 = smul.addr %s245, 2
        %s247 = smul.addr %s243, 32
        %s248 = sadd.s32 %s246, %s247
        %s249 = smul.addr %s248, 4
        %s250 = scalar_lea.vmem %s1, %s249
        %s251 = smul.u32 %s20, 8
        %s252 = ssub.s32 %s251, 1
        %p253 = scmp.gt.s32.totalorder %s252, 0
        %s254 = scalar_select %p253, %s252, 0
      $region28: #{_lambda_.3} parent=19 // pred_fallthru
        _
      // Predicated region
      $region29: #{_lambda_.3} parent=19 // pred_check
        %p255 = pneg %p118
      $region30: #{_lambda_.3} parent=19 // pred_check_branch
        %257 = sbr.rel (%p255) target = $region32
      $region31: #{_lambda_.3} parent=19 // pred_region
        %s258 = smul.u32 %s20, 8
        %s259 = sadd.s32 %s258, 8
        %p260 = scmp.lt.s32.totalorder %s259, 15
        %s261 = scalar_select %p260, %s259, 15
        %p262 = scmp.lt.s32.totalorder %s19, 1
        %s263 = scalar_select %p262, %s19, 1
        %p264 = scmp.lt.s32.totalorder %s261, 15
        %s265 = scalar_select %p264, %s261, 15
        %s266 = smul.addr %s265, 2
        %s267 = smul.addr %s263, 32
        %s268 = sadd.s32 %s266, %s267
        %s269 = smul.addr %s268, 4
        %s270 = scalar_lea.vmem %s2, %s269
        %s271 = smul.u32 %s20, 8
        %s272 = sadd.s32 %s271, 8
        %p273 = scmp.lt.s32.totalorder %s272, 15
        %s274 = scalar_select %p273, %s272, 15
      $region32: #{_lambda_.3} parent=19 // pred_fallthru
        _
    $region20: #{_lambda_.3} parent=5 // pred_fallthru
      _
    %p275 = scmp.le.s32.totalorder 1, %s12
    %p276 = scmp.lt.s32.totalorder %s12, 5
    %p277 = pnand %p275, %p276
    %p278 = pneg %p277
    // Predicated region
    $region33: #{_lambda_.3} parent=5 // pred_check
      _
    $region34: #{_lambda_.3} parent=5 // pred_check_branch
      %280 = sbr.rel (%p277) target = $region36
    $region35: #{_lambda_.3} parent=5 // pred_region
      %s281 = ssub.s32 %s12, 1
      %s282 = smul.u32 8, %s22
      %p283 = scmp.lt.s32.totalorder %s21, 1
      %s284 = scalar_select %p283, %s21, 1
      %p285 = scmp.lt.s32.totalorder %s282, 15
      %s286 = scalar_select %p285, %s282, 15
      %s287 = smul.addr %s286, 2
      %s288 = smul.addr %s284, 32
      %s289 = sadd.s32 %s287, %s288
      %s290 = smul.addr %s289, 4
      %s291 = scalar_lea.vmem %s0, %s290
      %p292 = pneg %p52
      %p293 = pneg %p49
      %s294 = smul.u32 %s22, 8
      %s295 = ssub.s32 %s294, 1
      %p296 = scmp.gt.s32.totalorder %s295, 0
      %s297 = scalar_select %p296, %s295, 0
      %p298 = scmp.lt.s32.totalorder %s21, 1
      %s299 = scalar_select %p298, %s21, 1
      %p300 = scmp.lt.s32.totalorder %s297, 15
      %s301 = scalar_select %p300, %s297, 15
      %s302 = smul.addr %s301, 2
      %s303 = smul.addr %s299, 32
      %s304 = sadd.s32 %s302, %s303
      %s305 = smul.addr %s304, 4
      %s306 = scalar_lea.vmem %s1, %s305
      %p307 = pneg %p88
      %p308 = pneg %p85
      %s309 = smul.u32 %s22, 8
      %s310 = sadd.s32 %s309, 8
      %p311 = scmp.lt.s32.totalorder %s310, 15
      %s312 = scalar_select %p311, %s310, 15
      %p313 = scmp.lt.s32.totalorder %s21, 1
      %s314 = scalar_select %p313, %s21, 1
      %p315 = scmp.lt.s32.totalorder %s312, 15
      %s316 = scalar_select %p315, %s312, 15
      %s317 = smul.addr %s316, 2
      %s318 = smul.addr %s314, 32
      %s319 = sadd.s32 %s317, %s318
      %s320 = smul.addr %s319, 4
      %s321 = scalar_lea.vmem %s2, %s320
      %p322 = pneg %p124
      %p323 = pneg %p121
      %p324 = pneg %p145
      %p325 = pneg %p142
      %p326 = pneg %p173
      %p327 = pneg %p170
      %s328 = smul.u32 8, %s22
      %p329 = scmp.lt.s32.totalorder %s21, 1
      %s330 = scalar_select %p329, %s21, 1
      %p331 = scmp.lt.s32.totalorder %s328, 15
      %s332 = scalar_select %p331, %s328, 15
      %s333 = smul.addr %s332, 2
      %s334 = smul.addr %s330, 32
      %s335 = sadd.s32 %s333, %s334
      %s336 = smul.addr %s335, 4
      %s337 = scalar_lea.vmem %s4, %s336
      %p338 = pneg %p199
      %p339 = pneg %p196
      %p340 = scmp.lt.s32.totalorder %s21, 1
      %s341 = scalar_select %p340, %s21, 1
      %s342 = smul.addr %s341, 2
      %s343 = scalar_lea.vmem %s5, %s342
      %s344 = smul.u32 8, %s22
      %p345 = scmp.lt.s32.totalorder %s21, 1
      %s346 = scalar_select %p345, %s21, 1
      %p347 = scmp.lt.s32.totalorder %s344, 15
      %s348 = scalar_select %p347, %s344, 15
      %s349 = smul.addr %s348, 2
      %s350 = smul.addr %s346, 32
      %s351 = sadd.s32 %s349, %s350
      %s352 = smul.addr %s351, 4
      %s353 = scalar_lea.vmem %s0, %s352
      %s354 = smul.u32 8, %s22
      %s355 = smul.u32 %s22, 8
      %s356 = ssub.s32 %s355, 1
      %p357 = scmp.gt.s32.totalorder %s356, 0
      %s358 = scalar_select %p357, %s356, 0
      %p359 = scmp.lt.s32.totalorder %s21, 1
      %s360 = scalar_select %p359, %s21, 1
      %p361 = scmp.lt.s32.totalorder %s358, 15
      %s362 = scalar_select %p361, %s358, 15
      %s363 = smul.addr %s362, 2
      %s364 = smul.addr %s360, 32
      %s365 = sadd.s32 %s363, %s364
      %s366 = smul.addr %s365, 4
      %s367 = scalar_lea.vmem %s1, %s366
      %s368 = smul.u32 %s22, 8
      %s369 = ssub.s32 %s368, 1
      %p370 = scmp.gt.s32.totalorder %s369, 0
      %s371 = scalar_select %p370, %s369, 0
      %s372 = smul.u32 %s22, 8
      %s373 = sadd.s32 %s372, 8
      %p374 = scmp.lt.s32.totalorder %s373, 15
      %s375 = scalar_select %p374, %s373, 15
      %p376 = scmp.lt.s32.totalorder %s21, 1
      %s377 = scalar_select %p376, %s21, 1
      %p378 = scmp.lt.s32.totalorder %s375, 15
      %s379 = scalar_select %p378, %s375, 15
      %s380 = smul.addr %s379, 2
      %s381 = smul.addr %s377, 32
      %s382 = sadd.s32 %s380, %s381
      %s383 = smul.addr %s382, 4
      %s384 = scalar_lea.vmem %s2, %s383
      %s385 = smul.u32 %s22, 8
      %s386 = sadd.s32 %s385, 8
      %p387 = scmp.lt.s32.totalorder %s386, 15
      %s388 = scalar_select %p387, %s386, 15
      %s389 = smul.u32 8, %s22
      %p390 = scmp.lt.s32.totalorder %s21, 1
      %s391 = scalar_select %p390, %s21, 1
      %p392 = scmp.lt.s32.totalorder %s389, 15
      %s393 = scalar_select %p392, %s389, 15
      %s394 = smul.addr %s393, 2
      %s395 = smul.addr %s391, 32
      %s396 = sadd.s32 %s394, %s395
      %s397 = smul.addr %s396, 4
      %s398 = scalar_lea.vmem %s4, %s397
      %s399 = smul.u32 8, %s22
      %p400 = scmp.lt.s32.totalorder %s21, 1
      %s401 = scalar_select %p400, %s21, 1
      %s402 = smul.addr %s401, 2
      %s403 = scalar_lea.vmem %s5, %s402
      %v405 = vld [vmem:[%s353] sm:$0xf]
      %v406 = vld [vmem:[%s353 + $0x4] sm:$0xf]
      %v407 = vld [vmem:[%s353 + $0x8] sm:$0xf]
      %v408 = vld [vmem:[%s353 + $0xc] sm:$0xf]
      %v409 = vld [vmem:[%s353 + $0x10] sm:$0xf]
      %v410 = vld [vmem:[%s353 + $0x14] sm:$0xf]
      %v411 = vld [vmem:[%s353 + $0x18] sm:$0xf]
      %v412 = vld [vmem:[%s353 + $0x1c] sm:$0xf]
      %v413 = vld [vmem:[%s353 + $0x20] sm:$0xf]
      %v414 = vld [vmem:[%s353 + $0x24] sm:$0xf]
      %v415 = vld [vmem:[%s353 + $0x28] sm:$0xf]
      %v416 = vld [vmem:[%s353 + $0x2c] sm:$0xf]
      %v417 = vld [vmem:[%s353 + $0x30] sm:$0xf]
      %v418 = vld [vmem:[%s353 + $0x34] sm:$0xf]
      %v419 = vld [vmem:[%s353 + $0x38] sm:$0xf]
      %v420 = vld [vmem:[%s353 + $0x3c] sm:$0xf]
      %v421 = vunpack.c.l.bf16 %v405
      %v422 = vunpack.c.l.bf16 %v406
      %v423 = vunpack.c.l.bf16 %v407
      %v424 = vunpack.c.l.bf16 %v408
      %v425 = vunpack.c.l.bf16 %v409
      %v426 = vunpack.c.l.bf16 %v410
      %v427 = vunpack.c.l.bf16 %v411
      %v428 = vunpack.c.l.bf16 %v412
      %v429 = vunpack.c.l.bf16 %v413
      %v430 = vunpack.c.l.bf16 %v414
      %v431 = vunpack.c.l.bf16 %v415
      %v432 = vunpack.c.l.bf16 %v416
      %v433 = vunpack.c.l.bf16 %v417
      %v434 = vunpack.c.l.bf16 %v418
      %v435 = vunpack.c.l.bf16 %v419
      %v436 = vunpack.c.l.bf16 %v420
      %p437 = scmp.gt.s32.totalorder %s22, 0
      %v438 = vld [vmem:[%s367] sm:$0xf]
      %v439 = vld [vmem:[%s367 + $0x4] sm:$0xf]
      %v440 = vunpack.c.l.bf16 %v438
      %v441 = vunpack.c.l.bf16 %v439
      %s442 = scalar_select %p437, 1, 0
      %v443 = vstv %s442
      %vm444 = vcmp.eq.s32.totalorder %v443, 1
      %v445 = vsel %vm444, %v440, 0.0
      %v446 = vsel %vm444, %v441, 0.0
      %p447 = scmp.lt.s32.totalorder %s22, 1
      %v448 = vld [vmem:[%s384] sm:$0xf]
      %v449 = vld [vmem:[%s384 + $0x4] sm:$0xf]
      %v450 = vunpack.c.l.bf16 %v448
      %v451 = vunpack.c.l.bf16 %v449
      %s452 = scalar_select %p447, 1, 0
      %v453 = vstv %s452
      %vm454 = vcmp.eq.s32.totalorder %v453, 1
      %v455 = vsel %vm454, %v450, 0.0
      %v456 = vsel %vm454, %v451, 0.0
      %v457 = vpack.c.bf16 %v446, %v445
      %v458 = vpack.c.bf16 %v422, %v421
      %v459 = vpack.c.bf16 %v424, %v423
      %v460 = vpack.c.bf16 %v426, %v425
      %v461 = vpack.c.bf16 %v428, %v427
      %v462 = vpack.c.bf16 %v430, %v429
      %v463 = vpack.c.bf16 %v432, %v431
      %v464 = vpack.c.bf16 %v434, %v433
      %v465 = vpack.c.bf16 %v436, %v435
      %v466 = vpack.c.bf16 %v456, %v455
      %v468 = vshrl.u32 %v457, 16
      %v470 = vrot.slane %v468, 7
      %v471 = vshll.u32 %v457, 16
      %v473 = vor.u32 %v470, %v471
      %v475 = vshrl.u32 %v458, 16
      %v477 = vrot.slane %v475, 7
      %v478 = vshll.u32 %v458, 16
      %v480 = vor.u32 %v477, %v478
      %v482 = vshrl.u32 %v459, 16
      %v484 = vrot.slane %v482, 7
      %v485 = vshll.u32 %v459, 16
      %v487 = vor.u32 %v484, %v485
      %v489 = vshrl.u32 %v460, 16
      %v491 = vrot.slane %v489, 7
      %v492 = vshll.u32 %v460, 16
      %v494 = vor.u32 %v491, %v492
      %v496 = vshrl.u32 %v461, 16
      %v498 = vrot.slane %v496, 7
      %v499 = vshll.u32 %v461, 16
      %v501 = vor.u32 %v498, %v499
      %v503 = vshrl.u32 %v462, 16
      %v505 = vrot.slane %v503, 7
      %v506 = vshll.u32 %v462, 16
      %v508 = vor.u32 %v505, %v506
      %v510 = vshrl.u32 %v463, 16
      %v512 = vrot.slane %v510, 7
      %v513 = vshll.u32 %v463, 16
      %v515 = vor.u32 %v512, %v513
      %v517 = vshrl.u32 %v464, 16
      %v519 = vrot.slane %v517, 7
      %v520 = vshll.u32 %v464, 16
      %v522 = vor.u32 %v519, %v520
      %v524 = vshrl.u32 %v465, 16
      %v526 = vrot.slane %v524, 7
      %v527 = vshll.u32 %v465, 16
      %v529 = vor.u32 %v526, %v527
      %v531 = vshrl.u32 %v466, 16
      %v533 = vrot.slane %v531, 7
      %v534 = vshll.u32 %v466, 16
      %v536 = vor.u32 %v533, %v534
      %vm547 = vcmask 1040384
      %vm548 = vsmask.f32 256
      %vm549 = vmand %vm547, %vm548
      %v550 = vsel %vm549, 0, %v473
      %v551 = vsel %vm549, 0, %v480
      %v552 = vsel %vm549, 0, %v487
      %v553 = vsel %vm549, 0, %v494
      %v554 = vsel %vm549, 0, %v501
      %v555 = vsel %vm549, 0, %v508
      %v556 = vsel %vm549, 0, %v515
      %v557 = vsel %vm549, 0, %v522
      %v558 = vsel %vm549, 0, %v529
      %v559 = vsel %vm549, 0, %v536
      %v560 = vrot.slane %v471, 1
      %v561 = vor.u32 %v468, %v560
      %v562 = vrot.slane %v478, 1
      %v563 = vor.u32 %v475, %v562
      %v564 = vrot.slane %v485, 1
      %v565 = vor.u32 %v482, %v564
      %v566 = vrot.slane %v492, 1
      %v567 = vor.u32 %v489, %v566
      %v568 = vrot.slane %v499, 1
      %v569 = vor.u32 %v496, %v568
      %v570 = vrot.slane %v506, 1
      %v571 = vor.u32 %v503, %v570
      %v572 = vrot.slane %v513, 1
      %v573 = vor.u32 %v510, %v572
      %v574 = vrot.slane %v520, 1
      %v575 = vor.u32 %v517, %v574
      %v576 = vrot.slane %v527, 1
      %v577 = vor.u32 %v524, %v576
      %v578 = vrot.slane %v534, 1
      %v579 = vor.u32 %v531, %v578
      %vm590 = vcmask 1047552
      %vm591 = vsmask.f32 7424
      %vm592 = vmand %vm590, %vm591
      %v593 = vsel %vm592, %v561, 0
      %v594 = vsel %vm592, %v563, 0
      %v595 = vsel %vm592, %v565, 0
      %v596 = vsel %vm592, %v567, 0
      %v597 = vsel %vm592, %v569, 0
      %v598 = vsel %vm592, %v571, 0
      %v599 = vsel %vm592, %v573, 0
      %v600 = vsel %vm592, %v575, 0
      %v601 = vsel %vm592, %v577, 0
      %v602 = vsel %vm592, %v579, 0
      %613 = vrot.lane.b32.xlu0 %v457, 4
      %v614 = vpop.permute.xlu0 %613
      %615 = vrot.lane.b32.xlu0 %v458, 4
      %v616 = vpop.permute.xlu0 %615
      %617 = vrot.lane.b32.xlu0 %v459, 4
      %v618 = vpop.permute.xlu0 %617
      %619 = vrot.lane.b32.xlu0 %v460, 4
      %v620 = vpop.permute.xlu0 %619
      %621 = vrot.lane.b32.xlu0 %v461, 4
      %v622 = vpop.permute.xlu0 %621
      %623 = vrot.lane.b32.xlu0 %v462, 4
      %v624 = vpop.permute.xlu0 %623
      %625 = vrot.lane.b32.xlu0 %v463, 4
      %v626 = vpop.permute.xlu0 %625
      %627 = vrot.lane.b32.xlu0 %v464, 4
      %v628 = vpop.permute.xlu0 %627
      %629 = vrot.lane.b32.xlu0 %v465, 4
      %v630 = vpop.permute.xlu0 %629
      %631 = vrot.lane.b32.xlu0 %v466, 4
      %v632 = vpop.permute.xlu0 %631
      %643 = vrot.lane.b32.xlu0 %v593, 8
      %v644 = vpop.permute.xlu0 %643
      %645 = vrot.lane.b32.xlu0 %v594, 8
      %v646 = vpop.permute.xlu0 %645
      %647 = vrot.lane.b32.xlu0 %v595, 8
      %v648 = vpop.permute.xlu0 %647
      %649 = vrot.lane.b32.xlu0 %v596, 8
      %v650 = vpop.permute.xlu0 %649
      %651 = vrot.lane.b32.xlu0 %v597, 8
      %v652 = vpop.permute.xlu0 %651
      %653 = vrot.lane.b32.xlu0 %v598, 8
      %v654 = vpop.permute.xlu0 %653
      %655 = vrot.lane.b32.xlu0 %v599, 8
      %v656 = vpop.permute.xlu0 %655
      %657 = vrot.lane.b32.xlu0 %v600, 8
      %v658 = vpop.permute.xlu0 %657
      %659 = vrot.lane.b32.xlu0 %v601, 8
      %v660 = vpop.permute.xlu0 %659
      %661 = vrot.lane.b32.xlu0 %v602, 8
      %v662 = vpop.permute.xlu0 %661
      %vm663 = vcmask 31744
      %v666 = vsel %vm663, %v550, %v614
      %v669 = vsel %vm663, %v551, %v616
      %v672 = vsel %vm663, %v552, %v618
      %v675 = vsel %vm663, %v553, %v620
      %v678 = vsel %vm663, %v554, %v622
      %v681 = vsel %vm663, %v555, %v624
      %v684 = vsel %vm663, %v556, %v626
      %v687 = vsel %vm663, %v557, %v628
      %v690 = vsel %vm663, %v558, %v630
      %v693 = vsel %vm663, %v559, %v632
      %vm694 = vcmask 64512
      %v696 = vsel %vm694, %v666, %v644
      %v698 = vsel %vm694, %v669, %v646
      %v700 = vsel %vm694, %v672, %v648
      %v702 = vsel %vm694, %v675, %v650
      %v704 = vsel %vm694, %v678, %v652
      %v706 = vsel %vm694, %v681, %v654
      %v708 = vsel %vm694, %v684, %v656
      %v710 = vsel %vm694, %v687, %v658
      %v712 = vsel %vm694, %v690, %v660
      %v714 = vsel %vm694, %v693, %v662
      %v715 = vld [vmem:[%s3] sm:$0xf]
      %v716 = vld [vmem:[%s3 + $0x4] sm:$0x3]
      %s717 = scalar_lea.vmem %s3, 8
      %v718 = vld [vmem:[%s717] sm:$0xf]
      %v719 = vld [vmem:[%s717 + $0x4] sm:$0x3]
      %v722 = vunpack.c.l.b16 %v718
      %v723 = vunpack.c.l.b16 %v719
      %v724 = vpack.c.b16 %v723, %v722
      %vm725 = vcmask 97280
      %v726 = vsel %vm725, %v698, 0
      %v728 = vsel %vm725, %v700, 0
      %v730 = vsel %vm725, %v702, 0
      %v732 = vsel %vm725, %v704, 0
      %v734 = vsel %vm725, %v706, 0
      %v736 = vsel %vm725, %v708, 0
      %v738 = vsel %vm725, %v710, 0
      %v740 = vsel %vm725, %v712, 0
      %vm742 = vcmask 1045504
      %v744 = vsel %vm742, %v724, 0
      %746 = vmatprep.subr.bf16.mxu0 0
      %747 = vmatpush1.bf16.msra.mxu0 %v744
      %748 = vmatprep.subr.bf16.mxu0 0
      %749 = vmatpush1.bf16.msra.mxu0 0
      %750 = vmatprep.subr.bf16.mxu0 0
      %751 = vmatpush1.bf16.msra.mxu0 0
      %752 = vmatprep.subr.bf16.mxu0 0
      %753 = vmatpush1.bf16.msra.mxu0 0
      %754 = vmatprep.subr.bf16.mxu0 0
      %755 = vmatpush1.bf16.msra.mxu0 0
      %756 = vmatprep.subr.bf16.mxu0 0
      %757 = vmatpush1.bf16.msra.mxu0 0
      %758 = vmatprep.subr.bf16.mxu0 0
      %759 = vmatpush1.bf16.msra.mxu0 0
      %760 = vmatprep.subr.bf16.mxu0 0
      %761 = vmatpush1.bf16.msra.mxu0 0
      %762 = vmatprep.subr.bf16.mxu0 0
      %763 = vmatpush1.bf16.msra.mxu0 0
      %764 = vmatprep.subr.bf16.mxu0 0
      %765 = vmatpush1.bf16.msra.mxu0 0
      %766 = vmatprep.subr.bf16.mxu0 0
      %767 = vmatpush1.bf16.msra.mxu0 0
      %768 = vmatprep.subr.bf16.mxu0 0
      %769 = vmatpush1.bf16.msra.mxu0 0
      %770 = vmatprep.subr.bf16.mxu0 0
      %771 = vmatpush1.bf16.msra.mxu0 0
      %772 = vmatprep.subr.bf16.mxu0 0
      %773 = vmatpush1.bf16.msra.mxu0 0
      %774 = vmatprep.subr.bf16.mxu0 0
      %775 = vmatpush1.bf16.msra.mxu0 0
      %776 = vmatprep.subr.bf16.mxu0 0
      %777 = vmatpush1.bf16.msra.mxu0 0
      %778 = vmatprep.mubr.bf16.mxu0 0
      %779 = vmatmul.mubr.bf16.gmra.mrb[0].mxu0 %v726
      %v780 = vpop.f32.mrb[0].mxu0
      %v781 = vadd.f32 0.0, %v780
      %v782 = vpop.f32.mrb[0].mxu0
      %v783 = vpop.f32.mrb[0].mxu0
      %v784 = vadd.f32 0.0, %v783
      %v785 = vpop.f32.mrb[0].mxu0
      %786 = vmatprep.mubr.bf16.mxu0 0
      %787 = vmatmul.mubr.bf16.gmra.mrb[0].mxu0 %v728
      %v788 = vpop.f32.mrb[0].mxu0
      %v789 = vadd.f32 0.0, %v788
      %v790 = vpop.f32.mrb[0].mxu0
      %v791 = vpop.f32.mrb[0].mxu0
      %v792 = vadd.f32 0.0, %v791
      %v793 = vpop.f32.mrb[0].mxu0
      %794 = vmatprep.mubr.bf16.mxu0 0
      %795 = vmatmul.mubr.bf16.gmra.mrb[0].mxu0 %v730
      %v796 = vpop.f32.mrb[0].mxu0
      %v797 = vadd.f32 0.0, %v796
      %v798 = vpop.f32.mrb[0].mxu0
      %v799 = vpop.f32.mrb[0].mxu0
      %v800 = vadd.f32 0.0, %v799
      %v801 = vpop.f32.mrb[0].mxu0
      %802 = vmatprep.mubr.bf16.mxu0 0
      %803 = vmatmul.mubr.bf16.gmra.mrb[0].mxu0 %v732
      %v804 = vpop.f32.mrb[0].mxu0
      %v805 = vadd.f32 0.0, %v804
      %v806 = vpop.f32.mrb[0].mxu0
      %v807 = vpop.f32.mrb[0].mxu0
      %v808 = vadd.f32 0.0, %v807
      %v809 = vpop.f32.mrb[0].mxu0
      %810 = vmatprep.mubr.bf16.mxu0 0
      %811 = vmatmul.mubr.bf16.gmra.mrb[0].mxu0 %v734
      %v812 = vpop.f32.mrb[0].mxu0
      %v813 = vadd.f32 0.0, %v812
      %v814 = vpop.f32.mrb[0].mxu0
      %v815 = vpop.f32.mrb[0].mxu0
      %v816 = vadd.f32 0.0, %v815
      %v817 = vpop.f32.mrb[0].mxu0
      %818 = vmatprep.mubr.bf16.mxu0 0
      %819 = vmatmul.mubr.bf16.gmra.mrb[0].mxu0 %v736
      %v820 = vpop.f32.mrb[0].mxu0
      %v821 = vadd.f32 0.0, %v820
      %v822 = vpop.f32.mrb[0].mxu0
      %v823 = vpop.f32.mrb[0].mxu0
      %v824 = vadd.f32 0.0, %v823
      %v825 = vpop.f32.mrb[0].mxu0
      %826 = vmatprep.mubr.bf16.mxu0 0
      %827 = vmatmul.mubr.bf16.gmra.mrb[0].mxu0 %v738
      %v828 = vpop.f32.mrb[0].mxu0
      %v829 = vadd.f32 0.0, %v828
      %v830 = vpop.f32.mrb[0].mxu0
      %v831 = vpop.f32.mrb[0].mxu0
      %v832 = vadd.f32 0.0, %v831
      %v833 = vpop.f32.mrb[0].mxu0
      %834 = vmatprep.mubr.bf16.mxu0 0
      %835 = vmatmul.mubr.bf16.gmra.mrb[0].mxu0 %v740
      %v836 = vpop.f32.mrb[0].mxu0
      %v837 = vadd.f32 0.0, %v836
      %v838 = vpop.f32.mrb[0].mxu0
      %v839 = vpop.f32.mrb[0].mxu0
      %v840 = vadd.f32 0.0, %v839
      %v841 = vpop.f32.mrb[0].mxu0
      %842 = vdwg.mxu0
      %v845 = vunpack.c.l.b16 %v715
      %v846 = vunpack.c.l.b16 %v716
      %v847 = vpack.c.b16 %v846, %v845
      %v848 = vsel %vm725, %v696, 0
      %v851 = vsel %vm742, %v847, 0
      %853 = vmatprep.subr.bf16.mxu0 0
      %854 = vmatpush1.bf16.msra.mxu0 %v851
      %855 = vmatprep.subr.bf16.mxu0 0
      %856 = vmatpush1.bf16.msra.mxu0 0
      %857 = vmatprep.subr.bf16.mxu0 0
      %858 = vmatpush1.bf16.msra.mxu0 0
      %859 = vmatprep.subr.bf16.mxu0 0
      %860 = vmatpush1.bf16.msra.mxu0 0
      %861 = vmatprep.subr.bf16.mxu0 0
      %862 = vmatpush1.bf16.msra.mxu0 0
      %863 = vmatprep.subr.bf16.mxu0 0
      %864 = vmatpush1.bf16.msra.mxu0 0
      %865 = vmatprep.subr.bf16.mxu0 0
      %866 = vmatpush1.bf16.msra.mxu0 0
      %867 = vmatprep.subr.bf16.mxu0 0
      %868 = vmatpush1.bf16.msra.mxu0 0
      %869 = vmatprep.subr.bf16.mxu0 0
      %870 = vmatpush1.bf16.msra.mxu0 0
      %871 = vmatprep.subr.bf16.mxu0 0
      %872 = vmatpush1.bf16.msra.mxu0 0
      %873 = vmatprep.subr.bf16.mxu0 0
      %874 = vmatpush1.bf16.msra.mxu0 0
      %875 = vmatprep.subr.bf16.mxu0 0
      %876 = vmatpush1.bf16.msra.mxu0 0
      %877 = vmatprep.subr.bf16.mxu0 0
      %878 = vmatpush1.bf16.msra.mxu0 0
      %879 = vmatprep.subr.bf16.mxu0 0
      %880 = vmatpush1.bf16.msra.mxu0 0
      %881 = vmatprep.subr.bf16.mxu0 0
      %882 = vmatpush1.bf16.msra.mxu0 0
      %883 = vmatprep.subr.bf16.mxu0 0
      %884 = vmatpush1.bf16.msra.mxu0 0
      %885 = vmatprep.mubr.bf16.mxu0 0
      %886 = vmatmul.mubr.bf16.gmra.mrb[0].mxu0 %v848
      %v887 = vpop.f32.mrb[0].mxu0
      %v888 = vadd.f32 %v781, %v887
      %v889 = vpop.f32.mrb[0].mxu0
      %v890 = vpop.f32.mrb[0].mxu0
      %v891 = vadd.f32 %v784, %v890
      %v892 = vpop.f32.mrb[0].mxu0
      %893 = vmatprep.mubr.bf16.mxu0 0
      %894 = vmatmul.mubr.bf16.gmra.mrb[0].mxu0 %v726
      %v895 = vpop.f32.mrb[0].mxu0
      %v896 = vadd.f32 %v789, %v895
      %v897 = vpop.f32.mrb[0].mxu0
      %v898 = vpop.f32.mrb[0].mxu0
      %v899 = vadd.f32 %v792, %v898
      %v900 = vpop.f32.mrb[0].mxu0
      %901 = vmatprep.mubr.bf16.mxu0 0
      %902 = vmatmul.mubr.bf16.gmra.mrb[0].mxu0 %v728
      %v903 = vpop.f32.mrb[0].mxu0
      %v904 = vadd.f32 %v797, %v903
      %v905 = vpop.f32.mrb[0].mxu0
      %v906 = vpop.f32.mrb[0].mxu0
      %v907 = vadd.f32 %v800, %v906
      %v908 = vpop.f32.mrb[0].mxu0
      %909 = vmatprep.mubr.bf16.mxu0 0
      %910 = vmatmul.mubr.bf16.gmra.mrb[0].mxu0 %v730
      %v911 = vpop.f32.mrb[0].mxu0
      %v912 = vadd.f32 %v805, %v911
      %v913 = vpop.f32.mrb[0].mxu0
      %v914 = vpop.f32.mrb[0].mxu0
      %v915 = vadd.f32 %v808, %v914
      %v916 = vpop.f32.mrb[0].mxu0
      %917 = vmatprep.mubr.bf16.mxu0 0
      %918 = vmatmul.mubr.bf16.gmra.mrb[0].mxu0 %v732
      %v919 = vpop.f32.mrb[0].mxu0
      %v920 = vadd.f32 %v813, %v919
      %v921 = vpop.f32.mrb[0].mxu0
      %v922 = vpop.f32.mrb[0].mxu0
      %v923 = vadd.f32 %v816, %v922
      %v924 = vpop.f32.mrb[0].mxu0
      %925 = vmatprep.mubr.bf16.mxu0 0
      %926 = vmatmul.mubr.bf16.gmra.mrb[0].mxu0 %v734
      %v927 = vpop.f32.mrb[0].mxu0
      %v928 = vadd.f32 %v821, %v927
      %v929 = vpop.f32.mrb[0].mxu0
      %v930 = vpop.f32.mrb[0].mxu0
      %v931 = vadd.f32 %v824, %v930
      %v932 = vpop.f32.mrb[0].mxu0
      %933 = vmatprep.mubr.bf16.mxu0 0
      %934 = vmatmul.mubr.bf16.gmra.mrb[0].mxu0 %v736
      %v935 = vpop.f32.mrb[0].mxu0
      %v936 = vadd.f32 %v829, %v935
      %v937 = vpop.f32.mrb[0].mxu0
      %v938 = vpop.f32.mrb[0].mxu0
      %v939 = vadd.f32 %v832, %v938
      %v940 = vpop.f32.mrb[0].mxu0
      %941 = vmatprep.mubr.bf16.mxu0 0
      %942 = vmatmul.mubr.bf16.gmra.mrb[0].mxu0 %v738
      %v943 = vpop.f32.mrb[0].mxu0
      %v944 = vadd.f32 %v837, %v943
      %v945 = vpop.f32.mrb[0].mxu0
      %v946 = vpop.f32.mrb[0].mxu0
      %v947 = vadd.f32 %v840, %v946
      %v948 = vpop.f32.mrb[0].mxu0
      %949 = vdwg.mxu0
      %s950 = scalar_lea.vmem %s3, 16
      %v951 = vld [vmem:[%s950] sm:$0xf]
      %v952 = vld [vmem:[%s950 + $0x4] sm:$0x3]
      %v955 = vunpack.c.l.b16 %v951
      %v956 = vunpack.c.l.b16 %v952
      %v957 = vpack.c.b16 %v956, %v955
      %v958 = vsel %vm725, %v714, 0
      %v961 = vsel %vm742, %v957, 0
      %963 = vmatprep.subr.bf16.mxu0 0
      %964 = vmatpush1.bf16.msra.mxu0 %v961
      %965 = vmatprep.subr.bf16.mxu0 0
      %966 = vmatpush1.bf16.msra.mxu0 0
      %967 = vmatprep.subr.bf16.mxu0 0
      %968 = vmatpush1.bf16.msra.mxu0 0
      %969 = vmatprep.subr.bf16.mxu0 0
      %970 = vmatpush1.bf16.msra.mxu0 0
      %971 = vmatprep.subr.bf16.mxu0 0
      %972 = vmatpush1.bf16.msra.mxu0 0
      %973 = vmatprep.subr.bf16.mxu0 0
      %974 = vmatpush1.bf16.msra.mxu0 0
      %975 = vmatprep.subr.bf16.mxu0 0
      %976 = vmatpush1.bf16.msra.mxu0 0
      %977 = vmatprep.subr.bf16.mxu0 0
      %978 = vmatpush1.bf16.msra.mxu0 0
      %979 = vmatprep.subr.bf16.mxu0 0
      %980 = vmatpush1.bf16.msra.mxu0 0
      %981 = vmatprep.subr.bf16.mxu0 0
      %982 = vmatpush1.bf16.msra.mxu0 0
      %983 = vmatprep.subr.bf16.mxu0 0
      %984 = vmatpush1.bf16.msra.mxu0 0
      %985 = vmatprep.subr.bf16.mxu0 0
      %986 = vmatpush1.bf16.msra.mxu0 0
      %987 = vmatprep.subr.bf16.mxu0 0
      %988 = vmatpush1.bf16.msra.mxu0 0
      %989 = vmatprep.subr.bf16.mxu0 0
      %990 = vmatpush1.bf16.msra.mxu0 0
      %991 = vmatprep.subr.bf16.mxu0 0
      %992 = vmatpush1.bf16.msra.mxu0 0
      %993 = vmatprep.subr.bf16.mxu0 0
      %994 = vmatpush1.bf16.msra.mxu0 0
      %995 = vmatprep.mubr.bf16.mxu0 0
      %996 = vmatmul.mubr.bf16.gmra.mrb[0].mxu0 %v728
      %v997 = vpop.f32.mrb[0].mxu0
      %v998 = vadd.f32 0.0, %v997
      %v999 = vpop.f32.mrb[0].mxu0
      %v1000 = vpop.f32.mrb[0].mxu0
      %v1001 = vadd.f32 0.0, %v1000
      %v1002 = vpop.f32.mrb[0].mxu0
      %1003 = vmatprep.mubr.bf16.mxu0 0
      %1004 = vmatmul.mubr.bf16.gmra.mrb[0].mxu0 %v730
      %v1005 = vpop.f32.mrb[0].mxu0
      %v1006 = vadd.f32 0.0, %v1005
      %v1007 = vpop.f32.mrb[0].mxu0
      %v1008 = vpop.f32.mrb[0].mxu0
      %v1009 = vadd.f32 0.0, %v1008
      %v1010 = vpop.f32.mrb[0].mxu0
      %1011 = vmatprep.mubr.bf16.mxu0 0
      %1012 = vmatmul.mubr.bf16.gmra.mrb[0].mxu0 %v732
      %v1013 = vpop.f32.mrb[0].mxu0
      %v1014 = vadd.f32 0.0, %v1013
      %v1015 = vpop.f32.mrb[0].mxu0
      %v1016 = vpop.f32.mrb[0].mxu0
      %v1017 = vadd.f32 0.0, %v1016
      %v1018 = vpop.f32.mrb[0].mxu0
      %1019 = vmatprep.mubr.bf16.mxu0 0
      %1020 = vmatmul.mubr.bf16.gmra.mrb[0].mxu0 %v734
      %v1021 = vpop.f32.mrb[0].mxu0
      %v1022 = vadd.f32 0.0, %v1021
      %v1023 = vpop.f32.mrb[0].mxu0
      %v1024 = vpop.f32.mrb[0].mxu0
      %v1025 = vadd.f32 0.0, %v1024
      %v1026 = vpop.f32.mrb[0].mxu0
      %1027 = vmatprep.mubr.bf16.mxu0 0
      %1028 = vmatmul.mubr.bf16.gmra.mrb[0].mxu0 %v736
      %v1029 = vpop.f32.mrb[0].mxu0
      %v1030 = vadd.f32 0.0, %v1029
      %v1031 = vpop.f32.mrb[0].mxu0
      %v1032 = vpop.f32.mrb[0].mxu0
      %v1033 = vadd.f32 0.0, %v1032
      %v1034 = vpop.f32.mrb[0].mxu0
      %1035 = vmatprep.mubr.bf16.mxu0 0
      %1036 = vmatmul.mubr.bf16.gmra.mrb[0].mxu0 %v738
      %v1037 = vpop.f32.mrb[0].mxu0
      %v1038 = vadd.f32 0.0, %v1037
      %v1039 = vpop.f32.mrb[0].mxu0
      %v1040 = vpop.f32.mrb[0].mxu0
      %v1041 = vadd.f32 0.0, %v1040
      %v1042 = vpop.f32.mrb[0].mxu0
      %1043 = vmatprep.mubr.bf16.mxu0 0
      %1044 = vmatmul.mubr.bf16.gmra.mrb[0].mxu0 %v740
      %v1045 = vpop.f32.mrb[0].mxu0
      %v1046 = vadd.f32 0.0, %v1045
      %v1047 = vpop.f32.mrb[0].mxu0
      %v1048 = vpop.f32.mrb[0].mxu0
      %v1049 = vadd.f32 0.0, %v1048
      %v1050 = vpop.f32.mrb[0].mxu0
      %1051 = vmatprep.mubr.bf16.mxu0 0
      %1052 = vmatmul.mubr.bf16.gmra.mrb[0].mxu0 %v958
      %v1053 = vpop.f32.mrb[0].mxu0
      %v1054 = vadd.f32 0.0, %v1053
      %v1055 = vpop.f32.mrb[0].mxu0
      %v1056 = vpop.f32.mrb[0].mxu0
      %v1057 = vadd.f32 0.0, %v1056
      %v1058 = vpop.f32.mrb[0].mxu0
      %1059 = vdwg.mxu0
      %v1060 = vadd.f32 %v888, %v998
      %v1061 = vadd.f32 %v891, %v1001
      %v1062 = vadd.f32 %v896, %v1006
      %v1063 = vadd.f32 %v899, %v1009
      %v1064 = vadd.f32 %v904, %v1014
      %v1065 = vadd.f32 %v907, %v1017
      %v1066 = vadd.f32 %v912, %v1022
      %v1067 = vadd.f32 %v915, %v1025
      %v1068 = vadd.f32 %v920, %v1030
      %v1069 = vadd.f32 %v923, %v1033
      %v1070 = vadd.f32 %v928, %v1038
      %v1071 = vadd.f32 %v931, %v1041
      %v1072 = vadd.f32 %v936, %v1046
      %v1073 = vadd.f32 %v939, %v1049
      %v1074 = vadd.f32 %v944, %v1054
      %v1075 = vadd.f32 %v947, %v1057
      %v1076 = vpack.c.bf16 %v1061, %v1060
      %v1077 = vpack.c.bf16 %v1063, %v1062
      %v1078 = vpack.c.bf16 %v1065, %v1064
      %v1079 = vpack.c.bf16 %v1067, %v1066
      %v1080 = vpack.c.bf16 %v1069, %v1068
      %v1081 = vpack.c.bf16 %v1071, %v1070
      %v1082 = vpack.c.bf16 %v1073, %v1072
      %v1083 = vpack.c.bf16 %v1075, %v1074
      %v1092 = vunpack.c.l.b16 %v1076
      %v1093 = vunpack.c.h.b16 %v1076
      %v1094 = vunpack.c.l.b16 %v1077
      %v1095 = vunpack.c.h.b16 %v1077
      %v1096 = vunpack.c.l.b16 %v1078
      %v1097 = vunpack.c.h.b16 %v1078
      %v1098 = vunpack.c.l.b16 %v1079
      %v1099 = vunpack.c.h.b16 %v1079
      %v1100 = vunpack.c.l.b16 %v1080
      %v1101 = vunpack.c.h.b16 %v1080
      %v1102 = vunpack.c.l.b16 %v1081
      %v1103 = vunpack.c.h.b16 %v1081
      %v1104 = vunpack.c.l.b16 %v1082
      %v1105 = vunpack.c.h.b16 %v1082
      %v1106 = vunpack.c.l.b16 %v1083
      %v1107 = vunpack.c.h.b16 %v1083
      %v1108 = vpack.c.b16 %v1092, %v1092
      %v1109 = vpack.c.b16 %v1093, %v1093
      %v1110 = vpack.c.b16 %v1094, %v1094
      %v1111 = vpack.c.b16 %v1095, %v1095
      %v1112 = vpack.c.b16 %v1096, %v1096
      %v1113 = vpack.c.b16 %v1097, %v1097
      %v1114 = vpack.c.b16 %v1098, %v1098
      %v1115 = vpack.c.b16 %v1099, %v1099
      %v1116 = vpack.c.b16 %v1100, %v1100
      %v1117 = vpack.c.b16 %v1101, %v1101
      %v1118 = vpack.c.b16 %v1102, %v1102
      %v1119 = vpack.c.b16 %v1103, %v1103
      %v1120 = vpack.c.b16 %v1104, %v1104
      %v1121 = vpack.c.b16 %v1105, %v1105
      %v1122 = vpack.c.b16 %v1106, %v1106
      %v1123 = vpack.c.b16 %v1107, %v1107
      %vm1140 = vcmask 60416
      %1141 = vst.msk [vmem:[%s398] sm:$0xf] %vm1140, %v1108
      %1142 = vst.msk [vmem:[%s398 + $0x4] sm:$0xf] %vm1140, %v1109
      %1143 = vst.msk [vmem:[%s398 + $0x8] sm:$0xf] %vm1140, %v1110
      %1144 = vst.msk [vmem:[%s398 + $0xc] sm:$0xf] %vm1140, %v1111
      %1145 = vst.msk [vmem:[%s398 + $0x10] sm:$0xf] %vm1140, %v1112
      %1146 = vst.msk [vmem:[%s398 + $0x14] sm:$0xf] %vm1140, %v1113
      %1147 = vst.msk [vmem:[%s398 + $0x18] sm:$0xf] %vm1140, %v1114
      %1148 = vst.msk [vmem:[%s398 + $0x1c] sm:$0xf] %vm1140, %v1115
      %1149 = vst.msk [vmem:[%s398 + $0x20] sm:$0xf] %vm1140, %v1116
      %1150 = vst.msk [vmem:[%s398 + $0x24] sm:$0xf] %vm1140, %v1117
      %1151 = vst.msk [vmem:[%s398 + $0x28] sm:$0xf] %vm1140, %v1118
      %1152 = vst.msk [vmem:[%s398 + $0x2c] sm:$0xf] %vm1140, %v1119
      %1153 = vst.msk [vmem:[%s398 + $0x30] sm:$0xf] %vm1140, %v1120
      %1154 = vst.msk [vmem:[%s398 + $0x34] sm:$0xf] %vm1140, %v1121
      %1155 = vst.msk [vmem:[%s398 + $0x38] sm:$0xf] %vm1140, %v1122
      %1156 = vst.msk [vmem:[%s398 + $0x3c] sm:$0xf] %vm1140, %v1123
      %p1157 = scmp.eq.s32.totalorder %s22, 0
      // Predicated region
      $region37: #{_lambda_.3} parent=35 // pred_check
        %p1158 = pneg %p1157
      $region38: #{_lambda_.3} parent=35 // pred_check_branch
        %1160 = sbr.rel (%p1158) target = $region40
      $region39: #{_lambda_.3} parent=35 // pred_region
        %vm1161 = vcmask 58368
        %1162 = vst.msk [vmem:[%s403] sm:$0x3] %vm1161, 0.0
      $region40: #{_lambda_.3} parent=35 // pred_fallthru
        _
      %v1163 = vsel %vm694, %v1060, 0.0
      %v1164 = vsel %vm694, %v1061, 0.0
      %v1165 = vadd.f32 %v1163, %v1164
      %v1166 = vsel %vm694, %v1062, 0.0
      %v1167 = vadd.f32 %v1165, %v1166
      %v1168 = vsel %vm694, %v1063, 0.0
      %v1169 = vadd.f32 %v1167, %v1168
      %v1170 = vsel %vm694, %v1064, 0.0
      %v1171 = vadd.f32 %v1169, %v1170
      %v1172 = vsel %vm694, %v1065, 0.0
      %v1173 = vadd.f32 %v1171, %v1172
      %v1174 = vsel %vm694, %v1066, 0.0
      %v1175 = vadd.f32 %v1173, %v1174
      %v1176 = vsel %vm694, %v1067, 0.0
      %v1177 = vadd.f32 %v1175, %v1176
      %v1178 = vsel %vm694, %v1068, 0.0
      %v1179 = vadd.f32 %v1177, %v1178
      %v1180 = vsel %vm694, %v1069, 0.0
      %v1181 = vadd.f32 %v1179, %v1180
      %v1182 = vsel %vm694, %v1070, 0.0
      %v1183 = vadd.f32 %v1181, %v1182
      %v1184 = vsel %vm694, %v1071, 0.0
      %v1185 = vadd.f32 %v1183, %v1184
      %v1186 = vsel %vm694, %v1072, 0.0
      %v1187 = vadd.f32 %v1185, %v1186
      %v1188 = vsel %vm694, %v1073, 0.0
      %v1189 = vadd.f32 %v1187, %v1188
      %v1190 = vsel %vm694, %v1074, 0.0
      %v1191 = vadd.f32 %v1189, %v1190
      %v1192 = vsel %vm694, %v1075, 0.0
      %v1193 = vadd.f32 %v1191, %v1192
      %v1194 = vrot.slane %v1193, 4
      %v1195 = vadd.f32 %v1193, %v1194
      %v1196 = vrot.slane %v1195, 2
      %v1197 = vadd.f32 %v1195, %v1196
      %v1198 = vrot.slane %v1197, 1
      %v1199 = vadd.f32 %v1197, %v1198
      %v1200 = vmul.f32 %v1060, %v1060
      %v1201 = vmul.f32 %v1061, %v1061
      %v1202 = vmul.f32 %v1062, %v1062
      %v1203 = vmul.f32 %v1063, %v1063
      %v1204 = vmul.f32 %v1064, %v1064
      %v1205 = vmul.f32 %v1065, %v1065
      %v1206 = vmul.f32 %v1066, %v1066
      %v1207 = vmul.f32 %v1067, %v1067
      %v1208 = vmul.f32 %v1068, %v1068
      %v1209 = vmul.f32 %v1069, %v1069
      %v1210 = vmul.f32 %v1070, %v1070
      %v1211 = vmul.f32 %v1071, %v1071
      %v1212 = vmul.f32 %v1072, %v1072
      %v1213 = vmul.f32 %v1073, %v1073
      %v1214 = vmul.f32 %v1074, %v1074
      %v1215 = vmul.f32 %v1075, %v1075
      %v1216 = vsel %vm694, %v1200, 0.0
      %v1217 = vsel %vm694, %v1201, 0.0
      %v1218 = vadd.f32 %v1216, %v1217
      %v1219 = vsel %vm694, %v1202, 0.0
      %v1220 = vadd.f32 %v1218, %v1219
      %v1221 = vsel %vm694, %v1203, 0.0
      %v1222 = vadd.f32 %v1220, %v1221
      %v1223 = vsel %vm694, %v1204, 0.0
      %v1224 = vadd.f32 %v1222, %v1223
      %v1225 = vsel %vm694, %v1205, 0.0
      %v1226 = vadd.f32 %v1224, %v1225
      %v1227 = vsel %vm694, %v1206, 0.0
      %v1228 = vadd.f32 %v1226, %v1227
      %v1229 = vsel %vm694, %v1207, 0.0
      %v1230 = vadd.f32 %v1228, %v1229
      %v1231 = vsel %vm694, %v1208, 0.0
      %v1232 = vadd.f32 %v1230, %v1231
      %v1233 = vsel %vm694, %v1209, 0.0
      %v1234 = vadd.f32 %v1232, %v1233
      %v1235 = vsel %vm694, %v1210, 0.0
      %v1236 = vadd.f32 %v1234, %v1235
      %v1237 = vsel %vm694, %v1211, 0.0
      %v1238 = vadd.f32 %v1236, %v1237
      %v1239 = vsel %vm694, %v1212, 0.0
      %v1240 = vadd.f32 %v1238, %v1239
      %v1241 = vsel %vm694, %v1213, 0.0
      %v1242 = vadd.f32 %v1240, %v1241
      %v1243 = vsel %vm694, %v1214, 0.0
      %v1244 = vadd.f32 %v1242, %v1243
      %v1245 = vsel %vm694, %v1215, 0.0
      %v1246 = vadd.f32 %v1244, %v1245
      %v1247 = vrot.slane %v1246, 4
      %v1248 = vadd.f32 %v1246, %v1247
      %v1249 = vrot.slane %v1248, 2
      %v1250 = vadd.f32 %v1248, %v1249
      %v1251 = vrot.slane %v1250, 1
      %v1252 = vadd.f32 %v1250, %v1251
      %v1253 = vld [vmem:[%s403] sm:$0x3]
      %vm1254 = vcmask 1040384
      %v1255 = vsel %vm1254, %v1199, %v1252
      %v1256 = vadd.f32 %v1253, %v1255
      %vm1257 = vcmask 58368
      %1258 = vst.msk [vmem:[%s403] sm:$0x3] %vm1257, %v1256
      %s1259 = smul.u32 8, %s22
      %p1260 = scmp.lt.s32.totalorder %s21, 1
      %s1261 = scalar_select %p1260, %s21, 1
      %p1262 = scmp.lt.s32.totalorder %s1259, 15
      %s1263 = scalar_select %p1262, %s1259, 15
      %s1264 = smul.addr %s1263, 2
      %s1265 = smul.addr %s1261, 32
      %s1266 = sadd.s32 %s1264, %s1265
      %s1267 = smul.addr %s1266, 4
      %s1268 = scalar_lea.vmem %s4, %s1267
      %p1269 = scmp.lt.s32.totalorder %s21, 1
      %s1270 = scalar_select %p1269, %s21, 1
      %s1271 = smul.addr %s1270, 2
      %s1272 = scalar_lea.vmem %s5, %s1271
      // Predicated region
      $region41: #{_lambda_.3} parent=35 // pred_check
        %p1273 = pneg %p170
      $region42: #{_lambda_.3} parent=35 // pred_check_branch
        %1275 = sbr.rel (%p1273) target = $region44
      $region43: #{_lambda_.3} parent=35 // pred_region
        %s1276 = smul.u32 8, %s22
      $region44: #{_lambda_.3} parent=35 // pred_fallthru
        _
      // Predicated region
      $region45: #{_lambda_.3} parent=35 // pred_check
        %p1277 = pneg %p196
      $region46: #{_lambda_.3} parent=35 // pred_check_branch
        %1279 = sbr.rel (%p1277) target = $region48
      $region47: #{_lambda_.3} parent=35 // pred_region
        _
      $region48: #{_lambda_.3} parent=35 // pred_fallthru
        _
    $region36: #{_lambda_.3} parent=5 // pred_fallthru
      _
    %p1280 = scmp.le.s32.totalorder 2, %s12
    // Predicated region
    $region49: #{_lambda_.3} parent=5 // pred_check
      %p1281 = pneg %p1280
    $region50: #{_lambda_.3} parent=5 // pred_check_branch
      %1283 = sbr.rel (%p1281) target = $region52
    $region51: #{_lambda_.3} parent=5 // pred_region
      %s1284 = ssub.s32 %s12, 2
      // Predicated region
      $region53: #{_lambda_.3} parent=51 // pred_check
        %p1285 = pneg %p176
      $region54: #{_lambda_.3} parent=51 // pred_check_branch
        %1287 = sbr.rel (%p1285) target = $region56
      $region55: #{_lambda_.3} parent=51 // pred_region
        %s1288 = smul.u32 8, %s24
        %p1289 = scmp.lt.s32.totalorder %s23, 1
        %s1290 = scalar_select %p1289, %s23, 1
        %p1291 = scmp.lt.s32.totalorder %s1288, 15
        %s1292 = scalar_select %p1291, %s1288, 15
        %s1293 = smul.addr %s1292, 2
        %s1294 = smul.addr %s1290, 32
        %s1295 = sadd.s32 %s1293, %s1294
        %s1296 = smul.addr %s1295, 4
        %s1297 = scalar_lea.vmem %s4, %s1296
      $region56: #{_lambda_.3} parent=51 // pred_fallthru
        _
      // Predicated region
      $region57: #{_lambda_.3} parent=51 // pred_check
        %p1298 = pneg %p202
      $region58: #{_lambda_.3} parent=51 // pred_check_branch
        %1300 = sbr.rel (%p1298) target = $region60
      $region59: #{_lambda_.3} parent=51 // pred_region
        %p1301 = scmp.lt.s32.totalorder %s23, 1
        %s1302 = scalar_select %p1301, %s23, 1
        %s1303 = smul.addr %s1302, 2
        %s1304 = scalar_lea.vmem %s5, %s1303
      $region60: #{_lambda_.3} parent=51 // pred_fallthru
        _
    $region52: #{_lambda_.3} parent=5 // pred_fallthru
      _
  $region6: #{_lambda_.3} parent=0 // loop_footer
    %s16 = sadd.s32 1, %s12
  $region7: #{_lambda_.3} parent=0 // loop_footer_branch
    %11 = sbr.rel target = $region3
  $region8: #{_lambda_.3} parent=0 // loop_exit
    _

// kernel: _lambda_.4
$region0: #{_lambda_.4}
  #allocation0 [shape = 'u32[]', space=smem, size = 0x4, offset = 0x4, fixed_abs, tag = 'smem constant byte address 0x4 - core index']
  #allocation1 [shape = 'u32[144,128]{1,0:T(1,128)}', space=vmem, size = 0x12000, scoped, tag = 'internal scratch']
  %s0 = inlined_call_operand.vmem [shape: bf16[2,16,16,8], index: 0, kind: input, shape index: {}, may-alias: {0,1,2}]
  %s1 = inlined_call_operand.vmem [shape: bf16[2,16,16,8], index: 1, kind: input, shape index: {}, may-alias: {0,1,2}]
  %s2 = inlined_call_operand.vmem [shape: bf16[2,16,16,8], index: 2, kind: input, shape index: {}, may-alias: {0,1,2}]
  %s3 = inlined_call_operand.vmem [shape: bf16[3,24,8], index: 3, kind: input, shape index: {}]
  %s4 = inlined_call_operand.vmem [shape: f32[2,8], index: 4, kind: input, shape index: {}]
  %s5 = inlined_call_operand.vmem [shape: bf16[2,16,16,8], index: 5, kind: output, shape index: {0}]
  %s6 = inlined_call_operand.vmem [shape: f32[2,2,8], index: 6, kind: output, shape index: {1}]
  %7 = xla_tuple %s5, %s6
  %s8 = sld [smem:[#allocation0]]
  $region65: #{_lambda_.4} parent=0
    _
  %s10 = ssub.s32 1, %s8
  %s11 = scalar_select 0, %s10, %s8
  loop: start=0, step=1, limit=6
  $region2: #{_lambda_.4} parent=0 // loop_pre_header
    _
  $region3: #{_lambda_.4} parent=0 // loop_header
    %s13 = sphi 0, %s17
    %p14 = scmp.ge.s32.totalorder %s13, 6
    %s20 = sphi 0, %s32
    %s21 = sphi 0, %s28
    %s22 = sphi 0, %s20
    %s23 = sphi 0, %s21
    %s24 = sphi 0, %s22
    %s25 = sphi 0, %s23
    %s37 = sphi 0, %s39
    %s40 = sphi 0, %s37
    %s41 = sphi 0, %s40
    %s57 = sphi 0, %s41
    %s73 = sphi 0, %s75
    %s76 = sphi 0, %s73
    %s77 = sphi 0, %s76
    %s93 = sphi 0, %s77
    %s109 = sphi 0, %s111
    %s112 = sphi 0, %s109
    %s113 = sphi 0, %s112
    %s129 = sphi 0, %s113
    %s133 = sphi 0, %s133
    %s135 = sphi 0, %s133
    %s136 = sphi 0, %s135
    %s150 = sphi 0, %s136
    %s154 = sphi 0, %s154
    %s156 = sphi 0, %s154
    %s157 = sphi 0, %s156
    %s171 = sphi 0, %s157
    %s179 = sphi 0, %s181
    %s182 = sphi 0, %s179
    %s183 = sphi 0, %s182
    %s199 = sphi 0, %s183
    %s205 = sphi 0, %s207
    %s208 = sphi 0, %s205
    %s209 = sphi 0, %s208
    %s225 = sphi 0, %s209
  $region4: #{_lambda_.4} parent=0 // loop_header_branch
    %16 = sbr.rel (%p14) target = $region8
  $region5: #{_lambda_.4} parent=0 // loop_body
    %s18 = ssub.s32 %s13, 1
    %s19 = ssub.s32 %s13, 2
    %s26 = sadd.s32 1, %s21
    %p27 = scmp.ge.s32.totalorder %s26, 2
    %s28 = scalar_select %p27, 0, %s26
    %s29 = sadd.s32 1, %s20
    %s30 = scalar_select %p27, %s29, %s20
    %p31 = scmp.ge.s32.totalorder %s30, 2
    %s32 = scalar_select %p31, 0, %s30
    %s33 = ssub.s32 %s20, %s32
    %s34 = ssub.s32 %s21, %s28
    %s35 = sor.u32 %s33, %s34
    %p36 = scmp.eq.s32.totalorder %s35, 0
    %s38 = sadd.s32 %s37, 1
    %s39 = scalar_select %p36, %s37, %s38
    %p42 = pneg %p36
    %p43 = scmp.eq.s32.totalorder %s13, 3
    %p44 = por %p42, %p43
    %p45 = scmp.ne.s32.totalorder %s37, %s40
    %p46 = scmp.eq.s32.totalorder %s13, 0
    %p47 = por %p45, %p46
    %p48 = scmp.ne.s32.totalorder %s37, %s40
    %p49 = scmp.eq.s32.totalorder %s18, 3
    %p50 = por %p48, %p49
    %p51 = scmp.ne.s32.totalorder %s40, %s41
    %p52 = scmp.eq.s32.totalorder %s18, 0
    %p53 = por %p51, %p52
    %p54 = scmp.ne.s32.totalorder %s40, %s41
    %p55 = scmp.eq.s32.totalorder %s19, 3
    %p56 = por %p54, %p55
    %p58 = scmp.ne.s32.totalorder %s41, %s57
    %p59 = scmp.eq.s32.totalorder %s19, 0
    %p60 = por %p58, %p59
    %s61 = smul.u32 %s21, 8
    %s62 = ssub.s32 %s61, 1
    %p63 = scmp.gt.s32.totalorder %s62, 0
    %s64 = scalar_select %p63, %s62, 0
    %s65 = smul.u32 %s28, 8
    %s66 = ssub.s32 %s65, 1
    %p67 = scmp.gt.s32.totalorder %s66, 0
    %s68 = scalar_select %p67, %s66, 0
    %s69 = ssub.s32 %s20, %s32
    %s70 = ssub.s32 %s64, %s68
    %s71 = sor.u32 %s69, %s70
    %p72 = scmp.eq.s32.totalorder %s71, 0
    %s74 = sadd.s32 %s73, 1
    %s75 = scalar_select %p72, %s73, %s74
    %p78 = pneg %p72
    %p79 = scmp.eq.s32.totalorder %s13, 3
    %p80 = por %p78, %p79
    %p81 = scmp.ne.s32.totalorder %s73, %s76
    %p82 = scmp.eq.s32.totalorder %s13, 0
    %p83 = por %p81, %p82
    %p84 = scmp.ne.s32.totalorder %s73, %s76
    %p85 = scmp.eq.s32.totalorder %s18, 3
    %p86 = por %p84, %p85
    %p87 = scmp.ne.s32.totalorder %s76, %s77
    %p88 = scmp.eq.s32.totalorder %s18, 0
    %p89 = por %p87, %p88
    %p90 = scmp.ne.s32.totalorder %s76, %s77
    %p91 = scmp.eq.s32.totalorder %s19, 3
    %p92 = por %p90, %p91
    %p94 = scmp.ne.s32.totalorder %s77, %s93
    %p95 = scmp.eq.s32.totalorder %s19, 0
    %p96 = por %p94, %p95
    %s97 = smul.u32 %s21, 8
    %s98 = sadd.s32 %s97, 8
    %p99 = scmp.lt.s32.totalorder %s98, 15
    %s100 = scalar_select %p99, %s98, 15
    %s101 = smul.u32 %s28, 8
    %s102 = sadd.s32 %s101, 8
    %p103 = scmp.lt.s32.totalorder %s102, 15
    %s104 = scalar_select %p103, %s102, 15
    %s105 = ssub.s32 %s20, %s32
    %s106 = ssub.s32 %s100, %s104
    %s107 = sor.u32 %s105, %s106
    %p108 = scmp.eq.s32.totalorder %s107, 0
    %s110 = sadd.s32 %s109, 1
    %s111 = scalar_select %p108, %s109, %s110
    %p114 = pneg %p108
    %p115 = scmp.eq.s32.totalorder %s13, 3
    %p116 = por %p114, %p115
    %p117 = scmp.ne.s32.totalorder %s109, %s112
    %p118 = scmp.eq.s32.totalorder %s13, 0
    %p119 = por %p117, %p118
    %p120 = scmp.ne.s32.totalorder %s109, %s112
    %p121 = scmp.eq.s32.totalorder %s18, 3
    %p122 = por %p120, %p121
    %p123 = scmp.ne.s32.totalorder %s112, %s113
    %p124 = scmp.eq.s32.totalorder %s18, 0
    %p125 = por %p123, %p124
    %p126 = scmp.ne.s32.totalorder %s112, %s113
    %p127 = scmp.eq.s32.totalorder %s19, 3
    %p128 = por %p126, %p127
    %p130 = scmp.ne.s32.totalorder %s113, %s129
    %p131 = scmp.eq.s32.totalorder %s19, 0
    %p132 = por %p130, %p131
    %s134 = sadd.s32 %s133, 1
    %p137 = scmp.eq.s32.totalorder %s13, 3
    %p138 = scmp.ne.s32.totalorder %s133, %s135
    %p139 = scmp.eq.s32.totalorder %s13, 0
    %p140 = por %p138, %p139
    %p141 = scmp.ne.s32.totalorder %s133, %s135
    %p142 = scmp.eq.s32.totalorder %s18, 3
    %p143 = por %p141, %p142
    %p144 = scmp.ne.s32.totalorder %s135, %s136
    %p145 = scmp.eq.s32.totalorder %s18, 0
    %p146 = por %p144, %p145
    %p147 = scmp.ne.s32.totalorder %s135, %s136
    %p148 = scmp.eq.s32.totalorder %s19, 3
    %p149 = por %p147, %p148
    %p151 = scmp.ne.s32.totalorder %s136, %s150
    %p152 = scmp.eq.s32.totalorder %s19, 0
    %p153 = por %p151, %p152
    %s155 = sadd.s32 %s154, 1
    %p158 = scmp.eq.s32.totalorder %s13, 3
    %p159 = scmp.ne.s32.totalorder %s154, %s156
    %p160 = scmp.eq.s32.totalorder %s13, 0
    %p161 = por %p159, %p160
    %p162 = scmp.ne.s32.totalorder %s154, %s156
    %p163 = scmp.eq.s32.totalorder %s18, 3
    %p164 = por %p162, %p163
    %p165 = scmp.ne.s32.totalorder %s156, %s157
    %p166 = scmp.eq.s32.totalorder %s18, 0
    %p167 = por %p165, %p166
    %p168 = scmp.ne.s32.totalorder %s156, %s157
    %p169 = scmp.eq.s32.totalorder %s19, 3
    %p170 = por %p168, %p169
    %p172 = scmp.ne.s32.totalorder %s157, %s171
    %p173 = scmp.eq.s32.totalorder %s19, 0
    %p174 = por %p172, %p173
    %s175 = ssub.s32 %s20, %s32
    %s176 = ssub.s32 %s21, %s28
    %s177 = sor.u32 %s175, %s176
    %p178 = scmp.eq.s32.totalorder %s177, 0
    %s180 = sadd.s32 %s179, 1
    %s181 = scalar_select %p178, %s179, %s180
    %p184 = pneg %p178
    %p185 = scmp.eq.s32.totalorder %s13, 3
    %p186 = por %p184, %p185
    %p187 = scmp.ne.s32.totalorder %s179, %s182
    %p188 = scmp.eq.s32.totalorder %s13, 0
    %p189 = por %p187, %p188
    %p190 = scmp.ne.s32.totalorder %s179, %s182
    %p191 = scmp.eq.s32.totalorder %s18, 3
    %p192 = por %p190, %p191
    %p193 = scmp.ne.s32.totalorder %s182, %s183
    %p194 = scmp.eq.s32.totalorder %s18, 0
    %p195 = por %p193, %p194
    %p196 = scmp.ne.s32.totalorder %s182, %s183
    %p197 = scmp.eq.s32.totalorder %s19, 3
    %p198 = por %p196, %p197
    %p200 = scmp.ne.s32.totalorder %s183, %s199
    %p201 = scmp.eq.s32.totalorder %s19, 0
    %p202 = por %p200, %p201
    %s203 = ssub.s32 %s20, %s32
    %p204 = scmp.eq.s32.totalorder %s203, 0
    %s206 = sadd.s32 %s205, 1
    %s207 = scalar_select %p204, %s205, %s206
    %p210 = pneg %p204
    %p211 = scmp.eq.s32.totalorder %s13, 3
    %p212 = por %p210, %p211
    %p213 = scmp.ne.s32.totalorder %s205, %s208
    %p214 = scmp.eq.s32.totalorder %s13, 0
    %p215 = por %p213, %p214
    %p216 = scmp.ne.s32.totalorder %s205, %s208
    %p217 = scmp.eq.s32.totalorder %s18, 3
    %p218 = por %p216, %p217
    %p219 = scmp.ne.s32.totalorder %s208, %s209
    %p220 = scmp.eq.s32.totalorder %s18, 0
    %p221 = por %p219, %p220
    %p222 = scmp.ne.s32.totalorder %s208, %s209
    %p223 = scmp.eq.s32.totalorder %s19, 3
    %p224 = por %p222, %p223
    %p226 = scmp.ne.s32.totalorder %s209, %s225
    %p227 = scmp.eq.s32.totalorder %s19, 0
    %p228 = por %p226, %p227
    %p229 = scmp.le.s32.totalorder 1, %s13
    %p230 = scmp.lt.s32.totalorder %s13, 5
    %p231 = pnand %p229, %p230
    %p232 = pneg %p231
    // Predicated region
    $region9: #{_lambda_.4} parent=5 // pred_check
      _
    $region10: #{_lambda_.4} parent=5 // pred_check_branch
      %234 = sbr.rel (%p231) target = $region12
    $region11: #{_lambda_.4} parent=5 // pred_region
      %s235 = ssub.s32 %s13, 1
      // Predicated region
      $region13: #{_lambda_.4} parent=11 // pred_check
        %p236 = pneg %p146
      $region14: #{_lambda_.4} parent=11 // pred_check_branch
        %238 = sbr.rel (%p236) target = $region16
      $region15: #{_lambda_.4} parent=11 // pred_region
        _
      $region16: #{_lambda_.4} parent=11 // pred_fallthru
        _
      // Predicated region
      $region17: #{_lambda_.4} parent=11 // pred_check
        %p239 = pneg %p167
      $region18: #{_lambda_.4} parent=11 // pred_check_branch
        %241 = sbr.rel (%p239) target = $region20
      $region19: #{_lambda_.4} parent=11 // pred_region
        _
      $region20: #{_lambda_.4} parent=11 // pred_fallthru
        _
    $region12: #{_lambda_.4} parent=5 // pred_fallthru
      _
    %p242 = scmp.lt.s32.totalorder %s13, 4
    // Predicated region
    $region21: #{_lambda_.4} parent=5 // pred_check
      %p243 = pneg %p242
    $region22: #{_lambda_.4} parent=5 // pred_check_branch
      %245 = sbr.rel (%p243) target = $region24
    $region23: #{_lambda_.4} parent=5 // pred_region
      // Predicated region
      $region25: #{_lambda_.4} parent=23 // pred_check
        %p246 = pneg %p47
      $region26: #{_lambda_.4} parent=23 // pred_check_branch
        %248 = sbr.rel (%p246) target = $region28
      $region27: #{_lambda_.4} parent=23 // pred_region
        %s249 = smul.u32 8, %s21
        %p250 = scmp.lt.s32.totalorder %s20, 1
        %s251 = scalar_select %p250, %s20, 1
        %p252 = scmp.lt.s32.totalorder %s249, 15
        %s253 = scalar_select %p252, %s249, 15
        %s254 = smul.addr %s253, 2
        %s255 = smul.addr %s251, 32
        %s256 = sadd.s32 %s254, %s255
        %s257 = smul.addr %s256, 4
        %s258 = scalar_lea.vmem %s0, %s257
        %s259 = smul.u32 8, %s21
      $region28: #{_lambda_.4} parent=23 // pred_fallthru
        _
      // Predicated region
      $region29: #{_lambda_.4} parent=23 // pred_check
        %p260 = pneg %p83
      $region30: #{_lambda_.4} parent=23 // pred_check_branch
        %262 = sbr.rel (%p260) target = $region32
      $region31: #{_lambda_.4} parent=23 // pred_region
        %s263 = smul.u32 %s21, 8
        %s264 = ssub.s32 %s263, 1
        %p265 = scmp.gt.s32.totalorder %s264, 0
        %s266 = scalar_select %p265, %s264, 0
        %p267 = scmp.lt.s32.totalorder %s20, 1
        %s268 = scalar_select %p267, %s20, 1
        %p269 = scmp.lt.s32.totalorder %s266, 15
        %s270 = scalar_select %p269, %s266, 15
        %s271 = smul.addr %s270, 2
        %s272 = smul.addr %s268, 32
        %s273 = sadd.s32 %s271, %s272
        %s274 = smul.addr %s273, 4
        %s275 = scalar_lea.vmem %s1, %s274
        %s276 = smul.u32 %s21, 8
        %s277 = ssub.s32 %s276, 1
        %p278 = scmp.gt.s32.totalorder %s277, 0
        %s279 = scalar_select %p278, %s277, 0
      $region32: #{_lambda_.4} parent=23 // pred_fallthru
        _
      // Predicated region
      $region33: #{_lambda_.4} parent=23 // pred_check
        %p280 = pneg %p119
      $region34: #{_lambda_.4} parent=23 // pred_check_branch
        %282 = sbr.rel (%p280) target = $region36
      $region35: #{_lambda_.4} parent=23 // pred_region
        %s283 = smul.u32 %s21, 8
        %s284 = sadd.s32 %s283, 8
        %p285 = scmp.lt.s32.totalorder %s284, 15
        %s286 = scalar_select %p285, %s284, 15
        %p287 = scmp.lt.s32.totalorder %s20, 1
        %s288 = scalar_select %p287, %s20, 1
        %p289 = scmp.lt.s32.totalorder %s286, 15
        %s290 = scalar_select %p289, %s286, 15
        %s291 = smul.addr %s290, 2
        %s292 = smul.addr %s288, 32
        %s293 = sadd.s32 %s291, %s292
        %s294 = smul.addr %s293, 4
        %s295 = scalar_lea.vmem %s2, %s294
        %s296 = smul.u32 %s21, 8
        %s297 = sadd.s32 %s296, 8
        %p298 = scmp.lt.s32.totalorder %s297, 15
        %s299 = scalar_select %p298, %s297, 15
      $region36: #{_lambda_.4} parent=23 // pred_fallthru
        _
    $region24: #{_lambda_.4} parent=5 // pred_fallthru
      _
    %p300 = scmp.le.s32.totalorder 1, %s13
    %p301 = scmp.lt.s32.totalorder %s13, 5
    %p302 = pnand %p300, %p301
    %p303 = pneg %p302
    // Predicated region
    $region37: #{_lambda_.4} parent=5 // pred_check
      _
    $region38: #{_lambda_.4} parent=5 // pred_check_branch
      %305 = sbr.rel (%p302) target = $region40
    $region39: #{_lambda_.4} parent=5 // pred_region
      %s306 = ssub.s32 %s13, 1
      %s307 = smul.u32 8, %s23
      %p308 = scmp.lt.s32.totalorder %s22, 1
      %s309 = scalar_select %p308, %s22, 1
      %p310 = scmp.lt.s32.totalorder %s307, 15
      %s311 = scalar_select %p310, %s307, 15
      %s312 = smul.addr %s311, 2
      %s313 = smul.addr %s309, 32
      %s314 = sadd.s32 %s312, %s313
      %s315 = smul.addr %s314, 4
      %s316 = scalar_lea.vmem %s0, %s315
      %p317 = pneg %p53
      %p318 = pneg %p50
      %s319 = smul.u32 %s23, 8
      %s320 = ssub.s32 %s319, 1
      %p321 = scmp.gt.s32.totalorder %s320, 0
      %s322 = scalar_select %p321, %s320, 0
      %p323 = scmp.lt.s32.totalorder %s22, 1
      %s324 = scalar_select %p323, %s22, 1
      %p325 = scmp.lt.s32.totalorder %s322, 15
      %s326 = scalar_select %p325, %s322, 15
      %s327 = smul.addr %s326, 2
      %s328 = smul.addr %s324, 32
      %s329 = sadd.s32 %s327, %s328
      %s330 = smul.addr %s329, 4
      %s331 = scalar_lea.vmem %s1, %s330
      %p332 = pneg %p89
      %p333 = pneg %p86
      %s334 = smul.u32 %s23, 8
      %s335 = sadd.s32 %s334, 8
      %p336 = scmp.lt.s32.totalorder %s335, 15
      %s337 = scalar_select %p336, %s335, 15
      %p338 = scmp.lt.s32.totalorder %s22, 1
      %s339 = scalar_select %p338, %s22, 1
      %p340 = scmp.lt.s32.totalorder %s337, 15
      %s341 = scalar_select %p340, %s337, 15
      %s342 = smul.addr %s341, 2
      %s343 = smul.addr %s339, 32
      %s344 = sadd.s32 %s342, %s343
      %s345 = smul.addr %s344, 4
      %s346 = scalar_lea.vmem %s2, %s345
      %p347 = pneg %p125
      %p348 = pneg %p122
      %p349 = pneg %p146
      %p350 = pneg %p143
      %p351 = pneg %p167
      %p352 = pneg %p164
      %p353 = pneg %p195
      %p354 = pneg %p192
      %s355 = smul.u32 8, %s23
      %p356 = scmp.lt.s32.totalorder %s22, 1
      %s357 = scalar_select %p356, %s22, 1
      %p358 = scmp.lt.s32.totalorder %s355, 15
      %s359 = scalar_select %p358, %s355, 15
      %s360 = smul.addr %s359, 2
      %s361 = smul.addr %s357, 32
      %s362 = sadd.s32 %s360, %s361
      %s363 = smul.addr %s362, 4
      %s364 = scalar_lea.vmem %s5, %s363
      %p365 = pneg %p221
      %p366 = pneg %p218
      %p367 = scmp.lt.s32.totalorder %s22, 1
      %s368 = scalar_select %p367, %s22, 1
      %s369 = smul.addr %s368, 2
      %s370 = scalar_lea.vmem %s6, %s369
      %s371 = smul.u32 8, %s23
      %p372 = scmp.lt.s32.totalorder %s22, 1
      %s373 = scalar_select %p372, %s22, 1
      %p374 = scmp.lt.s32.totalorder %s371, 15
      %s375 = scalar_select %p374, %s371, 15
      %s376 = smul.addr %s375, 2
      %s377 = smul.addr %s373, 32
      %s378 = sadd.s32 %s376, %s377
      %s379 = smul.addr %s378, 4
      %s380 = scalar_lea.vmem %s0, %s379
      %s381 = smul.u32 8, %s23
      %s382 = smul.u32 %s23, 8
      %s383 = ssub.s32 %s382, 1
      %p384 = scmp.gt.s32.totalorder %s383, 0
      %s385 = scalar_select %p384, %s383, 0
      %p386 = scmp.lt.s32.totalorder %s22, 1
      %s387 = scalar_select %p386, %s22, 1
      %p388 = scmp.lt.s32.totalorder %s385, 15
      %s389 = scalar_select %p388, %s385, 15
      %s390 = smul.addr %s389, 2
      %s391 = smul.addr %s387, 32
      %s392 = sadd.s32 %s390, %s391
      %s393 = smul.addr %s392, 4
      %s394 = scalar_lea.vmem %s1, %s393
      %s395 = smul.u32 %s23, 8
      %s396 = ssub.s32 %s395, 1
      %p397 = scmp.gt.s32.totalorder %s396, 0
      %s398 = scalar_select %p397, %s396, 0
      %s399 = smul.u32 %s23, 8
      %s400 = sadd.s32 %s399, 8
      %p401 = scmp.lt.s32.totalorder %s400, 15
      %s402 = scalar_select %p401, %s400, 15
      %p403 = scmp.lt.s32.totalorder %s22, 1
      %s404 = scalar_select %p403, %s22, 1
      %p405 = scmp.lt.s32.totalorder %s402, 15
      %s406 = scalar_select %p405, %s402, 15
      %s407 = smul.addr %s406, 2
      %s408 = smul.addr %s404, 32
      %s409 = sadd.s32 %s407, %s408
      %s410 = smul.addr %s409, 4
      %s411 = scalar_lea.vmem %s2, %s410
      %s412 = smul.u32 %s23, 8
      %s413 = sadd.s32 %s412, 8
      %p414 = scmp.lt.s32.totalorder %s413, 15
      %s415 = scalar_select %p414, %s413, 15
      %s416 = smul.u32 8, %s23
      %p417 = scmp.lt.s32.totalorder %s22, 1
      %s418 = scalar_select %p417, %s22, 1
      %p419 = scmp.lt.s32.totalorder %s416, 15
      %s420 = scalar_select %p419, %s416, 15
      %s421 = smul.addr %s420, 2
      %s422 = smul.addr %s418, 32
      %s423 = sadd.s32 %s421, %s422
      %s424 = smul.addr %s423, 4
      %s425 = scalar_lea.vmem %s5, %s424
      %s426 = smul.u32 8, %s23
      %p427 = scmp.lt.s32.totalorder %s22, 1
      %s428 = scalar_select %p427, %s22, 1
      %s429 = smul.addr %s428, 2
      %s430 = scalar_lea.vmem %s6, %s429
      %v432 = vld [vmem:[%s380] sm:$0xf]
      %v433 = vld [vmem:[%s380 + $0x4] sm:$0xf]
      %v434 = vld [vmem:[%s380 + $0x8] sm:$0xf]
      %v435 = vld [vmem:[%s380 + $0xc] sm:$0xf]
      %v436 = vld [vmem:[%s380 + $0x10] sm:$0xf]
      %v437 = vld [vmem:[%s380 + $0x14] sm:$0xf]
      %v438 = vld [vmem:[%s380 + $0x18] sm:$0xf]
      %v439 = vld [vmem:[%s380 + $0x1c] sm:$0xf]
      %v440 = vld [vmem:[%s380 + $0x20] sm:$0xf]
      %v441 = vld [vmem:[%s380 + $0x24] sm:$0xf]
      %v442 = vld [vmem:[%s380 + $0x28] sm:$0xf]
      %v443 = vld [vmem:[%s380 + $0x2c] sm:$0xf]
      %v444 = vld [vmem:[%s380 + $0x30] sm:$0xf]
      %v445 = vld [vmem:[%s380 + $0x34] sm:$0xf]
      %v446 = vld [vmem:[%s380 + $0x38] sm:$0xf]
      %v447 = vld [vmem:[%s380 + $0x3c] sm:$0xf]
      %v448 = vunpack.c.l.bf16 %v432
      %v449 = vunpack.c.l.bf16 %v433
      %v450 = vunpack.c.l.bf16 %v434
      %v451 = vunpack.c.l.bf16 %v435
      %v452 = vunpack.c.l.bf16 %v436
      %v453 = vunpack.c.l.bf16 %v437
      %v454 = vunpack.c.l.bf16 %v438
      %v455 = vunpack.c.l.bf16 %v439
      %v456 = vunpack.c.l.bf16 %v440
      %v457 = vunpack.c.l.bf16 %v441
      %v458 = vunpack.c.l.bf16 %v442
      %v459 = vunpack.c.l.bf16 %v443
      %v460 = vunpack.c.l.bf16 %v444
      %v461 = vunpack.c.l.bf16 %v445
      %v462 = vunpack.c.l.bf16 %v446
      %v463 = vunpack.c.l.bf16 %v447
      %v464 = vld [vmem:[%s4] sm:$0x3]
      %v465 = vlaneseq
      %v466 = vshrl.u32 %v465, 7
      %v467 = vsub.s32 0, %v466
      %v468 = vrot.slane %v464, %v467
      %v469 = vmul.f32 %v448, %v468
      %v470 = vmul.f32 %v449, %v468
      %v471 = vmul.f32 %v450, %v468
      %v472 = vmul.f32 %v451, %v468
      %v473 = vmul.f32 %v452, %v468
      %v474 = vmul.f32 %v453, %v468
      %v475 = vmul.f32 %v454, %v468
      %v476 = vmul.f32 %v455, %v468
      %v477 = vmul.f32 %v456, %v468
      %v478 = vmul.f32 %v457, %v468
      %v479 = vmul.f32 %v458, %v468
      %v480 = vmul.f32 %v459, %v468
      %v481 = vmul.f32 %v460, %v468
      %v482 = vmul.f32 %v461, %v468
      %v483 = vmul.f32 %v462, %v468
      %v484 = vmul.f32 %v463, %v468
      %v485 = vlaneseq
      %v486 = vshrl.u32 %v485, 7
      %v487 = vsub.s32 1, %v486
      %v488 = vrot.slane %v464, %v487
      %v489 = vadd.f32 %v469, %v488
      %v490 = vadd.f32 %v470, %v488
      %v491 = vadd.f32 %v471, %v488
      %v492 = vadd.f32 %v472, %v488
      %v493 = vadd.f32 %v473, %v488
      %v494 = vadd.f32 %v474, %v488
      %v495 = vadd.f32 %v475, %v488
      %v496 = vadd.f32 %v476, %v488
      %v497 = vadd.f32 %v477, %v488
      %v498 = vadd.f32 %v478, %v488
      %v499 = vadd.f32 %v479, %v488
      %v500 = vadd.f32 %v480, %v488
      %v501 = vadd.f32 %v481, %v488
      %v502 = vadd.f32 %v482, %v488
      %v503 = vadd.f32 %v483, %v488
      %v504 = vadd.f32 %v484, %v488
      %v505 = vmax.f32 %v489, 0.0
      %v506 = vmax.f32 %v490, 0.0
      %v507 = vmax.f32 %v491, 0.0
      %v508 = vmax.f32 %v492, 0.0
      %v509 = vmax.f32 %v493, 0.0
      %v510 = vmax.f32 %v494, 0.0
      %v511 = vmax.f32 %v495, 0.0
      %v512 = vmax.f32 %v496, 0.0
      %v513 = vmax.f32 %v497, 0.0
      %v514 = vmax.f32 %v498, 0.0
      %v515 = vmax.f32 %v499, 0.0
      %v516 = vmax.f32 %v500, 0.0
      %v517 = vmax.f32 %v501, 0.0
      %v518 = vmax.f32 %v502, 0.0
      %v519 = vmax.f32 %v503, 0.0
      %v520 = vmax.f32 %v504, 0.0
      %p521 = scmp.gt.s32.totalorder %s23, 0
      %v522 = vld [vmem:[%s394] sm:$0xf]
      %v523 = vld [vmem:[%s394 + $0x4] sm:$0xf]
      %v524 = vunpack.c.l.bf16 %v522
      %v525 = vunpack.c.l.bf16 %v523
      %v526 = vmul.f32 %v524, %v468
      %v527 = vmul.f32 %v525, %v468
      %v528 = vadd.f32 %v526, %v488
      %v529 = vadd.f32 %v527, %v488
      %v530 = vmax.f32 %v528, 0.0
      %v531 = vmax.f32 %v529, 0.0
      %s532 = scalar_select %p521, 1, 0
      %v533 = vstv %s532
      %vm534 = vcmp.eq.s32.totalorder %v533, 1
      %v535 = vsel %vm534, %v530, 0.0
      %v536 = vsel %vm534, %v531, 0.0
      %p537 = scmp.lt.s32.totalorder %s23, 1
      %v538 = vld [vmem:[%s411] sm:$0xf]
      %v539 = vld [vmem:[%s411 + $0x4] sm:$0xf]
      %v540 = vunpack.c.l.bf16 %v538
      %v541 = vunpack.c.l.bf16 %v539
      %v542 = vmul.f32 %v540, %v468
      %v543 = vmul.f32 %v541, %v468
      %v544 = vadd.f32 %v542, %v488
      %v545 = vadd.f32 %v543, %v488
      %v546 = vmax.f32 %v544, 0.0
      %v547 = vmax.f32 %v545, 0.0
      %s548 = scalar_select %p537, 1, 0
      %v549 = vstv %s548
      %vm550 = vcmp.eq.s32.totalorder %v549, 1
      %v551 = vsel %vm550, %v546, 0.0
      %v552 = vsel %vm550, %v547, 0.0
      %v553 = vpack.c.bf16 %v536, %v535
      %v554 = vpack.c.bf16 %v506, %v505
      %v555 = vpack.c.bf16 %v508, %v507
      %v556 = vpack.c.bf16 %v510, %v509
      %v557 = vpack.c.bf16 %v512, %v511
      %v558 = vpack.c.bf16 %v514, %v513
      %v559 = vpack.c.bf16 %v516, %v515
      %v560 = vpack.c.bf16 %v518, %v517
      %v561 = vpack.c.bf16 %v520, %v519
      %v562 = vpack.c.bf16 %v552, %v551
      %v564 = vshrl.u32 %v553, 16
      %v566 = vrot.slane %v564, 7
      %v567 = vshll.u32 %v553, 16
      %v569 = vor.u32 %v566, %v567
      %v571 = vshrl.u32 %v554, 16
      %v573 = vrot.slane %v571, 7
      %v574 = vshll.u32 %v554, 16
      %v576 = vor.u32 %v573, %v574
      %v578 = vshrl.u32 %v555, 16
      %v580 = vrot.slane %v578, 7
      %v581 = vshll.u32 %v555, 16
      %v583 = vor.u32 %v580, %v581
      %v585 = vshrl.u32 %v556, 16
      %v587 = vrot.slane %v585, 7
      %v588 = vshll.u32 %v556, 16
      %v590 = vor.u32 %v587, %v588
      %v592 = vshrl.u32 %v557, 16
      %v594 = vrot.slane %v592, 7
      %v595 = vshll.u32 %v557, 16
      %v597 = vor.u32 %v594, %v595
      %v599 = vshrl.u32 %v558, 16
      %v601 = vrot.slane %v599, 7
      %v602 = vshll.u32 %v558, 16
      %v604 = vor.u32 %v601, %v602
      %v606 = vshrl.u32 %v559, 16
      %v608 = vrot.slane %v606, 7
      %v609 = vshll.u32 %v559, 16
      %v611 = vor.u32 %v608, %v609
      %v613 = vshrl.u32 %v560, 16
      %v615 = vrot.slane %v613, 7
      %v616 = vshll.u32 %v560, 16
      %v618 = vor.u32 %v615, %v616
      %v620 = vshrl.u32 %v561, 16
      %v622 = vrot.slane %v620, 7
      %v623 = vshll.u32 %v561, 16
      %v625 = vor.u32 %v622, %v623
      %v627 = vshrl.u32 %v562, 16
      %v629 = vrot.slane %v627, 7
      %v630 = vshll.u32 %v562, 16
      %v632 = vor.u32 %v629, %v630
      %vm643 = vcmask 1040384
      %vm644 = vsmask.f32 256
      %vm645 = vmand %vm643, %vm644
      %v646 = vsel %vm645, 0, %v569
      %v647 = vsel %vm645, 0, %v576
      %v648 = vsel %vm645, 0, %v583
      %v649 = vsel %vm645, 0, %v590
      %v650 = vsel %vm645, 0, %v597
      %v651 = vsel %vm645, 0, %v604
      %v652 = vsel %vm645, 0, %v611
      %v653 = vsel %vm645, 0, %v618
      %v654 = vsel %vm645, 0, %v625
      %v655 = vsel %vm645, 0, %v632
      %v656 = vrot.slane %v567, 1
      %v657 = vor.u32 %v564, %v656
      %v658 = vrot.slane %v574, 1
      %v659 = vor.u32 %v571, %v658
      %v660 = vrot.slane %v581, 1
      %v661 = vor.u32 %v578, %v660
      %v662 = vrot.slane %v588, 1
      %v663 = vor.u32 %v585, %v662
      %v664 = vrot.slane %v595, 1
      %v665 = vor.u32 %v592, %v664
      %v666 = vrot.slane %v602, 1
      %v667 = vor.u32 %v599, %v666
      %v668 = vrot.slane %v609, 1
      %v669 = vor.u32 %v606, %v668
      %v670 = vrot.slane %v616, 1
      %v671 = vor.u32 %v613, %v670
      %v672 = vrot.slane %v623, 1
      %v673 = vor.u32 %v620, %v672
      %v674 = vrot.slane %v630, 1
      %v675 = vor.u32 %v627, %v674
      %vm686 = vcmask 1047552
      %vm687 = vsmask.f32 7424
      %vm688 = vmand %vm686, %vm687
      %v689 = vsel %vm688, %v657, 0
      %v690 = vsel %vm688, %v659, 0
      %v691 = vsel %vm688, %v661, 0
      %v692 = vsel %vm688, %v663, 0
      %v693 = vsel %vm688, %v665, 0
      %v694 = vsel %vm688, %v667, 0
      %v695 = vsel %vm688, %v669, 0
      %v696 = vsel %vm688, %v671, 0
      %v697 = vsel %vm688, %v673, 0
      %v698 = vsel %vm688, %v675, 0
      %709 = vrot.lane.b32.xlu0 %v553, 8
      %v710 = vpop.permute.xlu0 %709
      %711 = vrot.lane.b32.xlu0 %v554, 8
      %v712 = vpop.permute.xlu0 %711
      %713 = vrot.lane.b32.xlu0 %v555, 8
      %v714 = vpop.permute.xlu0 %713
      %715 = vrot.lane.b32.xlu0 %v556, 8
      %v716 = vpop.permute.xlu0 %715
      %717 = vrot.lane.b32.xlu0 %v557, 8
      %v718 = vpop.permute.xlu0 %717
      %719 = vrot.lane.b32.xlu0 %v558, 8
      %v720 = vpop.permute.xlu0 %719
      %721 = vrot.lane.b32.xlu0 %v559, 8
      %v722 = vpop.permute.xlu0 %721
      %723 = vrot.lane.b32.xlu0 %v560, 8
      %v724 = vpop.permute.xlu0 %723
      %725 = vrot.lane.b32.xlu0 %v561, 8
      %v726 = vpop.permute.xlu0 %725
      %727 = vrot.lane.b32.xlu0 %v562, 8
      %v728 = vpop.permute.xlu0 %727
      %739 = vrot.lane.b32.xlu0 %v689, 16
      %v740 = vpop.permute.xlu0 %739
      %741 = vrot.lane.b32.xlu0 %v690, 16
      %v742 = vpop.permute.xlu0 %741
      %743 = vrot.lane.b32.xlu0 %v691, 16
      %v744 = vpop.permute.xlu0 %743
      %745 = vrot.lane.b32.xlu0 %v692, 16
      %v746 = vpop.permute.xlu0 %745
      %747 = vrot.lane.b32.xlu0 %v693, 16
      %v748 = vpop.permute.xlu0 %747
      %749 = vrot.lane.b32.xlu0 %v694, 16
      %v750 = vpop.permute.xlu0 %749
      %751 = vrot.lane.b32.xlu0 %v695, 16
      %v752 = vpop.permute.xlu0 %751
      %753 = vrot.lane.b32.xlu0 %v696, 16
      %v754 = vpop.permute.xlu0 %753
      %755 = vrot.lane.b32.xlu0 %v697, 16
      %v756 = vpop.permute.xlu0 %755
      %757 = vrot.lane.b32.xlu0 %v698, 16
      %v758 = vpop.permute.xlu0 %757
      %vm759 = vcmask 64512
      %v762 = vsel %vm759, %v646, %v710
      %v765 = vsel %vm759, %v647, %v712
      %v768 = vsel %vm759, %v648, %v714
      %v771 = vsel %vm759, %v649, %v716
      %v774 = vsel %vm759, %v650, %v718
      %v777 = vsel %vm759, %v651, %v720
      %v780 = vsel %vm759, %v652, %v722
      %v783 = vsel %vm759, %v653, %v724
      %v786 = vsel %vm759, %v654, %v726
      %v789 = vsel %vm759, %v655, %v728
      %vm790 = vcmask 130048
      %v792 = vsel %vm790, %v762, %v740
      %v794 = vsel %vm790, %v765, %v742
      %v796 = vsel %vm790, %v768, %v744
      %v798 = vsel %vm790, %v771, %v746
      %v800 = vsel %vm790, %v774, %v748
      %v802 = vsel %vm790, %v777, %v750
      %v804 = vsel %vm790, %v780, %v752
      %v806 = vsel %vm790, %v783, %v754
      %v808 = vsel %vm790, %v786, %v756
      %v810 = vsel %vm790, %v789, %v758
      %v811 = vld [vmem:[%s3] sm:$0xf]
      %v812 = vld [vmem:[%s3 + $0x4] sm:$0xf]
      %v813 = vld [vmem:[%s3 + $0x8] sm:$0xf]
      %s814 = scalar_lea.vmem %s3, 12
      %v815 = vld [vmem:[%s814] sm:$0xf]
      %v816 = vld [vmem:[%s814 + $0x4] sm:$0xf]
      %v817 = vld [vmem:[%s814 + $0x8] sm:$0xf]
      %v821 = vunpack.c.l.b16 %v815
      %v822 = vunpack.c.l.b16 %v816
      %v823 = vunpack.c.l.b16 %v817
      %v824 = vpack.c.b16 %v822, %v821
      %v825 = vpack.c.b16 %v823, %v823
      %vm827 = vcmask 195584
      %v828 = vsel %vm827, %v794, 0
      %v830 = vsel %vm827, %v796, 0
      %v832 = vsel %vm827, %v798, 0
      %v834 = vsel %vm827, %v800, 0
      %v836 = vsel %vm827, %v802, 0
      %v838 = vsel %vm827, %v804, 0
      %v840 = vsel %vm827, %v806, 0
      %v842 = vsel %vm827, %v808, 0
      %vm844 = vcmask 1043456
      %v846 = vsel %vm844, %v825, 0
      %848 = vmatprep.subr.bf16.mxu0 0
      %849 = vmatpush1.bf16.msra.mxu0 %v824
      %850 = vmatprep.subr.bf16.mxu0 0
      %851 = vmatpush1.bf16.msra.mxu0 %v846
      %852 = vmatprep.subr.bf16.mxu0 0
      %853 = vmatpush1.bf16.msra.mxu0 0
      %854 = vmatprep.subr.bf16.mxu0 0
      %855 = vmatpush1.bf16.msra.mxu0 0
      %856 = vmatprep.subr.bf16.mxu0 0
      %857 = vmatpush1.bf16.msra.mxu0 0
      %858 = vmatprep.subr.bf16.mxu0 0
      %859 = vmatpush1.bf16.msra.mxu0 0
      %860 = vmatprep.subr.bf16.mxu0 0
      %861 = vmatpush1.bf16.msra.mxu0 0
      %862 = vmatprep.subr.bf16.mxu0 0
      %863 = vmatpush1.bf16.msra.mxu0 0
      %864 = vmatprep.subr.bf16.mxu0 0
      %865 = vmatpush1.bf16.msra.mxu0 0
      %866 = vmatprep.subr.bf16.mxu0 0
      %867 = vmatpush1.bf16.msra.mxu0 0
      %868 = vmatprep.subr.bf16.mxu0 0
      %869 = vmatpush1.bf16.msra.mxu0 0
      %870 = vmatprep.subr.bf16.mxu0 0
      %871 = vmatpush1.bf16.msra.mxu0 0
      %872 = vmatprep.subr.bf16.mxu0 0
      %873 = vmatpush1.bf16.msra.mxu0 0
      %874 = vmatprep.subr.bf16.mxu0 0
      %875 = vmatpush1.bf16.msra.mxu0 0
      %876 = vmatprep.subr.bf16.mxu0 0
      %877 = vmatpush1.bf16.msra.mxu0 0
      %878 = vmatprep.subr.bf16.mxu0 0
      %879 = vmatpush1.bf16.msra.mxu0 0
      %880 = vmatprep.mubr.bf16.mxu0 0
      %881 = vmatmul.mubr.bf16.gmra.mrb[0].mxu0 %v828
      %v882 = vpop.f32.mrb[0].mxu0
      %v883 = vadd.f32 0.0, %v882
      %v884 = vpop.f32.mrb[0].mxu0
      %v885 = vpop.f32.mrb[0].mxu0
      %v886 = vadd.f32 0.0, %v885
      %v887 = vpop.f32.mrb[0].mxu0
      %888 = vmatprep.mubr.bf16.mxu0 0
      %889 = vmatmul.mubr.bf16.gmra.mrb[0].mxu0 %v830
      %v890 = vpop.f32.mrb[0].mxu0
      %v891 = vadd.f32 0.0, %v890
      %v892 = vpop.f32.mrb[0].mxu0
      %v893 = vpop.f32.mrb[0].mxu0
      %v894 = vadd.f32 0.0, %v893
      %v895 = vpop.f32.mrb[0].mxu0
      %896 = vmatprep.mubr.bf16.mxu0 0
      %897 = vmatmul.mubr.bf16.gmra.mrb[0].mxu0 %v832
      %v898 = vpop.f32.mrb[0].mxu0
      %v899 = vadd.f32 0.0, %v898
      %v900 = vpop.f32.mrb[0].mxu0
      %v901 = vpop.f32.mrb[0].mxu0
      %v902 = vadd.f32 0.0, %v901
      %v903 = vpop.f32.mrb[0].mxu0
      %904 = vmatprep.mubr.bf16.mxu0 0
      %905 = vmatmul.mubr.bf16.gmra.mrb[0].mxu0 %v834
      %v906 = vpop.f32.mrb[0].mxu0
      %v907 = vadd.f32 0.0, %v906
      %v908 = vpop.f32.mrb[0].mxu0
      %v909 = vpop.f32.mrb[0].mxu0
      %v910 = vadd.f32 0.0, %v909
      %v911 = vpop.f32.mrb[0].mxu0
      %912 = vmatprep.mubr.bf16.mxu0 0
      %913 = vmatmul.mubr.bf16.gmra.mrb[0].mxu0 %v836
      %v914 = vpop.f32.mrb[0].mxu0
      %v915 = vadd.f32 0.0, %v914
      %v916 = vpop.f32.mrb[0].mxu0
      %v917 = vpop.f32.mrb[0].mxu0
      %v918 = vadd.f32 0.0, %v917
      %v919 = vpop.f32.mrb[0].mxu0
      %920 = vmatprep.mubr.bf16.mxu0 0
      %921 = vmatmul.mubr.bf16.gmra.mrb[0].mxu0 %v838
      %v922 = vpop.f32.mrb[0].mxu0
      %v923 = vadd.f32 0.0, %v922
      %v924 = vpop.f32.mrb[0].mxu0
      %v925 = vpop.f32.mrb[0].mxu0
      %v926 = vadd.f32 0.0, %v925
      %v927 = vpop.f32.mrb[0].mxu0
      %928 = vmatprep.mubr.bf16.mxu0 0
      %929 = vmatmul.mubr.bf16.gmra.mrb[0].mxu0 %v840
      %v930 = vpop.f32.mrb[0].mxu0
      %v931 = vadd.f32 0.0, %v930
      %v932 = vpop.f32.mrb[0].mxu0
      %v933 = vpop.f32.mrb[0].mxu0
      %v934 = vadd.f32 0.0, %v933
      %v935 = vpop.f32.mrb[0].mxu0
      %936 = vmatprep.mubr.bf16.mxu0 0
      %937 = vmatmul.mubr.bf16.gmra.mrb[0].mxu0 %v842
      %v938 = vpop.f32.mrb[0].mxu0
      %v939 = vadd.f32 0.0, %v938
      %v940 = vpop.f32.mrb[0].mxu0
      %v941 = vpop.f32.mrb[0].mxu0
      %v942 = vadd.f32 0.0, %v941
      %v943 = vpop.f32.mrb[0].mxu0
      %944 = vdwg.mxu0
      %v948 = vunpack.c.l.b16 %v811
      %v949 = vunpack.c.l.b16 %v812
      %v950 = vunpack.c.l.b16 %v813
      %v951 = vpack.c.b16 %v949, %v948
      %v952 = vpack.c.b16 %v950, %v950
      %v954 = vsel %vm827, %v792, 0
      %v957 = vsel %vm844, %v952, 0
      %959 = vmatprep.subr.bf16.mxu0 0
      %960 = vmatpush1.bf16.msra.mxu0 %v951
      %961 = vmatprep.subr.bf16.mxu0 0
      %962 = vmatpush1.bf16.msra.mxu0 %v957
      %963 = vmatprep.subr.bf16.mxu0 0
      %964 = vmatpush1.bf16.msra.mxu0 0
      %965 = vmatprep.subr.bf16.mxu0 0
      %966 = vmatpush1.bf16.msra.mxu0 0
      %967 = vmatprep.subr.bf16.mxu0 0
      %968 = vmatpush1.bf16.msra.mxu0 0
      %969 = vmatprep.subr.bf16.mxu0 0
      %970 = vmatpush1.bf16.msra.mxu0 0
      %971 = vmatprep.subr.bf16.mxu0 0
      %972 = vmatpush1.bf16.msra.mxu0 0
      %973 = vmatprep.subr.bf16.mxu0 0
      %974 = vmatpush1.bf16.msra.mxu0 0
      %975 = vmatprep.subr.bf16.mxu0 0
      %976 = vmatpush1.bf16.msra.mxu0 0
      %977 = vmatprep.subr.bf16.mxu0 0
      %978 = vmatpush1.bf16.msra.mxu0 0
      %979 = vmatprep.subr.bf16.mxu0 0
      %980 = vmatpush1.bf16.msra.mxu0 0
      %981 = vmatprep.subr.bf16.mxu0 0
      %982 = vmatpush1.bf16.msra.mxu0 0
      %983 = vmatprep.subr.bf16.mxu0 0
      %984 = vmatpush1.bf16.msra.mxu0 0
      %985 = vmatprep.subr.bf16.mxu0 0
      %986 = vmatpush1.bf16.msra.mxu0 0
      %987 = vmatprep.subr.bf16.mxu0 0
      %988 = vmatpush1.bf16.msra.mxu0 0
      %989 = vmatprep.subr.bf16.mxu0 0
      %990 = vmatpush1.bf16.msra.mxu0 0
      %991 = vmatprep.mubr.bf16.mxu0 0
      %992 = vmatmul.mubr.bf16.gmra.mrb[0].mxu0 %v954
      %v993 = vpop.f32.mrb[0].mxu0
      %v994 = vadd.f32 %v883, %v993
      %v995 = vpop.f32.mrb[0].mxu0
      %v996 = vpop.f32.mrb[0].mxu0
      %v997 = vadd.f32 %v886, %v996
      %v998 = vpop.f32.mrb[0].mxu0
      %999 = vmatprep.mubr.bf16.mxu0 0
      %1000 = vmatmul.mubr.bf16.gmra.mrb[0].mxu0 %v828
      %v1001 = vpop.f32.mrb[0].mxu0
      %v1002 = vadd.f32 %v891, %v1001
      %v1003 = vpop.f32.mrb[0].mxu0
      %v1004 = vpop.f32.mrb[0].mxu0
      %v1005 = vadd.f32 %v894, %v1004
      %v1006 = vpop.f32.mrb[0].mxu0
      %1007 = vmatprep.mubr.bf16.mxu0 0
      %1008 = vmatmul.mubr.bf16.gmra.mrb[0].mxu0 %v830
      %v1009 = vpop.f32.mrb[0].mxu0
      %v1010 = vadd.f32 %v899, %v1009
      %v1011 = vpop.f32.mrb[0].mxu0
      %v1012 = vpop.f32.mrb[0].mxu0
      %v1013 = vadd.f32 %v902, %v1012
      %v1014 = vpop.f32.mrb[0].mxu0
      %1015 = vmatprep.mubr.bf16.mxu0 0
      %1016 = vmatmul.mubr.bf16.gmra.mrb[0].mxu0 %v832
      %v1017 = vpop.f32.mrb[0].mxu0
      %v1018 = vadd.f32 %v907, %v1017
      %v1019 = vpop.f32.mrb[0].mxu0
      %v1020 = vpop.f32.mrb[0].mxu0
      %v1021 = vadd.f32 %v910, %v1020
      %v1022 = vpop.f32.mrb[0].mxu0
      %1023 = vmatprep.mubr.bf16.mxu0 0
      %1024 = vmatmul.mubr.bf16.gmra.mrb[0].mxu0 %v834
      %v1025 = vpop.f32.mrb[0].mxu0
      %v1026 = vadd.f32 %v915, %v1025
      %v1027 = vpop.f32.mrb[0].mxu0
      %v1028 = vpop.f32.mrb[0].mxu0
      %v1029 = vadd.f32 %v918, %v1028
      %v1030 = vpop.f32.mrb[0].mxu0
      %1031 = vmatprep.mubr.bf16.mxu0 0
      %1032 = vmatmul.mubr.bf16.gmra.mrb[0].mxu0 %v836
      %v1033 = vpop.f32.mrb[0].mxu0
      %v1034 = vadd.f32 %v923, %v1033
      %v1035 = vpop.f32.mrb[0].mxu0
      %v1036 = vpop.f32.mrb[0].mxu0
      %v1037 = vadd.f32 %v926, %v1036
      %v1038 = vpop.f32.mrb[0].mxu0
      %1039 = vmatprep.mubr.bf16.mxu0 0
      %1040 = vmatmul.mubr.bf16.gmra.mrb[0].mxu0 %v838
      %v1041 = vpop.f32.mrb[0].mxu0
      %v1042 = vadd.f32 %v931, %v1041
      %v1043 = vpop.f32.mrb[0].mxu0
      %v1044 = vpop.f32.mrb[0].mxu0
      %v1045 = vadd.f32 %v934, %v1044
      %v1046 = vpop.f32.mrb[0].mxu0
      %1047 = vmatprep.mubr.bf16.mxu0 0
      %1048 = vmatmul.mubr.bf16.gmra.mrb[0].mxu0 %v840
      %v1049 = vpop.f32.mrb[0].mxu0
      %v1050 = vadd.f32 %v939, %v1049
      %v1051 = vpop.f32.mrb[0].mxu0
      %v1052 = vpop.f32.mrb[0].mxu0
      %v1053 = vadd.f32 %v942, %v1052
      %v1054 = vpop.f32.mrb[0].mxu0
      %1055 = vdwg.mxu0
      %s1056 = scalar_lea.vmem %s3, 24
      %v1057 = vld [vmem:[%s1056] sm:$0xf]
      %v1058 = vld [vmem:[%s1056 + $0x4] sm:$0xf]
      %v1059 = vld [vmem:[%s1056 + $0x8] sm:$0xf]
      %v1063 = vunpack.c.l.b16 %v1057
      %v1064 = vunpack.c.l.b16 %v1058
      %v1065 = vunpack.c.l.b16 %v1059
      %v1066 = vpack.c.b16 %v1064, %v1063
      %v1067 = vpack.c.b16 %v1065, %v1065
      %v1069 = vsel %vm827, %v810, 0
      %v1072 = vsel %vm844, %v1067, 0
      %1074 = vmatprep.subr.bf16.mxu0 0
      %1075 = vmatpush1.bf16.msra.mxu0 %v1066
      %1076 = vmatprep.subr.bf16.mxu0 0
      %1077 = vmatpush1.bf16.msra.mxu0 %v1072
      %1078 = vmatprep.subr.bf16.mxu0 0
      %1079 = vmatpush1.bf16.msra.mxu0 0
      %1080 = vmatprep.subr.bf16.mxu0 0
      %1081 = vmatpush1.bf16.msra.mxu0 0
      %1082 = vmatprep.subr.bf16.mxu0 0
      %1083 = vmatpush1.bf16.msra.mxu0 0
      %1084 = vmatprep.subr.bf16.mxu0 0
      %1085 = vmatpush1.bf16.msra.mxu0 0
      %1086 = vmatprep.subr.bf16.mxu0 0
      %1087 = vmatpush1.bf16.msra.mxu0 0
      %1088 = vmatprep.subr.bf16.mxu0 0
      %1089 = vmatpush1.bf16.msra.mxu0 0
      %1090 = vmatprep.subr.bf16.mxu0 0
      %1091 = vmatpush1.bf16.msra.mxu0 0
      %1092 = vmatprep.subr.bf16.mxu0 0
      %1093 = vmatpush1.bf16.msra.mxu0 0
      %1094 = vmatprep.subr.bf16.mxu0 0
      %1095 = vmatpush1.bf16.msra.mxu0 0
      %1096 = vmatprep.subr.bf16.mxu0 0
      %1097 = vmatpush1.bf16.msra.mxu0 0
      %1098 = vmatprep.subr.bf16.mxu0 0
      %1099 = vmatpush1.bf16.msra.mxu0 0
      %1100 = vmatprep.subr.bf16.mxu0 0
      %1101 = vmatpush1.bf16.msra.mxu0 0
      %1102 = vmatprep.subr.bf16.mxu0 0
      %1103 = vmatpush1.bf16.msra.mxu0 0
      %1104 = vmatprep.subr.bf16.mxu0 0
      %1105 = vmatpush1.bf16.msra.mxu0 0
      %1106 = vmatprep.mubr.bf16.mxu0 0
      %1107 = vmatmul.mubr.bf16.gmra.mrb[0].mxu0 %v830
      %v1108 = vpop.f32.mrb[0].mxu0
      %v1109 = vadd.f32 0.0, %v1108
      %v1110 = vpop.f32.mrb[0].mxu0
      %v1111 = vpop.f32.mrb[0].mxu0
      %v1112 = vadd.f32 0.0, %v1111
      %v1113 = vpop.f32.mrb[0].mxu0
      %1114 = vmatprep.mubr.bf16.mxu0 0
      %1115 = vmatmul.mubr.bf16.gmra.mrb[0].mxu0 %v832
      %v1116 = vpop.f32.mrb[0].mxu0
      %v1117 = vadd.f32 0.0, %v1116
      %v1118 = vpop.f32.mrb[0].mxu0
      %v1119 = vpop.f32.mrb[0].mxu0
      %v1120 = vadd.f32 0.0, %v1119
      %v1121 = vpop.f32.mrb[0].mxu0
      %1122 = vmatprep.mubr.bf16.mxu0 0
      %1123 = vmatmul.mubr.bf16.gmra.mrb[0].mxu0 %v834
      %v1124 = vpop.f32.mrb[0].mxu0
      %v1125 = vadd.f32 0.0, %v1124
      %v1126 = vpop.f32.mrb[0].mxu0
      %v1127 = vpop.f32.mrb[0].mxu0
      %v1128 = vadd.f32 0.0, %v1127
      %v1129 = vpop.f32.mrb[0].mxu0
      %1130 = vmatprep.mubr.bf16.mxu0 0
      %1131 = vmatmul.mubr.bf16.gmra.mrb[0].mxu0 %v836
      %v1132 = vpop.f32.mrb[0].mxu0
      %v1133 = vadd.f32 0.0, %v1132
      %v1134 = vpop.f32.mrb[0].mxu0
      %v1135 = vpop.f32.mrb[0].mxu0
      %v1136 = vadd.f32 0.0, %v1135
      %v1137 = vpop.f32.mrb[0].mxu0
      %1138 = vmatprep.mubr.bf16.mxu0 0
      %1139 = vmatmul.mubr.bf16.gmra.mrb[0].mxu0 %v838
      %v1140 = vpop.f32.mrb[0].mxu0
      %v1141 = vadd.f32 0.0, %v1140
      %v1142 = vpop.f32.mrb[0].mxu0
      %v1143 = vpop.f32.mrb[0].mxu0
      %v1144 = vadd.f32 0.0, %v1143
      %v1145 = vpop.f32.mrb[0].mxu0
      %1146 = vmatprep.mubr.bf16.mxu0 0
      %1147 = vmatmul.mubr.bf16.gmra.mrb[0].mxu0 %v840
      %v1148 = vpop.f32.mrb[0].mxu0
      %v1149 = vadd.f32 0.0, %v1148
      %v1150 = vpop.f32.mrb[0].mxu0
      %v1151 = vpop.f32.mrb[0].mxu0
      %v1152 = vadd.f32 0.0, %v1151
      %v1153 = vpop.f32.mrb[0].mxu0
      %1154 = vmatprep.mubr.bf16.mxu0 0
      %1155 = vmatmul.mubr.bf16.gmra.mrb[0].mxu0 %v842
      %v1156 = vpop.f32.mrb[0].mxu0
      %v1157 = vadd.f32 0.0, %v1156
      %v1158 = vpop.f32.mrb[0].mxu0
      %v1159 = vpop.f32.mrb[0].mxu0
      %v1160 = vadd.f32 0.0, %v1159
      %v1161 = vpop.f32.mrb[0].mxu0
      %1162 = vmatprep.mubr.bf16.mxu0 0
      %1163 = vmatmul.mubr.bf16.gmra.mrb[0].mxu0 %v1069
      %v1164 = vpop.f32.mrb[0].mxu0
      %v1165 = vadd.f32 0.0, %v1164
      %v1166 = vpop.f32.mrb[0].mxu0
      %v1167 = vpop.f32.mrb[0].mxu0
      %v1168 = vadd.f32 0.0, %v1167
      %v1169 = vpop.f32.mrb[0].mxu0
      %1170 = vdwg.mxu0
      %v1171 = vadd.f32 %v994, %v1109
      %v1172 = vadd.f32 %v997, %v1112
      %v1173 = vadd.f32 %v1002, %v1117
      %v1174 = vadd.f32 %v1005, %v1120
      %v1175 = vadd.f32 %v1010, %v1125
      %v1176 = vadd.f32 %v1013, %v1128
      %v1177 = vadd.f32 %v1018, %v1133
      %v1178 = vadd.f32 %v1021, %v1136
      %v1179 = vadd.f32 %v1026, %v1141
      %v1180 = vadd.f32 %v1029, %v1144
      %v1181 = vadd.f32 %v1034, %v1149
      %v1182 = vadd.f32 %v1037, %v1152
      %v1183 = vadd.f32 %v1042, %v1157
      %v1184 = vadd.f32 %v1045, %v1160
      %v1185 = vadd.f32 %v1050, %v1165
      %v1186 = vadd.f32 %v1053, %v1168
      %v1187 = vpack.c.bf16 %v1172, %v1171
      %v1188 = vpack.c.bf16 %v1174, %v1173
      %v1189 = vpack.c.bf16 %v1176, %v1175
      %v1190 = vpack.c.bf16 %v1178, %v1177
      %v1191 = vpack.c.bf16 %v1180, %v1179
      %v1192 = vpack.c.bf16 %v1182, %v1181
      %v1193 = vpack.c.bf16 %v1184, %v1183
      %v1194 = vpack.c.bf16 %v1186, %v1185
      %v1203 = vunpack.c.l.b16 %v1187
      %v1204 = vunpack.c.h.b16 %v1187
      %v1205 = vunpack.c.l.b16 %v1188
      %v1206 = vunpack.c.h.b16 %v1188
      %v1207 = vunpack.c.l.b16 %v1189
      %v1208 = vunpack.c.h.b16 %v1189
      %v1209 = vunpack.c.l.b16 %v1190
      %v1210 = vunpack.c.h.b16 %v1190
      %v1211 = vunpack.c.l.b16 %v1191
      %v1212 = vunpack.c.h.b16 %v1191
      %v1213 = vunpack.c.l.b16 %v1192
      %v1214 = vunpack.c.h.b16 %v1192
      %v1215 = vunpack.c.l.b16 %v1193
      %v1216 = vunpack.c.h.b16 %v1193
      %v1217 = vunpack.c.l.b16 %v1194
      %v1218 = vunpack.c.h.b16 %v1194
      %v1219 = vpack.c.b16 %v1203, %v1203
      %v1220 = vpack.c.b16 %v1204, %v1204
      %v1221 = vpack.c.b16 %v1205, %v1205
      %v1222 = vpack.c.b16 %v1206, %v1206
      %v1223 = vpack.c.b16 %v1207, %v1207
      %v1224 = vpack.c.b16 %v1208, %v1208
      %v1225 = vpack.c.b16 %v1209, %v1209
      %v1226 = vpack.c.b16 %v1210, %v1210
      %v1227 = vpack.c.b16 %v1211, %v1211
      %v1228 = vpack.c.b16 %v1212, %v1212
      %v1229 = vpack.c.b16 %v1213, %v1213
      %v1230 = vpack.c.b16 %v1214, %v1214
      %v1231 = vpack.c.b16 %v1215, %v1215
      %v1232 = vpack.c.b16 %v1216, %v1216
      %v1233 = vpack.c.b16 %v1217, %v1217
      %v1234 = vpack.c.b16 %v1218, %v1218
      %vm1251 = vcmask 60416
      %1252 = vst.msk [vmem:[%s425] sm:$0xf] %vm1251, %v1219
      %1253 = vst.msk [vmem:[%s425 + $0x4] sm:$0xf] %vm1251, %v1220
      %1254 = vst.msk [vmem:[%s425 + $0x8] sm:$0xf] %vm1251, %v1221
      %1255 = vst.msk [vmem:[%s425 + $0xc] sm:$0xf] %vm1251, %v1222
      %1256 = vst.msk [vmem:[%s425 + $0x10] sm:$0xf] %vm1251, %v1223
      %1257 = vst.msk [vmem:[%s425 + $0x14] sm:$0xf] %vm1251, %v1224
      %1258 = vst.msk [vmem:[%s425 + $0x18] sm:$0xf] %vm1251, %v1225
      %1259 = vst.msk [vmem:[%s425 + $0x1c] sm:$0xf] %vm1251, %v1226
      %1260 = vst.msk [vmem:[%s425 + $0x20] sm:$0xf] %vm1251, %v1227
      %1261 = vst.msk [vmem:[%s425 + $0x24] sm:$0xf] %vm1251, %v1228
      %1262 = vst.msk [vmem:[%s425 + $0x28] sm:$0xf] %vm1251, %v1229
      %1263 = vst.msk [vmem:[%s425 + $0x2c] sm:$0xf] %vm1251, %v1230
      %1264 = vst.msk [vmem:[%s425 + $0x30] sm:$0xf] %vm1251, %v1231
      %1265 = vst.msk [vmem:[%s425 + $0x34] sm:$0xf] %vm1251, %v1232
      %1266 = vst.msk [vmem:[%s425 + $0x38] sm:$0xf] %vm1251, %v1233
      %1267 = vst.msk [vmem:[%s425 + $0x3c] sm:$0xf] %vm1251, %v1234
      %p1268 = scmp.eq.s32.totalorder %s23, 0
      // Predicated region
      $region41: #{_lambda_.4} parent=39 // pred_check
        %p1269 = pneg %p1268
      $region42: #{_lambda_.4} parent=39 // pred_check_branch
        %1271 = sbr.rel (%p1269) target = $region44
      $region43: #{_lambda_.4} parent=39 // pred_region
        %vm1272 = vcmask 58368
        %1273 = vst.msk [vmem:[%s430] sm:$0x3] %vm1272, 0.0
      $region44: #{_lambda_.4} parent=39 // pred_fallthru
        _
      %v1274 = vsel %vm759, %v1171, 0.0
      %v1275 = vsel %vm759, %v1172, 0.0
      %v1276 = vadd.f32 %v1274, %v1275
      %v1277 = vsel %vm759, %v1173, 0.0
      %v1278 = vadd.f32 %v1276, %v1277
      %v1279 = vsel %vm759, %v1174, 0.0
      %v1280 = vadd.f32 %v1278, %v1279
      %v1281 = vsel %vm759, %v1175, 0.0
      %v1282 = vadd.f32 %v1280, %v1281
      %v1283 = vsel %vm759, %v1176, 0.0
      %v1284 = vadd.f32 %v1282, %v1283
      %v1285 = vsel %vm759, %v1177, 0.0
      %v1286 = vadd.f32 %v1284, %v1285
      %v1287 = vsel %vm759, %v1178, 0.0
      %v1288 = vadd.f32 %v1286, %v1287
      %v1289 = vsel %vm759, %v1179, 0.0
      %v1290 = vadd.f32 %v1288, %v1289
      %v1291 = vsel %vm759, %v1180, 0.0
      %v1292 = vadd.f32 %v1290, %v1291
      %v1293 = vsel %vm759, %v1181, 0.0
      %v1294 = vadd.f32 %v1292, %v1293
      %v1295 = vsel %vm759, %v1182, 0.0
      %v1296 = vadd.f32 %v1294, %v1295
      %v1297 = vsel %vm759, %v1183, 0.0
      %v1298 = vadd.f32 %v1296, %v1297
      %v1299 = vsel %vm759, %v1184, 0.0
      %v1300 = vadd.f32 %v1298, %v1299
      %v1301 = vsel %vm759, %v1185, 0.0
      %v1302 = vadd.f32 %v1300, %v1301
      %v1303 = vsel %vm759, %v1186, 0.0
      %v1304 = vadd.f32 %v1302, %v1303
      %v1305 = vrot.slane %v1304, 4
      %v1306 = vadd.f32 %v1304, %v1305
      %v1307 = vrot.slane %v1306, 2
      %v1308 = vadd.f32 %v1306, %v1307
      %v1309 = vrot.slane %v1308, 1
      %v1310 = vadd.f32 %v1308, %v1309
      %v1311 = vmul.f32 %v1171, %v1171
      %v1312 = vmul.f32 %v1172, %v1172
      %v1313 = vmul.f32 %v1173, %v1173
      %v1314 = vmul.f32 %v1174, %v1174
      %v1315 = vmul.f32 %v1175, %v1175
      %v1316 = vmul.f32 %v1176, %v1176
      %v1317 = vmul.f32 %v1177, %v1177
      %v1318 = vmul.f32 %v1178, %v1178
      %v1319 = vmul.f32 %v1179, %v1179
      %v1320 = vmul.f32 %v1180, %v1180
      %v1321 = vmul.f32 %v1181, %v1181
      %v1322 = vmul.f32 %v1182, %v1182
      %v1323 = vmul.f32 %v1183, %v1183
      %v1324 = vmul.f32 %v1184, %v1184
      %v1325 = vmul.f32 %v1185, %v1185
      %v1326 = vmul.f32 %v1186, %v1186
      %v1327 = vsel %vm759, %v1311, 0.0
      %v1328 = vsel %vm759, %v1312, 0.0
      %v1329 = vadd.f32 %v1327, %v1328
      %v1330 = vsel %vm759, %v1313, 0.0
      %v1331 = vadd.f32 %v1329, %v1330
      %v1332 = vsel %vm759, %v1314, 0.0
      %v1333 = vadd.f32 %v1331, %v1332
      %v1334 = vsel %vm759, %v1315, 0.0
      %v1335 = vadd.f32 %v1333, %v1334
      %v1336 = vsel %vm759, %v1316, 0.0
      %v1337 = vadd.f32 %v1335, %v1336
      %v1338 = vsel %vm759, %v1317, 0.0
      %v1339 = vadd.f32 %v1337, %v1338
      %v1340 = vsel %vm759, %v1318, 0.0
      %v1341 = vadd.f32 %v1339, %v1340
      %v1342 = vsel %vm759, %v1319, 0.0
      %v1343 = vadd.f32 %v1341, %v1342
      %v1344 = vsel %vm759, %v1320, 0.0
      %v1345 = vadd.f32 %v1343, %v1344
      %v1346 = vsel %vm759, %v1321, 0.0
      %v1347 = vadd.f32 %v1345, %v1346
      %v1348 = vsel %vm759, %v1322, 0.0
      %v1349 = vadd.f32 %v1347, %v1348
      %v1350 = vsel %vm759, %v1323, 0.0
      %v1351 = vadd.f32 %v1349, %v1350
      %v1352 = vsel %vm759, %v1324, 0.0
      %v1353 = vadd.f32 %v1351, %v1352
      %v1354 = vsel %vm759, %v1325, 0.0
      %v1355 = vadd.f32 %v1353, %v1354
      %v1356 = vsel %vm759, %v1326, 0.0
      %v1357 = vadd.f32 %v1355, %v1356
      %v1358 = vrot.slane %v1357, 4
      %v1359 = vadd.f32 %v1357, %v1358
      %v1360 = vrot.slane %v1359, 2
      %v1361 = vadd.f32 %v1359, %v1360
      %v1362 = vrot.slane %v1361, 1
      %v1363 = vadd.f32 %v1361, %v1362
      %v1364 = vld [vmem:[%s430] sm:$0x3]
      %vm1365 = vcmask 1040384
      %v1366 = vsel %vm1365, %v1310, %v1363
      %v1367 = vadd.f32 %v1364, %v1366
      %vm1368 = vcmask 58368
      %1369 = vst.msk [vmem:[%s430] sm:$0x3] %vm1368, %v1367
      %s1370 = smul.u32 8, %s23
      %p1371 = scmp.lt.s32.totalorder %s22, 1
      %s1372 = scalar_select %p1371, %s22, 1
      %p1373 = scmp.lt.s32.totalorder %s1370, 15
      %s1374 = scalar_select %p1373, %s1370, 15
      %s1375 = smul.addr %s1374, 2
      %s1376 = smul.addr %s1372, 32
      %s1377 = sadd.s32 %s1375, %s1376
      %s1378 = smul.addr %s1377, 4
      %s1379 = scalar_lea.vmem %s5, %s1378
      %p1380 = scmp.lt.s32.totalorder %s22, 1
      %s1381 = scalar_select %p1380, %s22, 1
      %s1382 = smul.addr %s1381, 2
      %s1383 = scalar_lea.vmem %s6, %s1382
      // Predicated region
      $region45: #{_lambda_.4} parent=39 // pred_check
        %p1384 = pneg %p192
      $region46: #{_lambda_.4} parent=39 // pred_check_branch
        %1386 = sbr.rel (%p1384) target = $region48
      $region47: #{_lambda_.4} parent=39 // pred_region
        %s1387 = smul.u32 8, %s23
      $region48: #{_lambda_.4} parent=39 // pred_fallthru
        _
      // Predicated region
      $region49: #{_lambda_.4} parent=39 // pred_check
        %p1388 = pneg %p218
      $region50: #{_lambda_.4} parent=39 // pred_check_branch
        %1390 = sbr.rel (%p1388) target = $region52
      $region51: #{_lambda_.4} parent=39 // pred_region
        _
      $region52: #{_lambda_.4} parent=39 // pred_fallthru
        _
    $region40: #{_lambda_.4} parent=5 // pred_fallthru
      _
    %p1391 = scmp.le.s32.totalorder 2, %s13
    // Predicated region
    $region53: #{_lambda_.4} parent=5 // pred_check
      %p1392 = pneg %p1391
    $region54: #{_lambda_.4} parent=5 // pred_check_branch
      %1394 = sbr.rel (%p1392) target = $region56
    $region55: #{_lambda_.4} parent=5 // pred_region
      %s1395 = ssub.s32 %s13, 2
      // Predicated region
      $region57: #{_lambda_.4} parent=55 // pred_check
        %p1396 = pneg %p198
      $region58: #{_lambda_.4} parent=55 // pred_check_branch
        %1398 = sbr.rel (%p1396) target = $region60
      $region59: #{_lambda_.4} parent=55 // pred_region
        %s1399 = smul.u32 8, %s25
        %p1400 = scmp.lt.s32.totalorder %s24, 1
        %s1401 = scalar_select %p1400, %s24, 1
        %p1402 = scmp.lt.s32.totalorder %s1399, 15
        %s1403 = scalar_select %p1402, %s1399, 15
        %s1404 = smul.addr %s1403, 2
        %s1405 = smul.addr %s1401, 32
        %s1406 = sadd.s32 %s1404, %s1405
        %s1407 = smul.addr %s1406, 4
        %s1408 = scalar_lea.vmem %s5, %s1407
      $region60: #{_lambda_.4} parent=55 // pred_fallthru
        _
      // Predicated region
      $region61: #{_lambda_.4} parent=55 // pred_check
        %p1409 = pneg %p224
      $region62: #{_lambda_.4} parent=55 // pred_check_branch
        %1411 = sbr.rel (%p1409) target = $region64
      $region63: #{_lambda_.4} parent=55 // pred_region
        %p1412 = scmp.lt.s32.totalorder %s24, 1
        %s1413 = scalar_select %p1412, %s24, 1
        %s1414 = smul.addr %s1413, 2
        %s1415 = scalar_lea.vmem %s6, %s1414
      $region64: #{_lambda_.4} parent=55 // pred_fallthru
        _
    $region56: #{_lambda_.4} parent=5 // pred_fallthru
      _
  $region6: #{_lambda_.4} parent=0 // loop_footer
    %s17 = sadd.s32 1, %s13
  $region7: #{_lambda_.4} parent=0 // loop_footer_branch
    %12 = sbr.rel target = $region3
  $region8: #{_lambda_.4} parent=0 // loop_exit
    _

</llo_original>
